<compile_context>
chip_gen: v7x
topology: tpu7x:2x2x1
jax: 0.10.0
libtpu: 0.0.40
codegen_flags: <defaults>
</compile_context>

<pallas_src>
import functools
import math

import jax
import jax.numpy as jnp
from jax import lax
from jax.experimental import pallas as pl
from jax.experimental.pallas import tpu as pltpu

F32 = jnp.float32
BF16 = jnp.bfloat16

# ---------------------------------------------------------------------------
# configuration (MSFR defaults: n=2, ks=3, stride=1, padding=1, is_batchnorm)
# ---------------------------------------------------------------------------
IN_SIZE = 4
OUT_SIZE = 32
N_LAYERS = 2
KS = 3
STRIDE = 1
PAD = 1
IS_BATCHNORM = True
C_PAD = 128          # channel / K padding -> lane-dense (128-wide) MXU operands
BN_EPS = 1e-5


# ---------------------------------------------------------------------------
# fused Pallas kernel: n x (3x3 conv -> scale/shift -> ReLU) for one batch item
# ---------------------------------------------------------------------------
def _msfr_fused_kernel(x0_ref, *refs, H, W, C, n, ks, out_size, s_halo):
    """x0_ref : (1, H*W, C) bf16  host-side im2col of layer 0 (K=ks*ks*Cin->C).
    refs   : n * (w_ref, scale_ref (1,C) f32, shift_ref (1,C) f32)
             where w_ref is (C, C) bf16 for layer 0 and (ks*ks*C, C) bf16 after,
             then o_ref (1, out_size, H*W) f32,
             then (if n > 1) ybuf_ref (s_halo + H*W + s_halo, C) bf16 and
             col_ref (H*W, ks*ks*C) bf16 VMEM scratch.
    """
    layer_refs = refs[:3 * n]
    o_ref = refs[3 * n]
    scratch = refs[3 * n + 1:]
    HW = H * W

    def conv_epilogue(acc, s_ref, b_ref):
        # folded BatchNorm + conv bias, then ReLU -- kept in f32 (v5e has no
        # bf16 VPU; padded channels stay exactly zero: 0*0 + 0 -> relu -> 0).
        return jnp.maximum(acc * s_ref[...] + b_ref[...], 0.0)

    # ---- layer 0: single MXU dot on the host-prepared im2col operand --------
    y = jnp.dot(x0_ref[0], layer_refs[0][...],
                preferred_element_type=jnp.float32)          # (HW, C) f32
    y = conv_epilogue(y, layer_refs[1], layer_refs[2])

    if n > 1:
        ybuf_ref, col_ref = scratch
        L = ybuf_ref.shape[0]

        # Vertical halo (zero) rows: two aligned slab stores, once per program.
        # (Never gated on program_id -- the batch axis is "parallel".)
        ybuf_ref[0:s_halo, :] = jnp.zeros((s_halo, C), ybuf_ref.dtype)
        ybuf_ref[s_halo + HW:L, :] = jnp.zeros((L - s_halo - HW, C),
                                               ybuf_ref.dtype)

        # Horizontal-wrap masks (flattened rows with j==0 / j==W-1), once.
        j_idx = lax.broadcasted_iota(jnp.int32, (HW, C), 0) % W
        not_left = j_idx != 0
        not_right = j_idx != (W - 1)

        for li in range(1, n):
            w_r = layer_refs[3 * li]
            s_r = layer_refs[3 * li + 1]
            b_r = layer_refs[3 * li + 2]

            # Inter-layer activation stays in VMEM, stored once in bf16 at an
            # aligned sublane offset (no HBM round trip, no unaligned stores).
            ybuf_ref[s_halo:s_halo + HW, :] = y.astype(ybuf_ref.dtype)

            # In-kernel im2col: each 3x3 tap is a flat shifted window of ybuf
            # (only +-1-row loads are unaligned) written to its own 128-lane
            # K band of col_ref (aligned lane-dense stores).
            for p in range(ks):
                for q in range(ks):
                    t = p * ks + q
                    start = s_halo + (p - PAD) * W + (q - PAD)
                    tap = ybuf_ref[start:start + HW, :]
                    if q < PAD:            # shifted left: j==0 wraps -> mask
                        tap = jnp.where(not_left, tap, 0)
                    elif q > PAD:          # shifted right: j==W-1 wraps -> mask
                        tap = jnp.where(not_right, tap, 0)
                    col_ref[:, t * C:(t + 1) * C] = tap

            # ONE deep-K dot per layer; accumulation lives in the MXU.
            y = jnp.dot(col_ref[...], w_r[...],
                        preferred_element_type=jnp.float32)   # (HW, C) f32
            y = conv_epilogue(y, s_r, b_r)

    # Channel-major output: one XLU transpose, drop padded channels in-kernel.
    o_ref[0] = jnp.transpose(y)[:out_size, :]                 # (out_size, HW)


# ---------------------------------------------------------------------------
# wrapper
# ---------------------------------------------------------------------------
def msfr_forward(x_nchw, kernel_layers, *, out_size):
    assert KS == 3 and STRIDE == 1 and PAD == 1, "module defaults only"
    B, c_in, H, W = x_nchw.shape
    n = len(kernel_layers)
    Cp = C_PAD
    k0 = KS * KS * c_in
    assert k0 <= Cp, "layer-0 host im2col assumes ks*ks*in_size <= 128"

    # NCHW -> NHWC, 'same' halo, host-side layer-0 im2col (K = 36 real values,
    # zero-padded to 128 lanes), cast to bf16.  Tiny XLA prep; makes the
    # layer-0 kernel input lane-dense AND sublane-aligned.
    x = jnp.transpose(x_nchw, (0, 2, 3, 1))
    xp = jnp.pad(x, ((0, 0), (PAD, PAD), (PAD, PAD), (0, 0)))
    taps = [xp[:, p:p + H, q:q + W, :] for p in range(KS) for q in range(KS)]
    x0 = jnp.concatenate(taps, axis=-1).reshape(B, H * W, k0)
    x0 = jnp.pad(x0, ((0, 0), (0, 0), (0, Cp - k0))).astype(BF16)

    args = [x0]
    in_specs = [pl.BlockSpec((1, H * W, Cp), lambda b: (b, 0, 0))]
    for lp in kernel_layers:
        args += [lp['w'], lp['scale'], lp['shift']]
        in_specs += [
            pl.BlockSpec(lp['w'].shape, lambda b: (0, 0)),
            pl.BlockSpec((1, Cp), lambda b: (0, 0)),
            pl.BlockSpec((1, Cp), lambda b: (0, 0)),
        ]

    # flat activation buffer: [zero halo | H*W rows | zero halo], halo rounded
    # up to a bf16 sublane tile so every store is aligned.
    s_halo = ((PAD * (W + 1) + 15) // 16) * 16
    scratch = []
    if n > 1:
        scratch = [pltpu.VMEM((s_halo + H * W + s_halo, Cp), BF16),
                   pltpu.VMEM((H * W, KS * KS * Cp), BF16)]

    flops = 2 * B * H * W * out_size * (k0 + (n - 1) * KS * KS * out_size)
    bytes_accessed = (x0.size * 2
                      + sum(lp['w'].size * 2
                            + (lp['scale'].size + lp['shift'].size) * 4
                            for lp in kernel_layers)
                      + B * out_size * H * W * 4)

    kern = functools.partial(_msfr_fused_kernel, H=H, W=W, C=Cp, n=n, ks=KS,
                             out_size=out_size, s_halo=s_halo)
    out = pl.pallas_call(
        kern,
        out_shape=jax.ShapeDtypeStruct((B, out_size, H * W), F32),
        # B=2 -> two "parallel" grid steps: both v7x TensorCores get work; on
        # single-TC v5e/v6e the per-step overhead at B=2 is negligible (for
        # large B on those chips, raise the batch block instead of the grid).
        grid=(B,),
        in_specs=in_specs,
        out_specs=pl.BlockSpec((1, out_size, H * W), lambda b: (b, 0, 0)),
        scratch_shapes=scratch,
        compiler_params=pltpu.CompilerParams(
            dimension_semantics=("parallel",),
            vmem_limit_bytes=32 * 1024 * 1024,
        ),
        cost_estimate=pl.CostEstimate(flops=int(flops), transcendentals=0,
                                      bytes_accessed=int(bytes_accessed)),
    )(*args)

    # Kernel already emitted channel-major real channels only: reshape is free.
    return out.reshape(B, out_size, H, W)


# ---------------------------------------------------------------------------
# deterministic synthetic parameters (kaiming conv weights, folded eval-BN)
# ---------------------------------------------------------------------------
def init_msfr_params(seed, in_size, out_size, n, is_batchnorm):
    key = jax.random.PRNGKey(seed)
    kernel_layers, ref_layers = [], []
    c_in = in_size
    for li in range(n):
        key, kw, kb, kg, km, kv = jax.random.split(key, 6)
        fan_in = c_in * KS * KS
        w = jax.random.normal(kw, (out_size, c_in, KS, KS), F32) * math.sqrt(2.0 / fan_in)
        conv_b = 0.05 * jax.random.normal(kb, (out_size,), F32)
        if is_batchnorm:
            gamma = 1.0 + 0.02 * jax.random.normal(kg, (out_size,), F32)
            beta = jnp.zeros((out_size,), F32)
            run_mean = 0.1 * jax.random.normal(km, (out_size,), F32)
            run_var = 1.0 + 0.1 * jnp.abs(jax.random.normal(kv, (out_size,), F32))
            inv_std = 1.0 / jnp.sqrt(run_var + BN_EPS)
            scale = gamma * inv_std
            shift = beta + scale * (conv_b - run_mean)
        else:
            scale = jnp.ones((out_size,), F32)
            shift = conv_b

        ref_layers.append(dict(w=w, scale=scale, shift=shift))

        # kernel-side layout: K-major matmul weight, K ordered (p, q, c_in),
        # zero-padded so padded channels provably stay zero; bf16 for the MXU.
        w_k = jnp.transpose(w, (2, 3, 1, 0))                   # (ks, ks, cin, cout)
        if li == 0:
            w_k = w_k.reshape(KS * KS * c_in, out_size)        # (36, 32)
            w_k = jnp.pad(w_k, ((0, C_PAD - KS * KS * c_in),
                                (0, C_PAD - out_size)))        # (128, 128)
        else:
            w_k = jnp.pad(w_k, ((0, 0), (0, 0),
                                (0, C_PAD - c_in), (0, C_PAD - out_size)))
            w_k = w_k.reshape(KS * KS * C_PAD, C_PAD)          # (1152, 128)
        kernel_layers.append(dict(
            w=w_k.astype(BF16),
            scale=jnp.pad(scale, (0, C_PAD - out_size)).reshape(1, C_PAD).astype(F32),
            shift=jnp.pad(shift, (0, C_PAD - out_size)).reshape(1, C_PAD).astype(F32),
        ))
        c_in = out_size
    return kernel_layers, ref_layers


# pure-JAX f32 reference (for correctness check only)
def msfr_reference(x_nchw, ref_layers):
    y = x_nchw
    for lp in ref_layers:
        y = lax.conv_general_dilated(
            y, lp['w'], window_strides=(STRIDE, STRIDE),
            padding=((PAD, PAD), (PAD, PAD)),
            dimension_numbers=('NCHW', 'OIHW', 'NCHW'))
        y = y * lp['scale'][None, :, None, None] + lp['shift'][None, :, None, None]
        y = jnp.maximum(y, 0.0)
    return y


# ---------------------------------------------------------------------------
if __name__ == "__main__":
    kernel_layers, ref_layers = init_msfr_params(
        0, IN_SIZE, OUT_SIZE, N_LAYERS, IS_BATCHNORM)
    x = jax.random.normal(jax.random.PRNGKey(0), (2, IN_SIZE, 16, 16), dtype=F32)

    fwd = jax.jit(functools.partial(msfr_forward, out_size=OUT_SIZE))
    out = jax.block_until_ready(fwd(x, kernel_layers))

    assert out.shape == (2, OUT_SIZE, 16, 16), out.shape
    assert bool(jnp.all(jnp.isfinite(out)))

    ref = msfr_reference(x, ref_layers)
    max_err = float(jnp.max(jnp.abs(out - ref)))
    ref_mag = float(jnp.max(jnp.abs(ref)))
    # relative-style tolerance for bf16 MXU accumulation over K <= 288
    assert max_err <= 1e-3 + 2e-2 * ref_mag, (max_err, ref_mag)
    print("KERNEL_OK")
</pallas_src>

<mosaic_0001>
module attributes {stable_mosaic.version = 11 : i64} {
  func.func @_msfr_fused_kernel(%arg0: i32, %arg1: memref<1x256x128xbf16, #tpu.memory_space<vmem>>, %arg2: memref<128x128xbf16, #tpu.memory_space<vmem>>, %arg3: memref<1x128xf32, #tpu.memory_space<vmem>>, %arg4: memref<1x128xf32, #tpu.memory_space<vmem>>, %arg5: memref<1152x128xbf16, #tpu.memory_space<vmem>>, %arg6: memref<1x128xf32, #tpu.memory_space<vmem>>, %arg7: memref<1x128xf32, #tpu.memory_space<vmem>>, %arg8: memref<1x32x256xf32, #tpu.memory_space<vmem>>, %arg9: memref<320x128xbf16, #tpu.memory_space<vmem>>, %arg10: memref<256x1152xbf16, #tpu.memory_space<vmem>>) attributes {dimension_semantics = [#tpu.dimension_semantics<parallel>], iteration_bounds = array<i64: 2>, scalar_prefetch = 0 : i64, scratch_operands = 2 : i64, tpu.core_type = #tpu.core_type<tc>, window_params = [{transform_indices = @transform_0, window_bounds = array<i64: 1, 256, 128>}, {pipeline_mode = #tpu.pipeline_mode<synchronous>, transform_indices = @transform_1, window_bounds = array<i64: 128, 128>}, {pipeline_mode = #tpu.pipeline_mode<synchronous>, transform_indices = @transform_2, window_bounds = array<i64: 1, 128>}, {pipeline_mode = #tpu.pipeline_mode<synchronous>, transform_indices = @transform_3, window_bounds = array<i64: 1, 128>}, {pipeline_mode = #tpu.pipeline_mode<synchronous>, transform_indices = @transform_4, window_bounds = array<i64: 1152, 128>}, {pipeline_mode = #tpu.pipeline_mode<synchronous>, transform_indices = @transform_5, window_bounds = array<i64: 1, 128>}, {pipeline_mode = #tpu.pipeline_mode<synchronous>, transform_indices = @transform_6, window_bounds = array<i64: 1, 128>}, {transform_indices = @transform_7, window_bounds = array<i64: 1, 32, 256>}]} {
    %c0 = arith.constant 0 : index
    %c0_0 = arith.constant 0 : index
    %c0_1 = arith.constant 0 : index
    %0 = vector.load %arg1[%c0, %c0_0, %c0_1] : memref<1x256x128xbf16, #tpu.memory_space<vmem>>, vector<1x256x128xbf16>
    %1 = vector.shape_cast %0 : vector<1x256x128xbf16> to vector<256x128xbf16>
    %c0_2 = arith.constant 0 : index
    %c0_3 = arith.constant 0 : index
    %2 = vector.load %arg2[%c0_2, %c0_3] : memref<128x128xbf16, #tpu.memory_space<vmem>>, vector<128x128xbf16>
    %cst = arith.constant dense<0.000000e+00> : vector<256x128xf32>
    %3 = tpu.matmul %1, %2, %cst {dimension_numbers = #tpu.dot_dimension_numbers<[1], [0], [0], [1], [0, 0, 1, 1], [], []>} : vector<256x128xbf16>, vector<128x128xbf16>, vector<256x128xf32> -> vector<256x128xf32>
    %c0_4 = arith.constant 0 : index
    %c0_5 = arith.constant 0 : index
    %4 = vector.load %arg3[%c0_4, %c0_5] : memref<1x128xf32, #tpu.memory_space<vmem>>, vector<1x128xf32>
    %5 = vector.broadcast %4 : vector<1x128xf32> to vector<256x128xf32>
    %6 = arith.mulf %3, %5 : vector<256x128xf32>
    %c0_6 = arith.constant 0 : index
    %c0_7 = arith.constant 0 : index
    %7 = vector.load %arg4[%c0_6, %c0_7] : memref<1x128xf32, #tpu.memory_space<vmem>>, vector<1x128xf32>
    %8 = vector.broadcast %7 : vector<1x128xf32> to vector<256x128xf32>
    %9 = arith.addf %6, %8 : vector<256x128xf32>
    %cst_8 = arith.constant 0.000000e+00 : f32
    %10 = vector.broadcast %cst_8 : f32 to vector<256x128xf32>
    %11 = arith.maximumf %9, %10 : vector<256x128xf32>
    %cst_9 = arith.constant 0.000000e+00 : bf16
    %12 = vector.broadcast %cst_9 : bf16 to vector<32x128xbf16>
    %c0_10 = arith.constant 0 : index
    %c0_11 = arith.constant 0 : index
    %13 = vector.load %arg9[%c0_10, %c0_11] : memref<320x128xbf16, #tpu.memory_space<vmem>>, vector<32x128xbf16>
    tpu.vector_store %arg9[%c0_10, %c0_11], %12 {strides = array<i32>} : memref<320x128xbf16, #tpu.memory_space<vmem>>, vector<32x128xbf16>,
    %cst_12 = arith.constant 0.000000e+00 : bf16
    %14 = vector.broadcast %cst_12 : bf16 to vector<32x128xbf16>
    %c288 = arith.constant 288 : index
    %c0_13 = arith.constant 0 : index
    %15 = vector.load %arg9[%c288, %c0_13] : memref<320x128xbf16, #tpu.memory_space<vmem>>, vector<32x128xbf16>
    tpu.vector_store %arg9[%c288, %c0_13], %14 {strides = array<i32>} : memref<320x128xbf16, #tpu.memory_space<vmem>>, vector<32x128xbf16>,
    %16 = tpu.iota {dimensions = array<i32: 0>} : vector<256x128xi32>
    %c16_i32 = arith.constant 16 : i32
    %c0_i32 = arith.constant 0 : i32
    %17 = arith.cmpi eq, %c16_i32, %c0_i32 : i32
    %c1_i32 = arith.constant 1 : i32
    %18 = arith.select %17, %c1_i32, %c16_i32 : i32
    %19 = vector.broadcast %18 : i32 to vector<256x128xi32>
    %20 = arith.remsi %16, %19 : vector<256x128xi32>
    %c0_i32_14 = arith.constant 0 : i32
    %21 = vector.broadcast %c0_i32_14 : i32 to vector<256x128xi32>
    %22 = arith.cmpi ne, %20, %21 : vector<256x128xi32>
    %c0_i32_15 = arith.constant 0 : i32
    %23 = vector.broadcast %c0_i32_15 : i32 to vector<256x128xi32>
    %24 = arith.cmpi slt, %20, %23 : vector<256x128xi32>
    %c0_i32_16 = arith.constant 0 : i32
    %25 = arith.cmpi slt, %18, %c0_i32_16 : i32
    %26 = vector.broadcast %25 : i1 to vector<256x128xi1>
    %27 = vector.broadcast %26 : vector<256x128xi1> to vector<256x128xi1>
    %28 = arith.xori %24, %27 : vector<256x128xi1>
    %29 = arith.andi %28, %22 : vector<256x128xi1>
    %30 = vector.broadcast %18 : i32 to vector<256x128xi32>
    %31 = arith.addi %20, %30 : vector<256x128xi32>
    %32 = arith.select %29, %31, %20 : vector<256x128xi1>, vector<256x128xi32>
    %c0_i32_17 = arith.constant 0 : i32
    %33 = vector.broadcast %c0_i32_17 : i32 to vector<256x128xi32>
    %34 = arith.cmpi ne, %32, %33 : vector<256x128xi32>
    %c15_i32 = arith.constant 15 : i32
    %35 = vector.broadcast %c15_i32 : i32 to vector<256x128xi32>
    %36 = arith.cmpi ne, %32, %35 : vector<256x128xi32>
    %37 = arith.truncf %11 : vector<256x128xf32> to vector<256x128xbf16>
    %c32 = arith.constant 32 : index
    %c0_18 = arith.constant 0 : index
    %38 = vector.load %arg9[%c32, %c0_18] : memref<320x128xbf16, #tpu.memory_space<vmem>>, vector<256x128xbf16>
    tpu.vector_store %arg9[%c32, %c0_18], %37 {strides = array<i32>} : memref<320x128xbf16, #tpu.memory_space<vmem>>, vector<256x128xbf16>,
    %c15 = arith.constant 15 : index
    %c0_19 = arith.constant 0 : index
    %39 = vector.load %arg9[%c15, %c0_19] : memref<320x128xbf16, #tpu.memory_space<vmem>>, vector<256x128xbf16>
    %c0_i32_20 = arith.constant 0 : i32
    %40 = arith.sitofp %c0_i32_20 : i32 to bf16
    %41 = vector.broadcast %40 : bf16 to vector<256x128xbf16>
    %42 = arith.select %34, %39, %41 : vector<256x128xi1>, vector<256x128xbf16>
    %c0_21 = arith.constant 0 : index
    %c0_22 = arith.constant 0 : index
    %43 = vector.load %arg10[%c0_21, %c0_22] : memref<256x1152xbf16, #tpu.memory_space<vmem>>, vector<256x128xbf16>
    tpu.vector_store %arg10[%c0_21, %c0_22], %42 {strides = array<i32>} : memref<256x1152xbf16, #tpu.memory_space<vmem>>, vector<256x128xbf16>,
    %c16 = arith.constant 16 : index
    %c0_23 = arith.constant 0 : index
    %44 = vector.load %arg9[%c16, %c0_23] : memref<320x128xbf16, #tpu.memory_space<vmem>>, vector<256x128xbf16>
    %c0_24 = arith.constant 0 : index
    %c128 = arith.constant 128 : index
    %45 = vector.load %arg10[%c0_24, %c128] : memref<256x1152xbf16, #tpu.memory_space<vmem>>, vector<256x128xbf16>
    tpu.vector_store %arg10[%c0_24, %c128], %44 {strides = array<i32>} : memref<256x1152xbf16, #tpu.memory_space<vmem>>, vector<256x128xbf16>,
    %c17 = arith.constant 17 : index
    %c0_25 = arith.constant 0 : index
    %46 = vector.load %arg9[%c17, %c0_25] : memref<320x128xbf16, #tpu.memory_space<vmem>>, vector<256x128xbf16>
    %c0_i32_26 = arith.constant 0 : i32
    %47 = arith.sitofp %c0_i32_26 : i32 to bf16
    %48 = vector.broadcast %47 : bf16 to vector<256x128xbf16>
    %49 = arith.select %36, %46, %48 : vector<256x128xi1>, vector<256x128xbf16>
    %c0_27 = arith.constant 0 : index
    %c256 = arith.constant 256 : index
    %50 = vector.load %arg10[%c0_27, %c256] : memref<256x1152xbf16, #tpu.memory_space<vmem>>, vector<256x128xbf16>
    tpu.vector_store %arg10[%c0_27, %c256], %49 {strides = array<i32>} : memref<256x1152xbf16, #tpu.memory_space<vmem>>, vector<256x128xbf16>,
    %c31 = arith.constant 31 : index
    %c0_28 = arith.constant 0 : index
    %51 = vector.load %arg9[%c31, %c0_28] : memref<320x128xbf16, #tpu.memory_space<vmem>>, vector<256x128xbf16>
    %c0_i32_29 = arith.constant 0 : i32
    %52 = arith.sitofp %c0_i32_29 : i32 to bf16
    %53 = vector.broadcast %52 : bf16 to vector<256x128xbf16>
    %54 = arith.select %34, %51, %53 : vector<256x128xi1>, vector<256x128xbf16>
    %c0_30 = arith.constant 0 : index
    %c384 = arith.constant 384 : index
    %55 = vector.load %arg10[%c0_30, %c384] : memref<256x1152xbf16, #tpu.memory_space<vmem>>, vector<256x128xbf16>
    tpu.vector_store %arg10[%c0_30, %c384], %54 {strides = array<i32>} : memref<256x1152xbf16, #tpu.memory_space<vmem>>, vector<256x128xbf16>,
    %c32_31 = arith.constant 32 : index
    %c0_32 = arith.constant 0 : index
    %56 = vector.load %arg9[%c32_31, %c0_32] : memref<320x128xbf16, #tpu.memory_space<vmem>>, vector<256x128xbf16>
    %c0_33 = arith.constant 0 : index
    %c512 = arith.constant 512 : index
    %57 = vector.load %arg10[%c0_33, %c512] : memref<256x1152xbf16, #tpu.memory_space<vmem>>, vector<256x128xbf16>
    tpu.vector_store %arg10[%c0_33, %c512], %56 {strides = array<i32>} : memref<256x1152xbf16, #tpu.memory_space<vmem>>, vector<256x128xbf16>,
    %c33 = arith.constant 33 : index
    %c0_34 = arith.constant 0 : index
    %58 = vector.load %arg9[%c33, %c0_34] : memref<320x128xbf16, #tpu.memory_space<vmem>>, vector<256x128xbf16>
    %c0_i32_35 = arith.constant 0 : i32
    %59 = arith.sitofp %c0_i32_35 : i32 to bf16
    %60 = vector.broadcast %59 : bf16 to vector<256x128xbf16>
    %61 = arith.select %36, %58, %60 : vector<256x128xi1>, vector<256x128xbf16>
    %c0_36 = arith.constant 0 : index
    %c640 = arith.constant 640 : index
    %62 = vector.load %arg10[%c0_36, %c640] : memref<256x1152xbf16, #tpu.memory_space<vmem>>, vector<256x128xbf16>
    tpu.vector_store %arg10[%c0_36, %c640], %61 {strides = array<i32>} : memref<256x1152xbf16, #tpu.memory_space<vmem>>, vector<256x128xbf16>,
    %c47 = arith.constant 47 : index
    %c0_37 = arith.constant 0 : index
    %63 = vector.load %arg9[%c47, %c0_37] : memref<320x128xbf16, #tpu.memory_space<vmem>>, vector<256x128xbf16>
    %c0_i32_38 = arith.constant 0 : i32
    %64 = arith.sitofp %c0_i32_38 : i32 to bf16
    %65 = vector.broadcast %64 : bf16 to vector<256x128xbf16>
    %66 = arith.select %34, %63, %65 : vector<256x128xi1>, vector<256x128xbf16>
    %c0_39 = arith.constant 0 : index
    %c768 = arith.constant 768 : index
    %67 = vector.load %arg10[%c0_39, %c768] : memref<256x1152xbf16, #tpu.memory_space<vmem>>, vector<256x128xbf16>
    tpu.vector_store %arg10[%c0_39, %c768], %66 {strides = array<i32>} : memref<256x1152xbf16, #tpu.memory_space<vmem>>, vector<256x128xbf16>,
    %c48 = arith.constant 48 : index
    %c0_40 = arith.constant 0 : index
    %68 = vector.load %arg9[%c48, %c0_40] : memref<320x128xbf16, #tpu.memory_space<vmem>>, vector<256x128xbf16>
    %c0_41 = arith.constant 0 : index
    %c896 = arith.constant 896 : index
    %69 = vector.load %arg10[%c0_41, %c896] : memref<256x1152xbf16, #tpu.memory_space<vmem>>, vector<256x128xbf16>
    tpu.vector_store %arg10[%c0_41, %c896], %68 {strides = array<i32>} : memref<256x1152xbf16, #tpu.memory_space<vmem>>, vector<256x128xbf16>,
    %c49 = arith.constant 49 : index
    %c0_42 = arith.constant 0 : index
    %70 = vector.load %arg9[%c49, %c0_42] : memref<320x128xbf16, #tpu.memory_space<vmem>>, vector<256x128xbf16>
    %c0_i32_43 = arith.constant 0 : i32
    %71 = arith.sitofp %c0_i32_43 : i32 to bf16
    %72 = vector.broadcast %71 : bf16 to vector<256x128xbf16>
    %73 = arith.select %36, %70, %72 : vector<256x128xi1>, vector<256x128xbf16>
    %c0_44 = arith.constant 0 : index
    %c1024 = arith.constant 1024 : index
    %74 = vector.load %arg10[%c0_44, %c1024] : memref<256x1152xbf16, #tpu.memory_space<vmem>>, vector<256x128xbf16>
    tpu.vector_store %arg10[%c0_44, %c1024], %73 {strides = array<i32>} : memref<256x1152xbf16, #tpu.memory_space<vmem>>, vector<256x128xbf16>,
    %c0_45 = arith.constant 0 : index
    %c0_46 = arith.constant 0 : index
    %75 = vector.load %arg10[%c0_45, %c0_46] : memref<256x1152xbf16, #tpu.memory_space<vmem>>, vector<256x1152xbf16>
    %c0_47 = arith.constant 0 : index
    %c0_48 = arith.constant 0 : index
    %76 = vector.load %arg5[%c0_47, %c0_48] : memref<1152x128xbf16, #tpu.memory_space<vmem>>, vector<1152x128xbf16>
    %cst_49 = arith.constant dense<0.000000e+00> : vector<256x128xf32>
    %77 = tpu.matmul %75, %76, %cst_49 {dimension_numbers = #tpu.dot_dimension_numbers<[1], [0], [0], [1], [0, 0, 1, 1], [], []>} : vector<256x1152xbf16>, vector<1152x128xbf16>, vector<256x128xf32> -> vector<256x128xf32>
    %c0_50 = arith.constant 0 : index
    %c0_51 = arith.constant 0 : index
    %78 = vector.load %arg6[%c0_50, %c0_51] : memref<1x128xf32, #tpu.memory_space<vmem>>, vector<1x128xf32>
    %79 = vector.broadcast %78 : vector<1x128xf32> to vector<256x128xf32>
    %80 = arith.mulf %77, %79 : vector<256x128xf32>
    %c0_52 = arith.constant 0 : index
    %c0_53 = arith.constant 0 : index
    %81 = vector.load %arg7[%c0_52, %c0_53] : memref<1x128xf32, #tpu.memory_space<vmem>>, vector<1x128xf32>
    %82 = vector.broadcast %81 : vector<1x128xf32> to vector<256x128xf32>
    %83 = arith.addf %80, %82 : vector<256x128xf32>
    %cst_54 = arith.constant 0.000000e+00 : f32
    %84 = vector.broadcast %cst_54 : f32 to vector<256x128xf32>
    %85 = arith.maximumf %83, %84 : vector<256x128xf32>
    %86 = tpu.transpose %85, [1, 0] : vector<256x128xf32> -> vector<128x256xf32>
    %87 = vector.extract_strided_slice %86 {offsets = [0, 0], sizes = [32, 256], strides = [1, 1]} : vector<128x256xf32> to vector<32x256xf32>
    %c0_55 = arith.constant 0 : index
    %c0_56 = arith.constant 0 : index
    %c0_57 = arith.constant 0 : index
    %88 = vector.load %arg8[%c0_55, %c0_56, %c0_57] : memref<1x32x256xf32, #tpu.memory_space<vmem>>, vector<1x32x256xf32>
    %89 = vector.shape_cast %88 : vector<1x32x256xf32> to vector<32x256xf32>
    %90 = vector.shape_cast %87 : vector<32x256xf32> to vector<1x32x256xf32>
    tpu.vector_store %arg8[%c0_55, %c0_56, %c0_57], %90 {strides = array<i32>} : memref<1x32x256xf32, #tpu.memory_space<vmem>>, vector<1x32x256xf32>,
    return
  }
  func.func @transform_0(%arg0: i32) -> (i32, i32, i32) {
    %c0_i32 = arith.constant 0 : i32
    %c0_i32_0 = arith.constant 0 : i32
    %c0_i32_1 = arith.constant 0 : i32
    return %arg0, %c0_i32, %c0_i32_0 : i32, i32, i32
  }
  func.func @transform_1(%arg0: i32) -> (i32, i32) {
    %c0_i32 = arith.constant 0 : i32
    %c0_i32_0 = arith.constant 0 : i32
    %c0_i32_1 = arith.constant 0 : i32
    return %c0_i32, %c0_i32_0 : i32, i32
  }
  func.func @transform_2(%arg0: i32) -> (i32, i32) {
    %c0_i32 = arith.constant 0 : i32
    %c0_i32_0 = arith.constant 0 : i32
    %c0_i32_1 = arith.constant 0 : i32
    return %c0_i32, %c0_i32_0 : i32, i32
  }
  func.func @transform_3(%arg0: i32) -> (i32, i32) {
    %c0_i32 = arith.constant 0 : i32
    %c0_i32_0 = arith.constant 0 : i32
    %c0_i32_1 = arith.constant 0 : i32
    return %c0_i32, %c0_i32_0 : i32, i32
  }
  func.func @transform_4(%arg0: i32) -> (i32, i32) {
    %c0_i32 = arith.constant 0 : i32
    %c0_i32_0 = arith.constant 0 : i32
    %c0_i32_1 = arith.constant 0 : i32
    return %c0_i32, %c0_i32_0 : i32, i32
  }
  func.func @transform_5(%arg0: i32) -> (i32, i32) {
    %c0_i32 = arith.constant 0 : i32
    %c0_i32_0 = arith.constant 0 : i32
    %c0_i32_1 = arith.constant 0 : i32
    return %c0_i32, %c0_i32_0 : i32, i32
  }
  func.func @transform_6(%arg0: i32) -> (i32, i32) {
    %c0_i32 = arith.constant 0 : i32
    %c0_i32_0 = arith.constant 0 : i32
    %c0_i32_1 = arith.constant 0 : i32
    return %c0_i32, %c0_i32_0 : i32, i32
  }
  func.func @transform_7(%arg0: i32) -> (i32, i32, i32) {
    %c0_i32 = arith.constant 0 : i32
    %c0_i32_0 = arith.constant 0 : i32
    %c0_i32_1 = arith.constant 0 : i32
    return %arg0, %c0_i32, %c0_i32_0 : i32, i32, i32
  }
}

</mosaic_0001>

<llo_original>
// kernel: msfr_forward.1
$region0: #{msfr_forward.1}
  #allocation0 [shape = 'u32[]', space=smem, size = 0x4, offset = 0x4, fixed_abs, tag = 'smem constant byte address 0x4 - core index']
  #allocation1 [shape = 'u32[144,128]{1,0:T(1,128)}', space=vmem, size = 0x12000, scoped, tag = 'internal scratch']
  #allocation2 [shape = 'bf16[320,128]{1,0:T(16,128)(2,1)}', space=vmem, size = 0x14000, scoped, tag = 'scratch operand']
  #allocation3 [shape = 'bf16[256,1152]{1,0:T(16,128)(2,1)}', space=vmem, size = 0x90000, scoped, tag = 'scratch operand']
  %s0 = inlined_call_operand.vmem [shape: bf16[2,256,128], index: 0, kind: input, shape index: {}]
  %s1 = inlined_call_operand.vmem [shape: bf16[128,128], index: 1, kind: input, shape index: {}]
  %s2 = inlined_call_operand.vmem [shape: f32[1,128], index: 2, kind: input, shape index: {}]
  %s3 = inlined_call_operand.vmem [shape: f32[1,128], index: 3, kind: input, shape index: {}]
  %s4 = inlined_call_operand.vmem [shape: bf16[1152,128], index: 4, kind: input, shape index: {}]
  %s5 = inlined_call_operand.vmem [shape: f32[1,128], index: 5, kind: input, shape index: {}]
  %s6 = inlined_call_operand.vmem [shape: f32[1,128], index: 6, kind: input, shape index: {}]
  %s7 = inlined_call_operand.vmem [shape: f32[2,32,256], index: 7, kind: output, shape index: {}]
  %s8 = sld [smem:[#allocation0]]
  $region61: #{msfr_forward.1} parent=0
    _
  %s10 = ssub.s32 1, %s8
  %s11 = scalar_select 0, %s10, %s8
  loop: start=0, step=1, limit=4
  $region2: #{msfr_forward.1} parent=0 // loop_pre_header
    _
  $region3: #{msfr_forward.1} parent=0 // loop_header
    %s13 = sphi 0, %s17
    %p14 = scmp.ge.s32.totalorder %s13, 4
    %s23 = sphi 0, %s25
    %s26 = sphi 0, %s23
    %s27 = sphi 0, %s26
    %s43 = sphi 0, %s27
    %s47 = sphi 0, %s47
    %s49 = sphi 0, %s47
    %s50 = sphi 0, %s49
    %s64 = sphi 0, %s50
    %s68 = sphi 0, %s68
    %s70 = sphi 0, %s68
    %s71 = sphi 0, %s70
    %s85 = sphi 0, %s71
    %s89 = sphi 0, %s89
    %s91 = sphi 0, %s89
    %s92 = sphi 0, %s91
    %s106 = sphi 0, %s92
    %s110 = sphi 0, %s110
    %s112 = sphi 0, %s110
    %s113 = sphi 0, %s112
    %s127 = sphi 0, %s113
    %s131 = sphi 0, %s131
    %s133 = sphi 0, %s131
    %s134 = sphi 0, %s133
    %s148 = sphi 0, %s134
    %s152 = sphi 0, %s152
    %s154 = sphi 0, %s152
    %s155 = sphi 0, %s154
    %s169 = sphi 0, %s155
    %s175 = sphi 0, %s177
    %s178 = sphi 0, %s175
    %s179 = sphi 0, %s178
    %s195 = sphi 0, %s179
  $region4: #{msfr_forward.1} parent=0 // loop_header_branch
    %16 = sbr.rel (%p14) target = $region8
  $region5: #{msfr_forward.1} parent=0 // loop_body
    %s18 = ssub.s32 %s13, 1
    %s19 = ssub.s32 %s13, 2
    %s20 = sadd.s32 %s13, 1
    %s21 = ssub.s32 %s13, %s20
    %p22 = scmp.eq.s32.totalorder %s21, 0
    %s24 = sadd.s32 %s23, 1
    %s25 = scalar_select %p22, %s23, %s24
    %p28 = pneg %p22
    %p29 = scmp.eq.s32.totalorder %s13, 1
    %p30 = por %p28, %p29
    %p31 = scmp.ne.s32.totalorder %s23, %s26
    %p32 = scmp.eq.s32.totalorder %s13, 0
    %p33 = por %p31, %p32
    %p34 = scmp.ne.s32.totalorder %s23, %s26
    %p35 = scmp.eq.s32.totalorder %s18, 1
    %p36 = por %p34, %p35
    %p37 = scmp.ne.s32.totalorder %s26, %s27
    %p38 = scmp.eq.s32.totalorder %s18, 0
    %p39 = por %p37, %p38
    %p40 = scmp.ne.s32.totalorder %s26, %s27
    %p41 = scmp.eq.s32.totalorder %s19, 1
    %p42 = por %p40, %p41
    %p44 = scmp.ne.s32.totalorder %s27, %s43
    %p45 = scmp.eq.s32.totalorder %s19, 0
    %p46 = por %p44, %p45
    %s48 = sadd.s32 %s47, 1
    %p51 = scmp.eq.s32.totalorder %s13, 1
    %p52 = scmp.ne.s32.totalorder %s47, %s49
    %p53 = scmp.eq.s32.totalorder %s13, 0
    %p54 = por %p52, %p53
    %p55 = scmp.ne.s32.totalorder %s47, %s49
    %p56 = scmp.eq.s32.totalorder %s18, 1
    %p57 = por %p55, %p56
    %p58 = scmp.ne.s32.totalorder %s49, %s50
    %p59 = scmp.eq.s32.totalorder %s18, 0
    %p60 = por %p58, %p59
    %p61 = scmp.ne.s32.totalorder %s49, %s50
    %p62 = scmp.eq.s32.totalorder %s19, 1
    %p63 = por %p61, %p62
    %p65 = scmp.ne.s32.totalorder %s50, %s64
    %p66 = scmp.eq.s32.totalorder %s19, 0
    %p67 = por %p65, %p66
    %s69 = sadd.s32 %s68, 1
    %p72 = scmp.eq.s32.totalorder %s13, 1
    %p73 = scmp.ne.s32.totalorder %s68, %s70
    %p74 = scmp.eq.s32.totalorder %s13, 0
    %p75 = por %p73, %p74
    %p76 = scmp.ne.s32.totalorder %s68, %s70
    %p77 = scmp.eq.s32.totalorder %s18, 1
    %p78 = por %p76, %p77
    %p79 = scmp.ne.s32.totalorder %s70, %s71
    %p80 = scmp.eq.s32.totalorder %s18, 0
    %p81 = por %p79, %p80
    %p82 = scmp.ne.s32.totalorder %s70, %s71
    %p83 = scmp.eq.s32.totalorder %s19, 1
    %p84 = por %p82, %p83
    %p86 = scmp.ne.s32.totalorder %s71, %s85
    %p87 = scmp.eq.s32.totalorder %s19, 0
    %p88 = por %p86, %p87
    %s90 = sadd.s32 %s89, 1
    %p93 = scmp.eq.s32.totalorder %s13, 1
    %p94 = scmp.ne.s32.totalorder %s89, %s91
    %p95 = scmp.eq.s32.totalorder %s13, 0
    %p96 = por %p94, %p95
    %p97 = scmp.ne.s32.totalorder %s89, %s91
    %p98 = scmp.eq.s32.totalorder %s18, 1
    %p99 = por %p97, %p98
    %p100 = scmp.ne.s32.totalorder %s91, %s92
    %p101 = scmp.eq.s32.totalorder %s18, 0
    %p102 = por %p100, %p101
    %p103 = scmp.ne.s32.totalorder %s91, %s92
    %p104 = scmp.eq.s32.totalorder %s19, 1
    %p105 = por %p103, %p104
    %p107 = scmp.ne.s32.totalorder %s92, %s106
    %p108 = scmp.eq.s32.totalorder %s19, 0
    %p109 = por %p107, %p108
    %s111 = sadd.s32 %s110, 1
    %p114 = scmp.eq.s32.totalorder %s13, 1
    %p115 = scmp.ne.s32.totalorder %s110, %s112
    %p116 = scmp.eq.s32.totalorder %s13, 0
    %p117 = por %p115, %p116
    %p118 = scmp.ne.s32.totalorder %s110, %s112
    %p119 = scmp.eq.s32.totalorder %s18, 1
    %p120 = por %p118, %p119
    %p121 = scmp.ne.s32.totalorder %s112, %s113
    %p122 = scmp.eq.s32.totalorder %s18, 0
    %p123 = por %p121, %p122
    %p124 = scmp.ne.s32.totalorder %s112, %s113
    %p125 = scmp.eq.s32.totalorder %s19, 1
    %p126 = por %p124, %p125
    %p128 = scmp.ne.s32.totalorder %s113, %s127
    %p129 = scmp.eq.s32.totalorder %s19, 0
    %p130 = por %p128, %p129
    %s132 = sadd.s32 %s131, 1
    %p135 = scmp.eq.s32.totalorder %s13, 1
    %p136 = scmp.ne.s32.totalorder %s131, %s133
    %p137 = scmp.eq.s32.totalorder %s13, 0
    %p138 = por %p136, %p137
    %p139 = scmp.ne.s32.totalorder %s131, %s133
    %p140 = scmp.eq.s32.totalorder %s18, 1
    %p141 = por %p139, %p140
    %p142 = scmp.ne.s32.totalorder %s133, %s134
    %p143 = scmp.eq.s32.totalorder %s18, 0
    %p144 = por %p142, %p143
    %p145 = scmp.ne.s32.totalorder %s133, %s134
    %p146 = scmp.eq.s32.totalorder %s19, 1
    %p147 = por %p145, %p146
    %p149 = scmp.ne.s32.totalorder %s134, %s148
    %p150 = scmp.eq.s32.totalorder %s19, 0
    %p151 = por %p149, %p150
    %s153 = sadd.s32 %s152, 1
    %p156 = scmp.eq.s32.totalorder %s13, 1
    %p157 = scmp.ne.s32.totalorder %s152, %s154
    %p158 = scmp.eq.s32.totalorder %s13, 0
    %p159 = por %p157, %p158
    %p160 = scmp.ne.s32.totalorder %s152, %s154
    %p161 = scmp.eq.s32.totalorder %s18, 1
    %p162 = por %p160, %p161
    %p163 = scmp.ne.s32.totalorder %s154, %s155
    %p164 = scmp.eq.s32.totalorder %s18, 0
    %p165 = por %p163, %p164
    %p166 = scmp.ne.s32.totalorder %s154, %s155
    %p167 = scmp.eq.s32.totalorder %s19, 1
    %p168 = por %p166, %p167
    %p170 = scmp.ne.s32.totalorder %s155, %s169
    %p171 = scmp.eq.s32.totalorder %s19, 0
    %p172 = por %p170, %p171
    %s173 = ssub.s32 %s13, %s20
    %p174 = scmp.eq.s32.totalorder %s173, 0
    %s176 = sadd.s32 %s175, 1
    %s177 = scalar_select %p174, %s175, %s176
    %p180 = pneg %p174
    %p181 = scmp.eq.s32.totalorder %s13, 1
    %p182 = por %p180, %p181
    %p183 = scmp.ne.s32.totalorder %s175, %s178
    %p184 = scmp.eq.s32.totalorder %s13, 0
    %p185 = por %p183, %p184
    %p186 = scmp.ne.s32.totalorder %s175, %s178
    %p187 = scmp.eq.s32.totalorder %s18, 1
    %p188 = por %p186, %p187
    %p189 = scmp.ne.s32.totalorder %s178, %s179
    %p190 = scmp.eq.s32.totalorder %s18, 0
    %p191 = por %p189, %p190
    %p192 = scmp.ne.s32.totalorder %s178, %s179
    %p193 = scmp.eq.s32.totalorder %s19, 1
    %p194 = por %p192, %p193
    %p196 = scmp.ne.s32.totalorder %s179, %s195
    %p197 = scmp.eq.s32.totalorder %s19, 0
    %p198 = por %p196, %p197
    %p199 = scmp.le.s32.totalorder 1, %s13
    %p200 = scmp.lt.s32.totalorder %s13, 3
    %p201 = pnand %p199, %p200
    %p202 = pneg %p201
    // Predicated region
    $region9: #{msfr_forward.1} parent=5 // pred_check
      _
    $region10: #{msfr_forward.1} parent=5 // pred_check_branch
      %204 = sbr.rel (%p201) target = $region12
    $region11: #{msfr_forward.1} parent=5 // pred_region
      %s205 = ssub.s32 %s13, 1
      // Predicated region
      $region13: #{msfr_forward.1} parent=11 // pred_check
        %p206 = pneg %p60
      $region14: #{msfr_forward.1} parent=11 // pred_check_branch
        %208 = sbr.rel (%p206) target = $region16
      $region15: #{msfr_forward.1} parent=11 // pred_region
        _
      $region16: #{msfr_forward.1} parent=11 // pred_fallthru
        _
      // Predicated region
      $region17: #{msfr_forward.1} parent=11 // pred_check
        %p209 = pneg %p81
      $region18: #{msfr_forward.1} parent=11 // pred_check_branch
        %211 = sbr.rel (%p209) target = $region20
      $region19: #{msfr_forward.1} parent=11 // pred_region
        _
      $region20: #{msfr_forward.1} parent=11 // pred_fallthru
        _
      // Predicated region
      $region21: #{msfr_forward.1} parent=11 // pred_check
        %p212 = pneg %p102
      $region22: #{msfr_forward.1} parent=11 // pred_check_branch
        %214 = sbr.rel (%p212) target = $region24
      $region23: #{msfr_forward.1} parent=11 // pred_region
        _
      $region24: #{msfr_forward.1} parent=11 // pred_fallthru
        _
      // Predicated region
      $region25: #{msfr_forward.1} parent=11 // pred_check
        %p215 = pneg %p123
      $region26: #{msfr_forward.1} parent=11 // pred_check_branch
        %217 = sbr.rel (%p215) target = $region28
      $region27: #{msfr_forward.1} parent=11 // pred_region
        _
      $region28: #{msfr_forward.1} parent=11 // pred_fallthru
        _
      // Predicated region
      $region29: #{msfr_forward.1} parent=11 // pred_check
        %p218 = pneg %p144
      $region30: #{msfr_forward.1} parent=11 // pred_check_branch
        %220 = sbr.rel (%p218) target = $region32
      $region31: #{msfr_forward.1} parent=11 // pred_region
        _
      $region32: #{msfr_forward.1} parent=11 // pred_fallthru
        _
      // Predicated region
      $region33: #{msfr_forward.1} parent=11 // pred_check
        %p221 = pneg %p165
      $region34: #{msfr_forward.1} parent=11 // pred_check_branch
        %223 = sbr.rel (%p221) target = $region36
      $region35: #{msfr_forward.1} parent=11 // pred_region
        _
      $region36: #{msfr_forward.1} parent=11 // pred_fallthru
        _
    $region12: #{msfr_forward.1} parent=5 // pred_fallthru
      _
    %p224 = scmp.lt.s32.totalorder %s13, 2
    // Predicated region
    $region37: #{msfr_forward.1} parent=5 // pred_check
      %p225 = pneg %p224
    $region38: #{msfr_forward.1} parent=5 // pred_check_branch
      %227 = sbr.rel (%p225) target = $region40
    $region39: #{msfr_forward.1} parent=5 // pred_region
      // Predicated region
      $region41: #{msfr_forward.1} parent=39 // pred_check
        %p228 = pneg %p33
      $region42: #{msfr_forward.1} parent=39 // pred_check_branch
        %230 = sbr.rel (%p228) target = $region44
      $region43: #{msfr_forward.1} parent=39 // pred_region
        %p231 = scmp.lt.s32.totalorder %s13, 1
        %s232 = scalar_select %p231, %s13, 1
        %s233 = smul.addr %s232, 32
        %s234 = smul.addr %s233, 4
        %s235 = scalar_lea.vmem %s0, %s234
      $region44: #{msfr_forward.1} parent=39 // pred_fallthru
        _
    $region40: #{msfr_forward.1} parent=5 // pred_fallthru
      _
    %p236 = scmp.le.s32.totalorder 1, %s13
    %p237 = scmp.lt.s32.totalorder %s13, 3
    %p238 = pnand %p236, %p237
    %p239 = pneg %p238
    // Predicated region
    $region45: #{msfr_forward.1} parent=5 // pred_check
      _
    $region46: #{msfr_forward.1} parent=5 // pred_check_branch
      %241 = sbr.rel (%p238) target = $region48
    $region47: #{msfr_forward.1} parent=5 // pred_region
      %s242 = ssub.s32 %s13, 1
      %p243 = scmp.lt.s32.totalorder %s18, 1
      %s244 = scalar_select %p243, %s18, 1
      %s245 = smul.addr %s244, 32
      %s246 = smul.addr %s245, 4
      %s247 = scalar_lea.vmem %s0, %s246
      %p248 = pneg %p39
      %p249 = pneg %p36
      %p250 = pneg %p60
      %p251 = pneg %p57
      %p252 = pneg %p81
      %p253 = pneg %p78
      %p254 = pneg %p102
      %p255 = pneg %p99
      %p256 = pneg %p123
      %p257 = pneg %p120
      %p258 = pneg %p144
      %p259 = pneg %p141
      %p260 = pneg %p165
      %p261 = pneg %p162
      %p262 = pneg %p191
      %p263 = pneg %p188
      %p264 = scmp.lt.s32.totalorder %s18, 1
      %s265 = scalar_select %p264, %s18, 1
      %s266 = smul.addr %s265, 8
      %s267 = smul.addr %s266, 8
      %s268 = scalar_lea.vmem %s7, %s267
      %p269 = scmp.lt.s32.totalorder %s18, 1
      %s270 = scalar_select %p269, %s18, 1
      %s271 = smul.addr %s270, 32
      %s272 = smul.addr %s271, 4
      %s273 = scalar_lea.vmem %s0, %s272
      %p274 = scmp.lt.s32.totalorder %s18, 1
      %s275 = scalar_select %p274, %s18, 1
      %s276 = smul.addr %s275, 8
      %s277 = smul.addr %s276, 8
      %s278 = scalar_lea.vmem %s7, %s277
      %v282 = vld [vmem:[%s273] sm:$0xf]
      %v283 = vld [vmem:[%s273 + $0x4] sm:$0xf]
      %v284 = vld [vmem:[%s273 + $0x8] sm:$0xf]
      %v285 = vld [vmem:[%s273 + $0xc] sm:$0xf]
      %v286 = vld [vmem:[%s273 + $0x10] sm:$0xf]
      %v287 = vld [vmem:[%s273 + $0x14] sm:$0xf]
      %v288 = vld [vmem:[%s273 + $0x18] sm:$0xf]
      %v289 = vld [vmem:[%s273 + $0x1c] sm:$0xf]
      %v290 = vld [vmem:[%s273 + $0x20] sm:$0xf]
      %v291 = vld [vmem:[%s273 + $0x24] sm:$0xf]
      %v292 = vld [vmem:[%s273 + $0x28] sm:$0xf]
      %v293 = vld [vmem:[%s273 + $0x2c] sm:$0xf]
      %v294 = vld [vmem:[%s273 + $0x30] sm:$0xf]
      %v295 = vld [vmem:[%s273 + $0x34] sm:$0xf]
      %v296 = vld [vmem:[%s273 + $0x38] sm:$0xf]
      %v297 = vld [vmem:[%s273 + $0x3c] sm:$0xf]
      %v298 = vld [vmem:[%s273 + $0x40] sm:$0xf]
      %v299 = vld [vmem:[%s273 + $0x44] sm:$0xf]
      %v300 = vld [vmem:[%s273 + $0x48] sm:$0xf]
      %v301 = vld [vmem:[%s273 + $0x4c] sm:$0xf]
      %v302 = vld [vmem:[%s273 + $0x50] sm:$0xf]
      %v303 = vld [vmem:[%s273 + $0x54] sm:$0xf]
      %v304 = vld [vmem:[%s273 + $0x58] sm:$0xf]
      %v305 = vld [vmem:[%s273 + $0x5c] sm:$0xf]
      %v306 = vld [vmem:[%s273 + $0x60] sm:$0xf]
      %v307 = vld [vmem:[%s273 + $0x64] sm:$0xf]
      %v308 = vld [vmem:[%s273 + $0x68] sm:$0xf]
      %v309 = vld [vmem:[%s273 + $0x6c] sm:$0xf]
      %v310 = vld [vmem:[%s273 + $0x70] sm:$0xf]
      %v311 = vld [vmem:[%s273 + $0x74] sm:$0xf]
      %v312 = vld [vmem:[%s273 + $0x78] sm:$0xf]
      %v313 = vld [vmem:[%s273 + $0x7c] sm:$0xf]
      %v314 = vld [vmem:[%s1] sm:$0xf]
      %v315 = vld [vmem:[%s1 + $0x4] sm:$0xf]
      %v316 = vld [vmem:[%s1 + $0x8] sm:$0xf]
      %v317 = vld [vmem:[%s1 + $0xc] sm:$0xf]
      %v318 = vld [vmem:[%s1 + $0x10] sm:$0xf]
      %v319 = vld [vmem:[%s1 + $0x14] sm:$0xf]
      %v320 = vld [vmem:[%s1 + $0x18] sm:$0xf]
      %v321 = vld [vmem:[%s1 + $0x1c] sm:$0xf]
      %v322 = vld [vmem:[%s1 + $0x20] sm:$0xf]
      %v323 = vld [vmem:[%s1 + $0x24] sm:$0xf]
      %v324 = vld [vmem:[%s1 + $0x28] sm:$0xf]
      %v325 = vld [vmem:[%s1 + $0x2c] sm:$0xf]
      %v326 = vld [vmem:[%s1 + $0x30] sm:$0xf]
      %v327 = vld [vmem:[%s1 + $0x34] sm:$0xf]
      %v328 = vld [vmem:[%s1 + $0x38] sm:$0xf]
      %v329 = vld [vmem:[%s1 + $0x3c] sm:$0xf]
      %v362 = vunpack.c.l.b16 %v282
      %v363 = vunpack.c.l.b16 %v283
      %v364 = vunpack.c.l.b16 %v284
      %v365 = vunpack.c.l.b16 %v285
      %v366 = vunpack.c.l.b16 %v286
      %v367 = vunpack.c.l.b16 %v287
      %v368 = vunpack.c.l.b16 %v288
      %v369 = vunpack.c.l.b16 %v289
      %v370 = vunpack.c.l.b16 %v290
      %v371 = vunpack.c.l.b16 %v291
      %v372 = vunpack.c.l.b16 %v292
      %v373 = vunpack.c.l.b16 %v293
      %v374 = vunpack.c.l.b16 %v294
      %v375 = vunpack.c.l.b16 %v295
      %v376 = vunpack.c.l.b16 %v296
      %v377 = vunpack.c.l.b16 %v297
      %v378 = vunpack.c.l.b16 %v298
      %v379 = vunpack.c.l.b16 %v299
      %v380 = vunpack.c.l.b16 %v300
      %v381 = vunpack.c.l.b16 %v301
      %v382 = vunpack.c.l.b16 %v302
      %v383 = vunpack.c.l.b16 %v303
      %v384 = vunpack.c.l.b16 %v304
      %v385 = vunpack.c.l.b16 %v305
      %v386 = vunpack.c.l.b16 %v306
      %v387 = vunpack.c.l.b16 %v307
      %v388 = vunpack.c.l.b16 %v308
      %v389 = vunpack.c.l.b16 %v309
      %v390 = vunpack.c.l.b16 %v310
      %v391 = vunpack.c.l.b16 %v311
      %v392 = vunpack.c.l.b16 %v312
      %v393 = vunpack.c.l.b16 %v313
      %v394 = vpack.c.b16 %v363, %v362
      %v395 = vpack.c.b16 %v365, %v364
      %v396 = vpack.c.b16 %v367, %v366
      %v397 = vpack.c.b16 %v369, %v368
      %v398 = vpack.c.b16 %v371, %v370
      %v399 = vpack.c.b16 %v373, %v372
      %v400 = vpack.c.b16 %v375, %v374
      %v401 = vpack.c.b16 %v377, %v376
      %v402 = vpack.c.b16 %v379, %v378
      %v403 = vpack.c.b16 %v381, %v380
      %v404 = vpack.c.b16 %v383, %v382
      %v405 = vpack.c.b16 %v385, %v384
      %v406 = vpack.c.b16 %v387, %v386
      %v407 = vpack.c.b16 %v389, %v388
      %v408 = vpack.c.b16 %v391, %v390
      %v409 = vpack.c.b16 %v393, %v392
      %v442 = vunpack.c.l.b16 %v314
      %v443 = vunpack.c.l.b16 %v315
      %v444 = vunpack.c.l.b16 %v316
      %v445 = vunpack.c.l.b16 %v317
      %v446 = vunpack.c.l.b16 %v318
      %v447 = vunpack.c.l.b16 %v319
      %v448 = vunpack.c.l.b16 %v320
      %v449 = vunpack.c.l.b16 %v321
      %v450 = vunpack.c.l.b16 %v322
      %v451 = vunpack.c.l.b16 %v323
      %v452 = vunpack.c.l.b16 %v324
      %v453 = vunpack.c.l.b16 %v325
      %v454 = vunpack.c.l.b16 %v326
      %v455 = vunpack.c.l.b16 %v327
      %v456 = vunpack.c.l.b16 %v328
      %v457 = vunpack.c.l.b16 %v329
      %v458 = vpack.c.b16 %v443, %v442
      %v459 = vpack.c.b16 %v445, %v444
      %v460 = vpack.c.b16 %v447, %v446
      %v461 = vpack.c.b16 %v449, %v448
      %v462 = vpack.c.b16 %v451, %v450
      %v463 = vpack.c.b16 %v453, %v452
      %v464 = vpack.c.b16 %v455, %v454
      %v465 = vpack.c.b16 %v457, %v456
      %474 = vmatprep.subr.bf16.mxu0 0
      %475 = vmatpush1.bf16.msra.mxu0 %v458
      %476 = vmatprep.subr.bf16.mxu0 0
      %477 = vmatpush1.bf16.msra.mxu0 %v459
      %478 = vmatprep.subr.bf16.mxu0 0
      %479 = vmatpush1.bf16.msra.mxu0 %v460
      %480 = vmatprep.subr.bf16.mxu0 0
      %481 = vmatpush1.bf16.msra.mxu0 %v461
      %482 = vmatprep.subr.bf16.mxu0 0
      %483 = vmatpush1.bf16.msra.mxu0 %v462
      %484 = vmatprep.subr.bf16.mxu0 0
      %485 = vmatpush1.bf16.msra.mxu0 %v463
      %486 = vmatprep.subr.bf16.mxu0 0
      %487 = vmatpush1.bf16.msra.mxu0 %v464
      %488 = vmatprep.subr.bf16.mxu0 0
      %489 = vmatpush1.bf16.msra.mxu0 %v465
      %490 = vmatprep.subr.bf16.mxu0 0
      %491 = vmatpush1.bf16.msra.mxu0 0
      %492 = vmatprep.subr.bf16.mxu0 0
      %493 = vmatpush1.bf16.msra.mxu0 0
      %494 = vmatprep.subr.bf16.mxu0 0
      %495 = vmatpush1.bf16.msra.mxu0 0
      %496 = vmatprep.subr.bf16.mxu0 0
      %497 = vmatpush1.bf16.msra.mxu0 0
      %498 = vmatprep.subr.bf16.mxu0 0
      %499 = vmatpush1.bf16.msra.mxu0 0
      %500 = vmatprep.subr.bf16.mxu0 0
      %501 = vmatpush1.bf16.msra.mxu0 0
      %502 = vmatprep.subr.bf16.mxu0 0
      %503 = vmatpush1.bf16.msra.mxu0 0
      %504 = vmatprep.subr.bf16.mxu0 0
      %505 = vmatpush1.bf16.msra.mxu0 0
      %506 = vmatprep.mubr.bf16.mxu0 0
      %507 = vmatmul.mubr.bf16.gmra.mrb[0].mxu0 %v394
      %v508 = vpop.f32.mrb[0].mxu0
      %v509 = vadd.f32 0.0, %v508
      %v510 = vpop.f32.mrb[0].mxu0
      %v511 = vpop.f32.mrb[0].mxu0
      %v512 = vadd.f32 0.0, %v511
      %v513 = vpop.f32.mrb[0].mxu0
      %514 = vmatprep.mubr.bf16.mxu0 0
      %515 = vmatmul.mubr.bf16.gmra.mrb[0].mxu0 %v395
      %v516 = vpop.f32.mrb[0].mxu0
      %v517 = vadd.f32 0.0, %v516
      %v518 = vpop.f32.mrb[0].mxu0
      %v519 = vpop.f32.mrb[0].mxu0
      %v520 = vadd.f32 0.0, %v519
      %v521 = vpop.f32.mrb[0].mxu0
      %522 = vmatprep.mubr.bf16.mxu0 0
      %523 = vmatmul.mubr.bf16.gmra.mrb[0].mxu0 %v396
      %v524 = vpop.f32.mrb[0].mxu0
      %v525 = vadd.f32 0.0, %v524
      %v526 = vpop.f32.mrb[0].mxu0
      %v527 = vpop.f32.mrb[0].mxu0
      %v528 = vadd.f32 0.0, %v527
      %v529 = vpop.f32.mrb[0].mxu0
      %530 = vmatprep.mubr.bf16.mxu0 0
      %531 = vmatmul.mubr.bf16.gmra.mrb[0].mxu0 %v397
      %v532 = vpop.f32.mrb[0].mxu0
      %v533 = vadd.f32 0.0, %v532
      %v534 = vpop.f32.mrb[0].mxu0
      %v535 = vpop.f32.mrb[0].mxu0
      %v536 = vadd.f32 0.0, %v535
      %v537 = vpop.f32.mrb[0].mxu0
      %538 = vmatprep.mubr.bf16.mxu0 0
      %539 = vmatmul.mubr.bf16.gmra.mrb[0].mxu0 %v398
      %v540 = vpop.f32.mrb[0].mxu0
      %v541 = vadd.f32 0.0, %v540
      %v542 = vpop.f32.mrb[0].mxu0
      %v543 = vpop.f32.mrb[0].mxu0
      %v544 = vadd.f32 0.0, %v543
      %v545 = vpop.f32.mrb[0].mxu0
      %546 = vmatprep.mubr.bf16.mxu0 0
      %547 = vmatmul.mubr.bf16.gmra.mrb[0].mxu0 %v399
      %v548 = vpop.f32.mrb[0].mxu0
      %v549 = vadd.f32 0.0, %v548
      %v550 = vpop.f32.mrb[0].mxu0
      %v551 = vpop.f32.mrb[0].mxu0
      %v552 = vadd.f32 0.0, %v551
      %v553 = vpop.f32.mrb[0].mxu0
      %554 = vmatprep.mubr.bf16.mxu0 0
      %555 = vmatmul.mubr.bf16.gmra.mrb[0].mxu0 %v400
      %v556 = vpop.f32.mrb[0].mxu0
      %v557 = vadd.f32 0.0, %v556
      %v558 = vpop.f32.mrb[0].mxu0
      %v559 = vpop.f32.mrb[0].mxu0
      %v560 = vadd.f32 0.0, %v559
      %v561 = vpop.f32.mrb[0].mxu0
      %562 = vmatprep.mubr.bf16.mxu0 0
      %563 = vmatmul.mubr.bf16.gmra.mrb[0].mxu0 %v401
      %v564 = vpop.f32.mrb[0].mxu0
      %v565 = vadd.f32 0.0, %v564
      %v566 = vpop.f32.mrb[0].mxu0
      %v567 = vpop.f32.mrb[0].mxu0
      %v568 = vadd.f32 0.0, %v567
      %v569 = vpop.f32.mrb[0].mxu0
      %570 = vmatprep.mubr.bf16.mxu0 0
      %571 = vmatmul.mubr.bf16.gmra.mrb[0].mxu0 %v402
      %v572 = vpop.f32.mrb[0].mxu0
      %v573 = vadd.f32 0.0, %v572
      %v574 = vpop.f32.mrb[0].mxu0
      %v575 = vpop.f32.mrb[0].mxu0
      %v576 = vadd.f32 0.0, %v575
      %v577 = vpop.f32.mrb[0].mxu0
      %578 = vmatprep.mubr.bf16.mxu0 0
      %579 = vmatmul.mubr.bf16.gmra.mrb[0].mxu0 %v403
      %v580 = vpop.f32.mrb[0].mxu0
      %v581 = vadd.f32 0.0, %v580
      %v582 = vpop.f32.mrb[0].mxu0
      %v583 = vpop.f32.mrb[0].mxu0
      %v584 = vadd.f32 0.0, %v583
      %v585 = vpop.f32.mrb[0].mxu0
      %586 = vmatprep.mubr.bf16.mxu0 0
      %587 = vmatmul.mubr.bf16.gmra.mrb[0].mxu0 %v404
      %v588 = vpop.f32.mrb[0].mxu0
      %v589 = vadd.f32 0.0, %v588
      %v590 = vpop.f32.mrb[0].mxu0
      %v591 = vpop.f32.mrb[0].mxu0
      %v592 = vadd.f32 0.0, %v591
      %v593 = vpop.f32.mrb[0].mxu0
      %594 = vmatprep.mubr.bf16.mxu0 0
      %595 = vmatmul.mubr.bf16.gmra.mrb[0].mxu0 %v405
      %v596 = vpop.f32.mrb[0].mxu0
      %v597 = vadd.f32 0.0, %v596
      %v598 = vpop.f32.mrb[0].mxu0
      %v599 = vpop.f32.mrb[0].mxu0
      %v600 = vadd.f32 0.0, %v599
      %v601 = vpop.f32.mrb[0].mxu0
      %602 = vmatprep.mubr.bf16.mxu0 0
      %603 = vmatmul.mubr.bf16.gmra.mrb[0].mxu0 %v406
      %v604 = vpop.f32.mrb[0].mxu0
      %v605 = vadd.f32 0.0, %v604
      %v606 = vpop.f32.mrb[0].mxu0
      %v607 = vpop.f32.mrb[0].mxu0
      %v608 = vadd.f32 0.0, %v607
      %v609 = vpop.f32.mrb[0].mxu0
      %610 = vmatprep.mubr.bf16.mxu0 0
      %611 = vmatmul.mubr.bf16.gmra.mrb[0].mxu0 %v407
      %v612 = vpop.f32.mrb[0].mxu0
      %v613 = vadd.f32 0.0, %v612
      %v614 = vpop.f32.mrb[0].mxu0
      %v615 = vpop.f32.mrb[0].mxu0
      %v616 = vadd.f32 0.0, %v615
      %v617 = vpop.f32.mrb[0].mxu0
      %618 = vmatprep.mubr.bf16.mxu0 0
      %619 = vmatmul.mubr.bf16.gmra.mrb[0].mxu0 %v408
      %v620 = vpop.f32.mrb[0].mxu0
      %v621 = vadd.f32 0.0, %v620
      %v622 = vpop.f32.mrb[0].mxu0
      %v623 = vpop.f32.mrb[0].mxu0
      %v624 = vadd.f32 0.0, %v623
      %v625 = vpop.f32.mrb[0].mxu0
      %626 = vmatprep.mubr.bf16.mxu0 0
      %627 = vmatmul.mubr.bf16.gmra.mrb[0].mxu0 %v409
      %v628 = vpop.f32.mrb[0].mxu0
      %v629 = vadd.f32 0.0, %v628
      %v630 = vpop.f32.mrb[0].mxu0
      %v631 = vpop.f32.mrb[0].mxu0
      %v632 = vadd.f32 0.0, %v631
      %v633 = vpop.f32.mrb[0].mxu0
      %634 = vdwg.mxu0
      %v635 = vld [vmem:[%s2] sm:$0x1]
      %v637 = vlaneseq
      %v638 = vshrl.u32 %v637, 7
      %v639 = vsub.s32 0, %v638
      %v640 = vrot.slane %v635, %v639
      %v642 = vmul.f32 %v509, %v640
      %v643 = vmul.f32 %v512, %v640
      %v644 = vmul.f32 %v517, %v640
      %v645 = vmul.f32 %v520, %v640
      %v646 = vmul.f32 %v525, %v640
      %v647 = vmul.f32 %v528, %v640
      %v648 = vmul.f32 %v533, %v640
      %v649 = vmul.f32 %v536, %v640
      %v650 = vmul.f32 %v541, %v640
      %v651 = vmul.f32 %v544, %v640
      %v652 = vmul.f32 %v549, %v640
      %v653 = vmul.f32 %v552, %v640
      %v654 = vmul.f32 %v557, %v640
      %v655 = vmul.f32 %v560, %v640
      %v656 = vmul.f32 %v565, %v640
      %v657 = vmul.f32 %v568, %v640
      %v658 = vmul.f32 %v573, %v640
      %v659 = vmul.f32 %v576, %v640
      %v660 = vmul.f32 %v581, %v640
      %v661 = vmul.f32 %v584, %v640
      %v662 = vmul.f32 %v589, %v640
      %v663 = vmul.f32 %v592, %v640
      %v664 = vmul.f32 %v597, %v640
      %v665 = vmul.f32 %v600, %v640
      %v666 = vmul.f32 %v605, %v640
      %v667 = vmul.f32 %v608, %v640
      %v668 = vmul.f32 %v613, %v640
      %v669 = vmul.f32 %v616, %v640
      %v670 = vmul.f32 %v621, %v640
      %v671 = vmul.f32 %v624, %v640
      %v672 = vmul.f32 %v629, %v640
      %v673 = vmul.f32 %v632, %v640
      %v674 = vld [vmem:[%s3] sm:$0x1]
      %v676 = vlaneseq
      %v677 = vshrl.u32 %v676, 7
      %v678 = vsub.s32 0, %v677
      %v679 = vrot.slane %v674, %v678
      %v681 = vadd.f32 %v642, %v679
      %v682 = vadd.f32 %v643, %v679
      %v683 = vadd.f32 %v644, %v679
      %v684 = vadd.f32 %v645, %v679
      %v685 = vadd.f32 %v646, %v679
      %v686 = vadd.f32 %v647, %v679
      %v687 = vadd.f32 %v648, %v679
      %v688 = vadd.f32 %v649, %v679
      %v689 = vadd.f32 %v650, %v679
      %v690 = vadd.f32 %v651, %v679
      %v691 = vadd.f32 %v652, %v679
      %v692 = vadd.f32 %v653, %v679
      %v693 = vadd.f32 %v654, %v679
      %v694 = vadd.f32 %v655, %v679
      %v695 = vadd.f32 %v656, %v679
      %v696 = vadd.f32 %v657, %v679
      %v697 = vadd.f32 %v658, %v679
      %v698 = vadd.f32 %v659, %v679
      %v699 = vadd.f32 %v660, %v679
      %v700 = vadd.f32 %v661, %v679
      %v701 = vadd.f32 %v662, %v679
      %v702 = vadd.f32 %v663, %v679
      %v703 = vadd.f32 %v664, %v679
      %v704 = vadd.f32 %v665, %v679
      %v705 = vadd.f32 %v666, %v679
      %v706 = vadd.f32 %v667, %v679
      %v707 = vadd.f32 %v668, %v679
      %v708 = vadd.f32 %v669, %v679
      %v709 = vadd.f32 %v670, %v679
      %v710 = vadd.f32 %v671, %v679
      %v711 = vadd.f32 %v672, %v679
      %v712 = vadd.f32 %v673, %v679
      %v713 = vmax.f32 %v681, 0.0
      %v714 = vmax.f32 %v682, 0.0
      %v715 = vmax.f32 %v683, 0.0
      %v716 = vmax.f32 %v684, 0.0
      %v717 = vmax.f32 %v685, 0.0
      %v718 = vmax.f32 %v686, 0.0
      %v719 = vmax.f32 %v687, 0.0
      %v720 = vmax.f32 %v688, 0.0
      %v721 = vmax.f32 %v689, 0.0
      %v722 = vmax.f32 %v690, 0.0
      %v723 = vmax.f32 %v691, 0.0
      %v724 = vmax.f32 %v692, 0.0
      %v725 = vmax.f32 %v693, 0.0
      %v726 = vmax.f32 %v694, 0.0
      %v727 = vmax.f32 %v695, 0.0
      %v728 = vmax.f32 %v696, 0.0
      %v729 = vmax.f32 %v697, 0.0
      %v730 = vmax.f32 %v698, 0.0
      %v731 = vmax.f32 %v699, 0.0
      %v732 = vmax.f32 %v700, 0.0
      %v733 = vmax.f32 %v701, 0.0
      %v734 = vmax.f32 %v702, 0.0
      %v735 = vmax.f32 %v703, 0.0
      %v736 = vmax.f32 %v704, 0.0
      %v737 = vmax.f32 %v705, 0.0
      %v738 = vmax.f32 %v706, 0.0
      %v739 = vmax.f32 %v707, 0.0
      %v740 = vmax.f32 %v708, 0.0
      %v741 = vmax.f32 %v709, 0.0
      %v742 = vmax.f32 %v710, 0.0
      %v743 = vmax.f32 %v711, 0.0
      %v744 = vmax.f32 %v712, 0.0
      %745 = vst [vmem:[#allocation2] sm:$0xff] 0
      %746 = vst [vmem:[#allocation2 + $0x8] sm:$0xff] 0
      %747 = vst [vmem:[#allocation2 + $0x90] sm:$0xff] 0
      %748 = vst [vmem:[#allocation2 + $0x98] sm:$0xff] 0
      %v749 = vlaneseq
      %v750 = vshrl.u32 %v749, 7
      %v751 = vadd.s32 %v750, 8
      %v752 = vadd.s32 %v750, 16
      %v753 = vadd.s32 %v750, 24
      %v754 = vadd.s32 %v750, 32
      %v755 = vadd.s32 %v750, 40
      %v756 = vadd.s32 %v750, 48
      %v757 = vadd.s32 %v750, 56
      %v758 = vadd.s32 %v750, 64
      %v759 = vadd.s32 %v750, 72
      %v760 = vadd.s32 %v750, 80
      %v761 = vadd.s32 %v750, 88
      %v762 = vadd.s32 %v750, 96
      %v763 = vadd.s32 %v750, 104
      %v764 = vadd.s32 %v750, 112
      %v765 = vadd.s32 %v750, 120
      %v766 = vadd.s32 %v750, 128
      %v767 = vadd.s32 %v750, 136
      %v768 = vadd.s32 %v750, 144
      %v769 = vadd.s32 %v750, 152
      %v770 = vadd.s32 %v750, 160
      %v771 = vadd.s32 %v750, 168
      %v772 = vadd.s32 %v750, 176
      %v773 = vadd.s32 %v750, 184
      %v774 = vadd.s32 %v750, 192
      %v775 = vadd.s32 %v750, 200
      %v776 = vadd.s32 %v750, 208
      %v777 = vadd.s32 %v750, 216
      %v778 = vadd.s32 %v750, 224
      %v779 = vadd.s32 %v750, 232
      %v780 = vadd.s32 %v750, 240
      %v781 = vadd.s32 %v750, 248
      %vm782 = vcmp.lt.s32.totalorder %v750, 0
      %v783 = vsub.s32 0, %v750
      %v784 = vsel %vm782, %v783, %v750
      %v785 = vshrl.u32 %v784, 4
      %v786 = vand.u32 %v784, 15
      %v787 = vsub.s32 0, %v786
      %v788 = vsel %vm782, %v787, %v786
      %vm789 = vcmp.lt.s32.totalorder %v751, 0
      %v790 = vsub.s32 0, %v751
      %v791 = vsel %vm789, %v790, %v751
      %v792 = vshrl.u32 %v791, 4
      %v793 = vand.u32 %v791, 15
      %v794 = vsub.s32 0, %v793
      %v795 = vsel %vm789, %v794, %v793
      %vm796 = vcmp.lt.s32.totalorder %v752, 0
      %v797 = vsub.s32 0, %v752
      %v798 = vsel %vm796, %v797, %v752
      %v799 = vshrl.u32 %v798, 4
      %v800 = vand.u32 %v798, 15
      %v801 = vsub.s32 0, %v800
      %v802 = vsel %vm796, %v801, %v800
      %vm803 = vcmp.lt.s32.totalorder %v753, 0
      %v804 = vsub.s32 0, %v753
      %v805 = vsel %vm803, %v804, %v753
      %v806 = vshrl.u32 %v805, 4
      %v807 = vand.u32 %v805, 15
      %v808 = vsub.s32 0, %v807
      %v809 = vsel %vm803, %v808, %v807
      %vm810 = vcmp.lt.s32.totalorder %v754, 0
      %v811 = vsub.s32 0, %v754
      %v812 = vsel %vm810, %v811, %v754
      %v813 = vshrl.u32 %v812, 4
      %v814 = vand.u32 %v812, 15
      %v815 = vsub.s32 0, %v814
      %v816 = vsel %vm810, %v815, %v814
      %vm817 = vcmp.lt.s32.totalorder %v755, 0
      %v818 = vsub.s32 0, %v755
      %v819 = vsel %vm817, %v818, %v755
      %v820 = vshrl.u32 %v819, 4
      %v821 = vand.u32 %v819, 15
      %v822 = vsub.s32 0, %v821
      %v823 = vsel %vm817, %v822, %v821
      %vm824 = vcmp.lt.s32.totalorder %v756, 0
      %v825 = vsub.s32 0, %v756
      %v826 = vsel %vm824, %v825, %v756
      %v827 = vshrl.u32 %v826, 4
      %v828 = vand.u32 %v826, 15
      %v829 = vsub.s32 0, %v828
      %v830 = vsel %vm824, %v829, %v828
      %vm831 = vcmp.lt.s32.totalorder %v757, 0
      %v832 = vsub.s32 0, %v757
      %v833 = vsel %vm831, %v832, %v757
      %v834 = vshrl.u32 %v833, 4
      %v835 = vand.u32 %v833, 15
      %v836 = vsub.s32 0, %v835
      %v837 = vsel %vm831, %v836, %v835
      %vm838 = vcmp.lt.s32.totalorder %v758, 0
      %v839 = vsub.s32 0, %v758
      %v840 = vsel %vm838, %v839, %v758
      %v841 = vshrl.u32 %v840, 4
      %v842 = vand.u32 %v840, 15
      %v843 = vsub.s32 0, %v842
      %v844 = vsel %vm838, %v843, %v842
      %vm845 = vcmp.lt.s32.totalorder %v759, 0
      %v846 = vsub.s32 0, %v759
      %v847 = vsel %vm845, %v846, %v759
      %v848 = vshrl.u32 %v847, 4
      %v849 = vand.u32 %v847, 15
      %v850 = vsub.s32 0, %v849
      %v851 = vsel %vm845, %v850, %v849
      %vm852 = vcmp.lt.s32.totalorder %v760, 0
      %v853 = vsub.s32 0, %v760
      %v854 = vsel %vm852, %v853, %v760
      %v855 = vshrl.u32 %v854, 4
      %v856 = vand.u32 %v854, 15
      %v857 = vsub.s32 0, %v856
      %v858 = vsel %vm852, %v857, %v856
      %vm859 = vcmp.lt.s32.totalorder %v761, 0
      %v860 = vsub.s32 0, %v761
      %v861 = vsel %vm859, %v860, %v761
      %v862 = vshrl.u32 %v861, 4
      %v863 = vand.u32 %v861, 15
      %v864 = vsub.s32 0, %v863
      %v865 = vsel %vm859, %v864, %v863
      %vm866 = vcmp.lt.s32.totalorder %v762, 0
      %v867 = vsub.s32 0, %v762
      %v868 = vsel %vm866, %v867, %v762
      %v869 = vshrl.u32 %v868, 4
      %v870 = vand.u32 %v868, 15
      %v871 = vsub.s32 0, %v870
      %v872 = vsel %vm866, %v871, %v870
      %vm873 = vcmp.lt.s32.totalorder %v763, 0
      %v874 = vsub.s32 0, %v763
      %v875 = vsel %vm873, %v874, %v763
      %v876 = vshrl.u32 %v875, 4
      %v877 = vand.u32 %v875, 15
      %v878 = vsub.s32 0, %v877
      %v879 = vsel %vm873, %v878, %v877
      %vm880 = vcmp.lt.s32.totalorder %v764, 0
      %v881 = vsub.s32 0, %v764
      %v882 = vsel %vm880, %v881, %v764
      %v883 = vshrl.u32 %v882, 4
      %v884 = vand.u32 %v882, 15
      %v885 = vsub.s32 0, %v884
      %v886 = vsel %vm880, %v885, %v884
      %vm887 = vcmp.lt.s32.totalorder %v765, 0
      %v888 = vsub.s32 0, %v765
      %v889 = vsel %vm887, %v888, %v765
      %v890 = vshrl.u32 %v889, 4
      %v891 = vand.u32 %v889, 15
      %v892 = vsub.s32 0, %v891
      %v893 = vsel %vm887, %v892, %v891
      %vm894 = vcmp.lt.s32.totalorder %v766, 0
      %v895 = vsub.s32 0, %v766
      %v896 = vsel %vm894, %v895, %v766
      %v897 = vshrl.u32 %v896, 4
      %v898 = vand.u32 %v896, 15
      %v899 = vsub.s32 0, %v898
      %v900 = vsel %vm894, %v899, %v898
      %vm901 = vcmp.lt.s32.totalorder %v767, 0
      %v902 = vsub.s32 0, %v767
      %v903 = vsel %vm901, %v902, %v767
      %v904 = vshrl.u32 %v903, 4
      %v905 = vand.u32 %v903, 15
      %v906 = vsub.s32 0, %v905
      %v907 = vsel %vm901, %v906, %v905
      %vm908 = vcmp.lt.s32.totalorder %v768, 0
      %v909 = vsub.s32 0, %v768
      %v910 = vsel %vm908, %v909, %v768
      %v911 = vshrl.u32 %v910, 4
      %v912 = vand.u32 %v910, 15
      %v913 = vsub.s32 0, %v912
      %v914 = vsel %vm908, %v913, %v912
      %vm915 = vcmp.lt.s32.totalorder %v769, 0
      %v916 = vsub.s32 0, %v769
      %v917 = vsel %vm915, %v916, %v769
      %v918 = vshrl.u32 %v917, 4
      %v919 = vand.u32 %v917, 15
      %v920 = vsub.s32 0, %v919
      %v921 = vsel %vm915, %v920, %v919
      %vm922 = vcmp.lt.s32.totalorder %v770, 0
      %v923 = vsub.s32 0, %v770
      %v924 = vsel %vm922, %v923, %v770
      %v925 = vshrl.u32 %v924, 4
      %v926 = vand.u32 %v924, 15
      %v927 = vsub.s32 0, %v926
      %v928 = vsel %vm922, %v927, %v926
      %vm929 = vcmp.lt.s32.totalorder %v771, 0
      %v930 = vsub.s32 0, %v771
      %v931 = vsel %vm929, %v930, %v771
      %v932 = vshrl.u32 %v931, 4
      %v933 = vand.u32 %v931, 15
      %v934 = vsub.s32 0, %v933
      %v935 = vsel %vm929, %v934, %v933
      %vm936 = vcmp.lt.s32.totalorder %v772, 0
      %v937 = vsub.s32 0, %v772
      %v938 = vsel %vm936, %v937, %v772
      %v939 = vshrl.u32 %v938, 4
      %v940 = vand.u32 %v938, 15
      %v941 = vsub.s32 0, %v940
      %v942 = vsel %vm936, %v941, %v940
      %vm943 = vcmp.lt.s32.totalorder %v773, 0
      %v944 = vsub.s32 0, %v773
      %v945 = vsel %vm943, %v944, %v773
      %v946 = vshrl.u32 %v945, 4
      %v947 = vand.u32 %v945, 15
      %v948 = vsub.s32 0, %v947
      %v949 = vsel %vm943, %v948, %v947
      %vm950 = vcmp.lt.s32.totalorder %v774, 0
      %v951 = vsub.s32 0, %v774
      %v952 = vsel %vm950, %v951, %v774
      %v953 = vshrl.u32 %v952, 4
      %v954 = vand.u32 %v952, 15
      %v955 = vsub.s32 0, %v954
      %v956 = vsel %vm950, %v955, %v954
      %vm957 = vcmp.lt.s32.totalorder %v775, 0
      %v958 = vsub.s32 0, %v775
      %v959 = vsel %vm957, %v958, %v775
      %v960 = vshrl.u32 %v959, 4
      %v961 = vand.u32 %v959, 15
      %v962 = vsub.s32 0, %v961
      %v963 = vsel %vm957, %v962, %v961
      %vm964 = vcmp.lt.s32.totalorder %v776, 0
      %v965 = vsub.s32 0, %v776
      %v966 = vsel %vm964, %v965, %v776
      %v967 = vshrl.u32 %v966, 4
      %v968 = vand.u32 %v966, 15
      %v969 = vsub.s32 0, %v968
      %v970 = vsel %vm964, %v969, %v968
      %vm971 = vcmp.lt.s32.totalorder %v777, 0
      %v972 = vsub.s32 0, %v777
      %v973 = vsel %vm971, %v972, %v777
      %v974 = vshrl.u32 %v973, 4
      %v975 = vand.u32 %v973, 15
      %v976 = vsub.s32 0, %v975
      %v977 = vsel %vm971, %v976, %v975
      %vm978 = vcmp.lt.s32.totalorder %v778, 0
      %v979 = vsub.s32 0, %v778
      %v980 = vsel %vm978, %v979, %v778
      %v981 = vshrl.u32 %v980, 4
      %v982 = vand.u32 %v980, 15
      %v983 = vsub.s32 0, %v982
      %v984 = vsel %vm978, %v983, %v982
      %vm985 = vcmp.lt.s32.totalorder %v779, 0
      %v986 = vsub.s32 0, %v779
      %v987 = vsel %vm985, %v986, %v779
      %v988 = vshrl.u32 %v987, 4
      %v989 = vand.u32 %v987, 15
      %v990 = vsub.s32 0, %v989
      %v991 = vsel %vm985, %v990, %v989
      %vm992 = vcmp.lt.s32.totalorder %v780, 0
      %v993 = vsub.s32 0, %v780
      %v994 = vsel %vm992, %v993, %v780
      %v995 = vshrl.u32 %v994, 4
      %v996 = vand.u32 %v994, 15
      %v997 = vsub.s32 0, %v996
      %v998 = vsel %vm992, %v997, %v996
      %vm999 = vcmp.lt.s32.totalorder %v781, 0
      %v1000 = vsub.s32 0, %v781
      %v1001 = vsel %vm999, %v1000, %v781
      %v1002 = vshrl.u32 %v1001, 4
      %v1003 = vand.u32 %v1001, 15
      %v1004 = vsub.s32 0, %v1003
      %v1005 = vsel %vm999, %v1004, %v1003
      %vm1006 = vcmp.ne.s32.totalorder %v788, 0
      %vm1007 = vcmp.ne.s32.totalorder %v795, 0
      %vm1008 = vcmp.ne.s32.totalorder %v802, 0
      %vm1009 = vcmp.ne.s32.totalorder %v809, 0
      %vm1010 = vcmp.ne.s32.totalorder %v816, 0
      %vm1011 = vcmp.ne.s32.totalorder %v823, 0
      %vm1012 = vcmp.ne.s32.totalorder %v830, 0
      %vm1013 = vcmp.ne.s32.totalorder %v837, 0
      %vm1014 = vcmp.ne.s32.totalorder %v844, 0
      %vm1015 = vcmp.ne.s32.totalorder %v851, 0
      %vm1016 = vcmp.ne.s32.totalorder %v858, 0
      %vm1017 = vcmp.ne.s32.totalorder %v865, 0
      %vm1018 = vcmp.ne.s32.totalorder %v872, 0
      %vm1019 = vcmp.ne.s32.totalorder %v879, 0
      %vm1020 = vcmp.ne.s32.totalorder %v886, 0
      %vm1021 = vcmp.ne.s32.totalorder %v893, 0
      %vm1022 = vcmp.ne.s32.totalorder %v900, 0
      %vm1023 = vcmp.ne.s32.totalorder %v907, 0
      %vm1024 = vcmp.ne.s32.totalorder %v914, 0
      %vm1025 = vcmp.ne.s32.totalorder %v921, 0
      %vm1026 = vcmp.ne.s32.totalorder %v928, 0
      %vm1027 = vcmp.ne.s32.totalorder %v935, 0
      %vm1028 = vcmp.ne.s32.totalorder %v942, 0
      %vm1029 = vcmp.ne.s32.totalorder %v949, 0
      %vm1030 = vcmp.ne.s32.totalorder %v956, 0
      %vm1031 = vcmp.ne.s32.totalorder %v963, 0
      %vm1032 = vcmp.ne.s32.totalorder %v970, 0
      %vm1033 = vcmp.ne.s32.totalorder %v977, 0
      %vm1034 = vcmp.ne.s32.totalorder %v984, 0
      %vm1035 = vcmp.ne.s32.totalorder %v991, 0
      %vm1036 = vcmp.ne.s32.totalorder %v998, 0
      %vm1037 = vcmp.ne.s32.totalorder %v1005, 0
      %vm1038 = vcmp.lt.s32.totalorder %v788, 0
      %vm1039 = vcmp.lt.s32.totalorder %v795, 0
      %vm1040 = vcmp.lt.s32.totalorder %v802, 0
      %vm1041 = vcmp.lt.s32.totalorder %v809, 0
      %vm1042 = vcmp.lt.s32.totalorder %v816, 0
      %vm1043 = vcmp.lt.s32.totalorder %v823, 0
      %vm1044 = vcmp.lt.s32.totalorder %v830, 0
      %vm1045 = vcmp.lt.s32.totalorder %v837, 0
      %vm1046 = vcmp.lt.s32.totalorder %v844, 0
      %vm1047 = vcmp.lt.s32.totalorder %v851, 0
      %vm1048 = vcmp.lt.s32.totalorder %v858, 0
      %vm1049 = vcmp.lt.s32.totalorder %v865, 0
      %vm1050 = vcmp.lt.s32.totalorder %v872, 0
      %vm1051 = vcmp.lt.s32.totalorder %v879, 0
      %vm1052 = vcmp.lt.s32.totalorder %v886, 0
      %vm1053 = vcmp.lt.s32.totalorder %v893, 0
      %vm1054 = vcmp.lt.s32.totalorder %v900, 0
      %vm1055 = vcmp.lt.s32.totalorder %v907, 0
      %vm1056 = vcmp.lt.s32.totalorder %v914, 0
      %vm1057 = vcmp.lt.s32.totalorder %v921, 0
      %vm1058 = vcmp.lt.s32.totalorder %v928, 0
      %vm1059 = vcmp.lt.s32.totalorder %v935, 0
      %vm1060 = vcmp.lt.s32.totalorder %v942, 0
      %vm1061 = vcmp.lt.s32.totalorder %v949, 0
      %vm1062 = vcmp.lt.s32.totalorder %v956, 0
      %vm1063 = vcmp.lt.s32.totalorder %v963, 0
      %vm1064 = vcmp.lt.s32.totalorder %v970, 0
      %vm1065 = vcmp.lt.s32.totalorder %v977, 0
      %vm1066 = vcmp.lt.s32.totalorder %v984, 0
      %vm1067 = vcmp.lt.s32.totalorder %v991, 0
      %vm1068 = vcmp.lt.s32.totalorder %v998, 0
      %vm1069 = vcmp.lt.s32.totalorder %v1005, 0
      %vm1070 = vmand %vm1038, %vm1006
      %vm1071 = vmand %vm1039, %vm1007
      %vm1072 = vmand %vm1040, %vm1008
      %vm1073 = vmand %vm1041, %vm1009
      %vm1074 = vmand %vm1042, %vm1010
      %vm1075 = vmand %vm1043, %vm1011
      %vm1076 = vmand %vm1044, %vm1012
      %vm1077 = vmand %vm1045, %vm1013
      %vm1078 = vmand %vm1046, %vm1014
      %vm1079 = vmand %vm1047, %vm1015
      %vm1080 = vmand %vm1048, %vm1016
      %vm1081 = vmand %vm1049, %vm1017
      %vm1082 = vmand %vm1050, %vm1018
      %vm1083 = vmand %vm1051, %vm1019
      %vm1084 = vmand %vm1052, %vm1020
      %vm1085 = vmand %vm1053, %vm1021
      %vm1086 = vmand %vm1054, %vm1022
      %vm1087 = vmand %vm1055, %vm1023
      %vm1088 = vmand %vm1056, %vm1024
      %vm1089 = vmand %vm1057, %vm1025
      %vm1090 = vmand %vm1058, %vm1026
      %vm1091 = vmand %vm1059, %vm1027
      %vm1092 = vmand %vm1060, %vm1028
      %vm1093 = vmand %vm1061, %vm1029
      %vm1094 = vmand %vm1062, %vm1030
      %vm1095 = vmand %vm1063, %vm1031
      %vm1096 = vmand %vm1064, %vm1032
      %vm1097 = vmand %vm1065, %vm1033
      %vm1098 = vmand %vm1066, %vm1034
      %vm1099 = vmand %vm1067, %vm1035
      %vm1100 = vmand %vm1068, %vm1036
      %vm1101 = vmand %vm1069, %vm1037
      %v1102 = vadd.s32 %v788, 16
      %v1103 = vadd.s32 %v795, 16
      %v1104 = vadd.s32 %v802, 16
      %v1105 = vadd.s32 %v809, 16
      %v1106 = vadd.s32 %v816, 16
      %v1107 = vadd.s32 %v823, 16
      %v1108 = vadd.s32 %v830, 16
      %v1109 = vadd.s32 %v837, 16
      %v1110 = vadd.s32 %v844, 16
      %v1111 = vadd.s32 %v851, 16
      %v1112 = vadd.s32 %v858, 16
      %v1113 = vadd.s32 %v865, 16
      %v1114 = vadd.s32 %v872, 16
      %v1115 = vadd.s32 %v879, 16
      %v1116 = vadd.s32 %v886, 16
      %v1117 = vadd.s32 %v893, 16
      %v1118 = vadd.s32 %v900, 16
      %v1119 = vadd.s32 %v907, 16
      %v1120 = vadd.s32 %v914, 16
      %v1121 = vadd.s32 %v921, 16
      %v1122 = vadd.s32 %v928, 16
      %v1123 = vadd.s32 %v935, 16
      %v1124 = vadd.s32 %v942, 16
      %v1125 = vadd.s32 %v949, 16
      %v1126 = vadd.s32 %v956, 16
      %v1127 = vadd.s32 %v963, 16
      %v1128 = vadd.s32 %v970, 16
      %v1129 = vadd.s32 %v977, 16
      %v1130 = vadd.s32 %v984, 16
      %v1131 = vadd.s32 %v991, 16
      %v1132 = vadd.s32 %v998, 16
      %v1133 = vadd.s32 %v1005, 16
      %v1134 = vsel %vm1070, %v1102, %v788
      %v1135 = vsel %vm1071, %v1103, %v795
      %v1136 = vsel %vm1072, %v1104, %v802
      %v1137 = vsel %vm1073, %v1105, %v809
      %v1138 = vsel %vm1074, %v1106, %v816
      %v1139 = vsel %vm1075, %v1107, %v823
      %v1140 = vsel %vm1076, %v1108, %v830
      %v1141 = vsel %vm1077, %v1109, %v837
      %v1142 = vsel %vm1078, %v1110, %v844
      %v1143 = vsel %vm1079, %v1111, %v851
      %v1144 = vsel %vm1080, %v1112, %v858
      %v1145 = vsel %vm1081, %v1113, %v865
      %v1146 = vsel %vm1082, %v1114, %v872
      %v1147 = vsel %vm1083, %v1115, %v879
      %v1148 = vsel %vm1084, %v1116, %v886
      %v1149 = vsel %vm1085, %v1117, %v893
      %v1150 = vsel %vm1086, %v1118, %v900
      %v1151 = vsel %vm1087, %v1119, %v907
      %v1152 = vsel %vm1088, %v1120, %v914
      %v1153 = vsel %vm1089, %v1121, %v921
      %v1154 = vsel %vm1090, %v1122, %v928
      %v1155 = vsel %vm1091, %v1123, %v935
      %v1156 = vsel %vm1092, %v1124, %v942
      %v1157 = vsel %vm1093, %v1125, %v949
      %v1158 = vsel %vm1094, %v1126, %v956
      %v1159 = vsel %vm1095, %v1127, %v963
      %v1160 = vsel %vm1096, %v1128, %v970
      %v1161 = vsel %vm1097, %v1129, %v977
      %v1162 = vsel %vm1098, %v1130, %v984
      %v1163 = vsel %vm1099, %v1131, %v991
      %v1164 = vsel %vm1100, %v1132, %v998
      %v1165 = vsel %vm1101, %v1133, %v1005
      %vm1166 = vcmp.ne.s32.totalorder %v1134, 0
      %vm1167 = vcmp.ne.s32.totalorder %v1135, 0
      %vm1168 = vcmp.ne.s32.totalorder %v1136, 0
      %vm1169 = vcmp.ne.s32.totalorder %v1137, 0
      %vm1170 = vcmp.ne.s32.totalorder %v1138, 0
      %vm1171 = vcmp.ne.s32.totalorder %v1139, 0
      %vm1172 = vcmp.ne.s32.totalorder %v1140, 0
      %vm1173 = vcmp.ne.s32.totalorder %v1141, 0
      %vm1174 = vcmp.ne.s32.totalorder %v1142, 0
      %vm1175 = vcmp.ne.s32.totalorder %v1143, 0
      %vm1176 = vcmp.ne.s32.totalorder %v1144, 0
      %vm1177 = vcmp.ne.s32.totalorder %v1145, 0
      %vm1178 = vcmp.ne.s32.totalorder %v1146, 0
      %vm1179 = vcmp.ne.s32.totalorder %v1147, 0
      %vm1180 = vcmp.ne.s32.totalorder %v1148, 0
      %vm1181 = vcmp.ne.s32.totalorder %v1149, 0
      %vm1182 = vcmp.ne.s32.totalorder %v1150, 0
      %vm1183 = vcmp.ne.s32.totalorder %v1151, 0
      %vm1184 = vcmp.ne.s32.totalorder %v1152, 0
      %vm1185 = vcmp.ne.s32.totalorder %v1153, 0
      %vm1186 = vcmp.ne.s32.totalorder %v1154, 0
      %vm1187 = vcmp.ne.s32.totalorder %v1155, 0
      %vm1188 = vcmp.ne.s32.totalorder %v1156, 0
      %vm1189 = vcmp.ne.s32.totalorder %v1157, 0
      %vm1190 = vcmp.ne.s32.totalorder %v1158, 0
      %vm1191 = vcmp.ne.s32.totalorder %v1159, 0
      %vm1192 = vcmp.ne.s32.totalorder %v1160, 0
      %vm1193 = vcmp.ne.s32.totalorder %v1161, 0
      %vm1194 = vcmp.ne.s32.totalorder %v1162, 0
      %vm1195 = vcmp.ne.s32.totalorder %v1163, 0
      %vm1196 = vcmp.ne.s32.totalorder %v1164, 0
      %vm1197 = vcmp.ne.s32.totalorder %v1165, 0
      %vm1198 = vcmp.ne.s32.totalorder %v1134, 15
      %vm1199 = vcmp.ne.s32.totalorder %v1135, 15
      %vm1200 = vcmp.ne.s32.totalorder %v1136, 15
      %vm1201 = vcmp.ne.s32.totalorder %v1137, 15
      %vm1202 = vcmp.ne.s32.totalorder %v1138, 15
      %vm1203 = vcmp.ne.s32.totalorder %v1139, 15
      %vm1204 = vcmp.ne.s32.totalorder %v1140, 15
      %vm1205 = vcmp.ne.s32.totalorder %v1141, 15
      %vm1206 = vcmp.ne.s32.totalorder %v1142, 15
      %vm1207 = vcmp.ne.s32.totalorder %v1143, 15
      %vm1208 = vcmp.ne.s32.totalorder %v1144, 15
      %vm1209 = vcmp.ne.s32.totalorder %v1145, 15
      %vm1210 = vcmp.ne.s32.totalorder %v1146, 15
      %vm1211 = vcmp.ne.s32.totalorder %v1147, 15
      %vm1212 = vcmp.ne.s32.totalorder %v1148, 15
      %vm1213 = vcmp.ne.s32.totalorder %v1149, 15
      %vm1214 = vcmp.ne.s32.totalorder %v1150, 15
      %vm1215 = vcmp.ne.s32.totalorder %v1151, 15
      %vm1216 = vcmp.ne.s32.totalorder %v1152, 15
      %vm1217 = vcmp.ne.s32.totalorder %v1153, 15
      %vm1218 = vcmp.ne.s32.totalorder %v1154, 15
      %vm1219 = vcmp.ne.s32.totalorder %v1155, 15
      %vm1220 = vcmp.ne.s32.totalorder %v1156, 15
      %vm1221 = vcmp.ne.s32.totalorder %v1157, 15
      %vm1222 = vcmp.ne.s32.totalorder %v1158, 15
      %vm1223 = vcmp.ne.s32.totalorder %v1159, 15
      %vm1224 = vcmp.ne.s32.totalorder %v1160, 15
      %vm1225 = vcmp.ne.s32.totalorder %v1161, 15
      %vm1226 = vcmp.ne.s32.totalorder %v1162, 15
      %vm1227 = vcmp.ne.s32.totalorder %v1163, 15
      %vm1228 = vcmp.ne.s32.totalorder %v1164, 15
      %vm1229 = vcmp.ne.s32.totalorder %v1165, 15
      %v1230 = vpack.c.bf16 %v714, %v713
      %v1231 = vpack.c.bf16 %v716, %v715
      %v1232 = vpack.c.bf16 %v718, %v717
      %v1233 = vpack.c.bf16 %v720, %v719
      %v1234 = vpack.c.bf16 %v722, %v721
      %v1235 = vpack.c.bf16 %v724, %v723
      %v1236 = vpack.c.bf16 %v726, %v725
      %v1237 = vpack.c.bf16 %v728, %v727
      %v1238 = vpack.c.bf16 %v730, %v729
      %v1239 = vpack.c.bf16 %v732, %v731
      %v1240 = vpack.c.bf16 %v734, %v733
      %v1241 = vpack.c.bf16 %v736, %v735
      %v1242 = vpack.c.bf16 %v738, %v737
      %v1243 = vpack.c.bf16 %v740, %v739
      %v1244 = vpack.c.bf16 %v742, %v741
      %v1245 = vpack.c.bf16 %v744, %v743
      %1246 = vst [vmem:[#allocation2 + $0x10] sm:$0xff] %v1230
      %1247 = vst [vmem:[#allocation2 + $0x18] sm:$0xff] %v1231
      %1248 = vst [vmem:[#allocation2 + $0x20] sm:$0xff] %v1232
      %1249 = vst [vmem:[#allocation2 + $0x28] sm:$0xff] %v1233
      %1250 = vst [vmem:[#allocation2 + $0x30] sm:$0xff] %v1234
      %1251 = vst [vmem:[#allocation2 + $0x38] sm:$0xff] %v1235
      %1252 = vst [vmem:[#allocation2 + $0x40] sm:$0xff] %v1236
      %1253 = vst [vmem:[#allocation2 + $0x48] sm:$0xff] %v1237
      %1254 = vst [vmem:[#allocation2 + $0x50] sm:$0xff] %v1238
      %1255 = vst [vmem:[#allocation2 + $0x58] sm:$0xff] %v1239
      %1256 = vst [vmem:[#allocation2 + $0x60] sm:$0xff] %v1240
      %1257 = vst [vmem:[#allocation2 + $0x68] sm:$0xff] %v1241
      %1258 = vst [vmem:[#allocation2 + $0x70] sm:$0xff] %v1242
      %1259 = vst [vmem:[#allocation2 + $0x78] sm:$0xff] %v1243
      %1260 = vst [vmem:[#allocation2 + $0x80] sm:$0xff] %v1244
      %1261 = vst [vmem:[#allocation2 + $0x88] sm:$0xff] %v1245
      %v1262 = vld [vmem:[#allocation2] sm:$0x80]
      %v1263 = vld [vmem:[#allocation2 + $0x8] sm:$0xff]
      %v1264 = vld [vmem:[#allocation2 + $0x10] sm:$0xff]
      %v1265 = vld [vmem:[#allocation2 + $0x18] sm:$0xff]
      %v1266 = vld [vmem:[#allocation2 + $0x20] sm:$0xff]
      %v1267 = vld [vmem:[#allocation2 + $0x28] sm:$0xff]
      %v1268 = vld [vmem:[#allocation2 + $0x30] sm:$0xff]
      %v1269 = vld [vmem:[#allocation2 + $0x38] sm:$0xff]
      %v1270 = vld [vmem:[#allocation2 + $0x40] sm:$0xff]
      %v1271 = vld [vmem:[#allocation2 + $0x48] sm:$0xff]
      %v1272 = vld [vmem:[#allocation2 + $0x50] sm:$0xff]
      %v1273 = vld [vmem:[#allocation2 + $0x58] sm:$0xff]
      %v1274 = vld [vmem:[#allocation2 + $0x60] sm:$0xff]
      %v1275 = vld [vmem:[#allocation2 + $0x68] sm:$0xff]
      %v1276 = vld [vmem:[#allocation2 + $0x70] sm:$0xff]
      %v1277 = vld [vmem:[#allocation2 + $0x78] sm:$0xff]
      %v1278 = vld [vmem:[#allocation2 + $0x80] sm:$0xff]
      %vm1279 = vmpackc.low %vm1166, %vm1166
      %vm1280 = vmpackc.low %vm1167, %vm1167
      %vm1281 = vmpackc.low %vm1168, %vm1168
      %vm1282 = vmpackc.low %vm1169, %vm1169
      %vm1283 = vmpackc.low %vm1170, %vm1170
      %vm1284 = vmpackc.low %vm1171, %vm1171
      %vm1285 = vmpackc.low %vm1172, %vm1172
      %vm1286 = vmpackc.low %vm1173, %vm1173
      %vm1287 = vmpackc.low %vm1174, %vm1174
      %vm1288 = vmpackc.low %vm1175, %vm1175
      %vm1289 = vmpackc.low %vm1176, %vm1176
      %vm1290 = vmpackc.low %vm1177, %vm1177
      %vm1291 = vmpackc.low %vm1178, %vm1178
      %vm1292 = vmpackc.low %vm1179, %vm1179
      %vm1293 = vmpackc.low %vm1180, %vm1180
      %vm1294 = vmpackc.low %vm1181, %vm1181
      %vm1295 = vmpackc.low %vm1182, %vm1182
      %vm1296 = vmpackc.low %vm1183, %vm1183
      %vm1297 = vmpackc.low %vm1184, %vm1184
      %vm1298 = vmpackc.low %vm1185, %vm1185
      %vm1299 = vmpackc.low %vm1186, %vm1186
      %vm1300 = vmpackc.low %vm1187, %vm1187
      %vm1301 = vmpackc.low %vm1188, %vm1188
      %vm1302 = vmpackc.low %vm1189, %vm1189
      %vm1303 = vmpackc.low %vm1190, %vm1190
      %vm1304 = vmpackc.low %vm1191, %vm1191
      %vm1305 = vmpackc.low %vm1192, %vm1192
      %vm1306 = vmpackc.low %vm1193, %vm1193
      %vm1307 = vmpackc.low %vm1194, %vm1194
      %vm1308 = vmpackc.low %vm1195, %vm1195
      %vm1309 = vmpackc.low %vm1196, %vm1196
      %vm1310 = vmpackc.low %vm1197, %vm1197
      %v1311 = vsel %vm1279, 65537, 0
      %v1312 = vsel %vm1280, 65537, 0
      %v1313 = vsel %vm1281, 65537, 0
      %v1314 = vsel %vm1282, 65537, 0
      %v1315 = vsel %vm1283, 65537, 0
      %v1316 = vsel %vm1284, 65537, 0
      %v1317 = vsel %vm1285, 65537, 0
      %v1318 = vsel %vm1286, 65537, 0
      %v1319 = vsel %vm1287, 65537, 0
      %v1320 = vsel %vm1288, 65537, 0
      %v1321 = vsel %vm1289, 65537, 0
      %v1322 = vsel %vm1290, 65537, 0
      %v1323 = vsel %vm1291, 65537, 0
      %v1324 = vsel %vm1292, 65537, 0
      %v1325 = vsel %vm1293, 65537, 0
      %v1326 = vsel %vm1294, 65537, 0
      %v1327 = vsel %vm1295, 65537, 0
      %v1328 = vsel %vm1296, 65537, 0
      %v1329 = vsel %vm1297, 65537, 0
      %v1330 = vsel %vm1298, 65537, 0
      %v1331 = vsel %vm1299, 65537, 0
      %v1332 = vsel %vm1300, 65537, 0
      %v1333 = vsel %vm1301, 65537, 0
      %v1334 = vsel %vm1302, 65537, 0
      %v1335 = vsel %vm1303, 65537, 0
      %v1336 = vsel %vm1304, 65537, 0
      %v1337 = vsel %vm1305, 65537, 0
      %v1338 = vsel %vm1306, 65537, 0
      %v1339 = vsel %vm1307, 65537, 0
      %v1340 = vsel %vm1308, 65537, 0
      %v1341 = vsel %vm1309, 65537, 0
      %v1342 = vsel %vm1310, 65537, 0
      %v1343 = vunpack.c.l.b16 %v1311
      %v1344 = vunpack.c.l.b16 %v1312
      %v1345 = vunpack.c.l.b16 %v1313
      %v1346 = vunpack.c.l.b16 %v1314
      %v1347 = vunpack.c.l.b16 %v1315
      %v1348 = vunpack.c.l.b16 %v1316
      %v1349 = vunpack.c.l.b16 %v1317
      %v1350 = vunpack.c.l.b16 %v1318
      %v1351 = vunpack.c.l.b16 %v1319
      %v1352 = vunpack.c.l.b16 %v1320
      %v1353 = vunpack.c.l.b16 %v1321
      %v1354 = vunpack.c.l.b16 %v1322
      %v1355 = vunpack.c.l.b16 %v1323
      %v1356 = vunpack.c.l.b16 %v1324
      %v1357 = vunpack.c.l.b16 %v1325
      %v1358 = vunpack.c.l.b16 %v1326
      %v1359 = vunpack.c.l.b16 %v1327
      %v1360 = vunpack.c.l.b16 %v1328
      %v1361 = vunpack.c.l.b16 %v1329
      %v1362 = vunpack.c.l.b16 %v1330
      %v1363 = vunpack.c.l.b16 %v1331
      %v1364 = vunpack.c.l.b16 %v1332
      %v1365 = vunpack.c.l.b16 %v1333
      %v1366 = vunpack.c.l.b16 %v1334
      %v1367 = vunpack.c.l.b16 %v1335
      %v1368 = vunpack.c.l.b16 %v1336
      %v1369 = vunpack.c.l.b16 %v1337
      %v1370 = vunpack.c.l.b16 %v1338
      %v1371 = vunpack.c.l.b16 %v1339
      %v1372 = vunpack.c.l.b16 %v1340
      %v1373 = vunpack.c.l.b16 %v1341
      %v1374 = vunpack.c.l.b16 %v1342
      %v1375 = vpack.c.b16 %v1344, %v1343
      %v1376 = vpack.c.b16 %v1346, %v1345
      %v1377 = vpack.c.b16 %v1348, %v1347
      %v1378 = vpack.c.b16 %v1350, %v1349
      %v1379 = vpack.c.b16 %v1352, %v1351
      %v1380 = vpack.c.b16 %v1354, %v1353
      %v1381 = vpack.c.b16 %v1356, %v1355
      %v1382 = vpack.c.b16 %v1358, %v1357
      %v1383 = vpack.c.b16 %v1360, %v1359
      %v1384 = vpack.c.b16 %v1362, %v1361
      %v1385 = vpack.c.b16 %v1364, %v1363
      %v1386 = vpack.c.b16 %v1366, %v1365
      %v1387 = vpack.c.b16 %v1368, %v1367
      %v1388 = vpack.c.b16 %v1370, %v1369
      %v1389 = vpack.c.b16 %v1372, %v1371
      %v1390 = vpack.c.b16 %v1374, %v1373
      %vm1391 = vsmask.f32 7424
      %v1393 = vshll.u32 %v1375, 16
      %v1395 = vrot.slane %v1393, 1
      %v1396 = vshrl.u32 %v1375, 16
      %v1398 = vor.u32 %v1396, %v1395
      %v1400 = vshll.u32 %v1376, 16
      %v1402 = vrot.slane %v1400, 1
      %v1403 = vsel %vm1391, %v1398, %v1402
      %v1404 = vshrl.u32 %v1376, 16
      %v1406 = vor.u32 %v1404, %v1402
      %v1408 = vshll.u32 %v1377, 16
      %v1410 = vrot.slane %v1408, 1
      %v1411 = vsel %vm1391, %v1406, %v1410
      %v1412 = vshrl.u32 %v1377, 16
      %v1414 = vor.u32 %v1412, %v1410
      %v1416 = vshll.u32 %v1378, 16
      %v1418 = vrot.slane %v1416, 1
      %v1419 = vsel %vm1391, %v1414, %v1418
      %v1420 = vshrl.u32 %v1378, 16
      %v1422 = vor.u32 %v1420, %v1418
      %v1424 = vshll.u32 %v1379, 16
      %v1426 = vrot.slane %v1424, 1
      %v1427 = vsel %vm1391, %v1422, %v1426
      %v1428 = vshrl.u32 %v1379, 16
      %v1430 = vor.u32 %v1428, %v1426
      %v1432 = vshll.u32 %v1380, 16
      %v1434 = vrot.slane %v1432, 1
      %v1435 = vsel %vm1391, %v1430, %v1434
      %v1436 = vshrl.u32 %v1380, 16
      %v1438 = vor.u32 %v1436, %v1434
      %v1440 = vshll.u32 %v1381, 16
      %v1442 = vrot.slane %v1440, 1
      %v1443 = vsel %vm1391, %v1438, %v1442
      %v1444 = vshrl.u32 %v1381, 16
      %v1446 = vor.u32 %v1444, %v1442
      %v1448 = vshll.u32 %v1382, 16
      %v1450 = vrot.slane %v1448, 1
      %v1451 = vsel %vm1391, %v1446, %v1450
      %v1452 = vshrl.u32 %v1382, 16
      %v1454 = vor.u32 %v1452, %v1450
      %v1456 = vshll.u32 %v1383, 16
      %v1458 = vrot.slane %v1456, 1
      %v1459 = vsel %vm1391, %v1454, %v1458
      %v1460 = vshrl.u32 %v1383, 16
      %v1462 = vor.u32 %v1460, %v1458
      %v1464 = vshll.u32 %v1384, 16
      %v1466 = vrot.slane %v1464, 1
      %v1467 = vsel %vm1391, %v1462, %v1466
      %v1468 = vshrl.u32 %v1384, 16
      %v1470 = vor.u32 %v1468, %v1466
      %v1472 = vshll.u32 %v1385, 16
      %v1474 = vrot.slane %v1472, 1
      %v1475 = vsel %vm1391, %v1470, %v1474
      %v1476 = vshrl.u32 %v1385, 16
      %v1478 = vor.u32 %v1476, %v1474
      %v1480 = vshll.u32 %v1386, 16
      %v1482 = vrot.slane %v1480, 1
      %v1483 = vsel %vm1391, %v1478, %v1482
      %v1484 = vshrl.u32 %v1386, 16
      %v1486 = vor.u32 %v1484, %v1482
      %v1488 = vshll.u32 %v1387, 16
      %v1490 = vrot.slane %v1488, 1
      %v1491 = vsel %vm1391, %v1486, %v1490
      %v1492 = vshrl.u32 %v1387, 16
      %v1494 = vor.u32 %v1492, %v1490
      %v1496 = vshll.u32 %v1388, 16
      %v1498 = vrot.slane %v1496, 1
      %v1499 = vsel %vm1391, %v1494, %v1498
      %v1500 = vshrl.u32 %v1388, 16
      %v1502 = vor.u32 %v1500, %v1498
      %v1504 = vshll.u32 %v1389, 16
      %v1506 = vrot.slane %v1504, 1
      %v1507 = vsel %vm1391, %v1502, %v1506
      %v1508 = vshrl.u32 %v1389, 16
      %v1510 = vor.u32 %v1508, %v1506
      %v1512 = vshll.u32 %v1390, 16
      %v1514 = vrot.slane %v1512, 1
      %v1515 = vsel %vm1391, %v1510, %v1514
      %v1516 = vshrl.u32 %v1390, 16
      %v1518 = vor.u32 %v1516, %v1514
      %vm1519 = vcmp.ne.s16.totalorder %v1395, 0
      %vm1520 = vcmp.ne.s16.totalorder %v1403, 0
      %vm1521 = vcmp.ne.s16.totalorder %v1411, 0
      %vm1522 = vcmp.ne.s16.totalorder %v1419, 0
      %vm1523 = vcmp.ne.s16.totalorder %v1427, 0
      %vm1524 = vcmp.ne.s16.totalorder %v1435, 0
      %vm1525 = vcmp.ne.s16.totalorder %v1443, 0
      %vm1526 = vcmp.ne.s16.totalorder %v1451, 0
      %vm1527 = vcmp.ne.s16.totalorder %v1459, 0
      %vm1528 = vcmp.ne.s16.totalorder %v1467, 0
      %vm1529 = vcmp.ne.s16.totalorder %v1475, 0
      %vm1530 = vcmp.ne.s16.totalorder %v1483, 0
      %vm1531 = vcmp.ne.s16.totalorder %v1491, 0
      %vm1532 = vcmp.ne.s16.totalorder %v1499, 0
      %vm1533 = vcmp.ne.s16.totalorder %v1507, 0
      %vm1534 = vcmp.ne.s16.totalorder %v1515, 0
      %vm1535 = vcmp.ne.s16.totalorder %v1518, 0
      %v1536 = vsel %vm1519, %v1262, 0
      %v1537 = vsel %vm1520, %v1263, 0
      %v1538 = vsel %vm1521, %v1264, 0
      %v1539 = vsel %vm1522, %v1265, 0
      %v1540 = vsel %vm1523, %v1266, 0
      %v1541 = vsel %vm1524, %v1267, 0
      %v1542 = vsel %vm1525, %v1268, 0
      %v1543 = vsel %vm1526, %v1269, 0
      %v1544 = vsel %vm1527, %v1270, 0
      %v1545 = vsel %vm1528, %v1271, 0
      %v1546 = vsel %vm1529, %v1272, 0
      %v1547 = vsel %vm1530, %v1273, 0
      %v1548 = vsel %vm1531, %v1274, 0
      %v1549 = vsel %vm1532, %v1275, 0
      %v1550 = vsel %vm1533, %v1276, 0
      %v1551 = vsel %vm1534, %v1277, 0
      %v1552 = vsel %vm1535, %v1278, 0
      %vm1553 = vsmask.f32 256
      %v1555 = vshrl.u32 %v1536, 16
      %v1557 = vrot.slane %v1555, 7
      %v1559 = vshrl.u32 %v1537, 16
      %v1561 = vrot.slane %v1559, 7
      %v1562 = vshll.u32 %v1537, 16
      %v1564 = vor.u32 %v1561, %v1562
      %v1565 = vsel %vm1553, %v1557, %v1564
      %v1567 = vshrl.u32 %v1538, 16
      %v1569 = vrot.slane %v1567, 7
      %v1570 = vshll.u32 %v1538, 16
      %v1572 = vor.u32 %v1569, %v1570
      %v1573 = vsel %vm1553, %v1561, %v1572
      %v1575 = vshrl.u32 %v1539, 16
      %v1577 = vrot.slane %v1575, 7
      %v1578 = vshll.u32 %v1539, 16
      %v1580 = vor.u32 %v1577, %v1578
      %v1581 = vsel %vm1553, %v1569, %v1580
      %v1583 = vshrl.u32 %v1540, 16
      %v1585 = vrot.slane %v1583, 7
      %v1586 = vshll.u32 %v1540, 16
      %v1588 = vor.u32 %v1585, %v1586
      %v1589 = vsel %vm1553, %v1577, %v1588
      %v1591 = vshrl.u32 %v1541, 16
      %v1593 = vrot.slane %v1591, 7
      %v1594 = vshll.u32 %v1541, 16
      %v1596 = vor.u32 %v1593, %v1594
      %v1597 = vsel %vm1553, %v1585, %v1596
      %v1599 = vshrl.u32 %v1542, 16
      %v1601 = vrot.slane %v1599, 7
      %v1602 = vshll.u32 %v1542, 16
      %v1604 = vor.u32 %v1601, %v1602
      %v1605 = vsel %vm1553, %v1593, %v1604
      %v1607 = vshrl.u32 %v1543, 16
      %v1609 = vrot.slane %v1607, 7
      %v1610 = vshll.u32 %v1543, 16
      %v1612 = vor.u32 %v1609, %v1610
      %v1613 = vsel %vm1553, %v1601, %v1612
      %v1615 = vshrl.u32 %v1544, 16
      %v1617 = vrot.slane %v1615, 7
      %v1618 = vshll.u32 %v1544, 16
      %v1620 = vor.u32 %v1617, %v1618
      %v1621 = vsel %vm1553, %v1609, %v1620
      %v1623 = vshrl.u32 %v1545, 16
      %v1625 = vrot.slane %v1623, 7
      %v1626 = vshll.u32 %v1545, 16
      %v1628 = vor.u32 %v1625, %v1626
      %v1629 = vsel %vm1553, %v1617, %v1628
      %v1631 = vshrl.u32 %v1546, 16
      %v1633 = vrot.slane %v1631, 7
      %v1634 = vshll.u32 %v1546, 16
      %v1636 = vor.u32 %v1633, %v1634
      %v1637 = vsel %vm1553, %v1625, %v1636
      %v1639 = vshrl.u32 %v1547, 16
      %v1641 = vrot.slane %v1639, 7
      %v1642 = vshll.u32 %v1547, 16
      %v1644 = vor.u32 %v1641, %v1642
      %v1645 = vsel %vm1553, %v1633, %v1644
      %v1647 = vshrl.u32 %v1548, 16
      %v1649 = vrot.slane %v1647, 7
      %v1650 = vshll.u32 %v1548, 16
      %v1652 = vor.u32 %v1649, %v1650
      %v1653 = vsel %vm1553, %v1641, %v1652
      %v1655 = vshrl.u32 %v1549, 16
      %v1657 = vrot.slane %v1655, 7
      %v1658 = vshll.u32 %v1549, 16
      %v1660 = vor.u32 %v1657, %v1658
      %v1661 = vsel %vm1553, %v1649, %v1660
      %v1663 = vshrl.u32 %v1550, 16
      %v1665 = vrot.slane %v1663, 7
      %v1666 = vshll.u32 %v1550, 16
      %v1668 = vor.u32 %v1665, %v1666
      %v1669 = vsel %vm1553, %v1657, %v1668
      %v1671 = vshrl.u32 %v1551, 16
      %v1673 = vrot.slane %v1671, 7
      %v1674 = vshll.u32 %v1551, 16
      %v1676 = vor.u32 %v1673, %v1674
      %v1677 = vsel %vm1553, %v1665, %v1676
      %v1679 = vshrl.u32 %v1552, 16
      %v1681 = vrot.slane %v1679, 7
      %v1682 = vshll.u32 %v1552, 16
      %v1684 = vor.u32 %v1681, %v1682
      %v1685 = vsel %vm1553, %v1673, %v1684
      %1702 = vst [vmem:[#allocation3] sm:$0xff] %v1565
      %1703 = vst [vmem:[#allocation3 + $0x48] sm:$0xff] %v1573
      %1704 = vst [vmem:[#allocation3 + $0x90] sm:$0xff] %v1581
      %1705 = vst [vmem:[#allocation3 + $0xd8] sm:$0xff] %v1589
      %1706 = vst [vmem:[#allocation3 + $0x120] sm:$0xff] %v1597
      %1707 = vst [vmem:[#allocation3 + $0x168] sm:$0xff] %v1605
      %1708 = vst [vmem:[#allocation3 + $0x1b0] sm:$0xff] %v1613
      %1709 = vst [vmem:[#allocation3 + $0x1f8] sm:$0xff] %v1621
      %1710 = vst [vmem:[#allocation3 + $0x240] sm:$0xff] %v1629
      %1711 = vst [vmem:[#allocation3 + $0x288] sm:$0xff] %v1637
      %1712 = vst [vmem:[#allocation3 + $0x2d0] sm:$0xff] %v1645
      %1713 = vst [vmem:[#allocation3 + $0x318] sm:$0xff] %v1653
      %1714 = vst [vmem:[#allocation3 + $0x360] sm:$0xff] %v1661
      %1715 = vst [vmem:[#allocation3 + $0x3a8] sm:$0xff] %v1669
      %1716 = vst [vmem:[#allocation3 + $0x3f0] sm:$0xff] %v1677
      %1717 = vst [vmem:[#allocation3 + $0x438] sm:$0xff] %v1685
      %v1718 = vld [vmem:[#allocation2 + $0x8] sm:$0xff]
      %v1719 = vld [vmem:[#allocation2 + $0x10] sm:$0xff]
      %v1720 = vld [vmem:[#allocation2 + $0x18] sm:$0xff]
      %v1721 = vld [vmem:[#allocation2 + $0x20] sm:$0xff]
      %v1722 = vld [vmem:[#allocation2 + $0x28] sm:$0xff]
      %v1723 = vld [vmem:[#allocation2 + $0x30] sm:$0xff]
      %v1724 = vld [vmem:[#allocation2 + $0x38] sm:$0xff]
      %v1725 = vld [vmem:[#allocation2 + $0x40] sm:$0xff]
      %v1726 = vld [vmem:[#allocation2 + $0x48] sm:$0xff]
      %v1727 = vld [vmem:[#allocation2 + $0x50] sm:$0xff]
      %v1728 = vld [vmem:[#allocation2 + $0x58] sm:$0xff]
      %v1729 = vld [vmem:[#allocation2 + $0x60] sm:$0xff]
      %v1730 = vld [vmem:[#allocation2 + $0x68] sm:$0xff]
      %v1731 = vld [vmem:[#allocation2 + $0x70] sm:$0xff]
      %v1732 = vld [vmem:[#allocation2 + $0x78] sm:$0xff]
      %v1733 = vld [vmem:[#allocation2 + $0x80] sm:$0xff]
      %1734 = vst [vmem:[#allocation3 + $0x8] sm:$0xff] %v1718
      %1735 = vst [vmem:[#allocation3 + $0x50] sm:$0xff] %v1719
      %1736 = vst [vmem:[#allocation3 + $0x98] sm:$0xff] %v1720
      %1737 = vst [vmem:[#allocation3 + $0xe0] sm:$0xff] %v1721
      %1738 = vst [vmem:[#allocation3 + $0x128] sm:$0xff] %v1722
      %1739 = vst [vmem:[#allocation3 + $0x170] sm:$0xff] %v1723
      %1740 = vst [vmem:[#allocation3 + $0x1b8] sm:$0xff] %v1724
      %1741 = vst [vmem:[#allocation3 + $0x200] sm:$0xff] %v1725
      %1742 = vst [vmem:[#allocation3 + $0x248] sm:$0xff] %v1726
      %1743 = vst [vmem:[#allocation3 + $0x290] sm:$0xff] %v1727
      %1744 = vst [vmem:[#allocation3 + $0x2d8] sm:$0xff] %v1728
      %1745 = vst [vmem:[#allocation3 + $0x320] sm:$0xff] %v1729
      %1746 = vst [vmem:[#allocation3 + $0x368] sm:$0xff] %v1730
      %1747 = vst [vmem:[#allocation3 + $0x3b0] sm:$0xff] %v1731
      %1748 = vst [vmem:[#allocation3 + $0x3f8] sm:$0xff] %v1732
      %1749 = vst [vmem:[#allocation3 + $0x440] sm:$0xff] %v1733
      %v1750 = vld [vmem:[#allocation2 + $0x8] sm:$0xff]
      %v1751 = vld [vmem:[#allocation2 + $0x10] sm:$0xff]
      %v1752 = vld [vmem:[#allocation2 + $0x18] sm:$0xff]
      %v1753 = vld [vmem:[#allocation2 + $0x20] sm:$0xff]
      %v1754 = vld [vmem:[#allocation2 + $0x28] sm:$0xff]
      %v1755 = vld [vmem:[#allocation2 + $0x30] sm:$0xff]
      %v1756 = vld [vmem:[#allocation2 + $0x38] sm:$0xff]
      %v1757 = vld [vmem:[#allocation2 + $0x40] sm:$0xff]
      %v1758 = vld [vmem:[#allocation2 + $0x48] sm:$0xff]
      %v1759 = vld [vmem:[#allocation2 + $0x50] sm:$0xff]
      %v1760 = vld [vmem:[#allocation2 + $0x58] sm:$0xff]
      %v1761 = vld [vmem:[#allocation2 + $0x60] sm:$0xff]
      %v1762 = vld [vmem:[#allocation2 + $0x68] sm:$0xff]
      %v1763 = vld [vmem:[#allocation2 + $0x70] sm:$0xff]
      %v1764 = vld [vmem:[#allocation2 + $0x78] sm:$0xff]
      %v1765 = vld [vmem:[#allocation2 + $0x80] sm:$0xff]
      %v1766 = vld [vmem:[#allocation2 + $0x88] sm:$0x1]
      %vm1767 = vmpackc.low %vm1198, %vm1198
      %vm1768 = vmpackc.low %vm1199, %vm1199
      %vm1769 = vmpackc.low %vm1200, %vm1200
      %vm1770 = vmpackc.low %vm1201, %vm1201
      %vm1771 = vmpackc.low %vm1202, %vm1202
      %vm1772 = vmpackc.low %vm1203, %vm1203
      %vm1773 = vmpackc.low %vm1204, %vm1204
      %vm1774 = vmpackc.low %vm1205, %vm1205
      %vm1775 = vmpackc.low %vm1206, %vm1206
      %vm1776 = vmpackc.low %vm1207, %vm1207
      %vm1777 = vmpackc.low %vm1208, %vm1208
      %vm1778 = vmpackc.low %vm1209, %vm1209
      %vm1779 = vmpackc.low %vm1210, %vm1210
      %vm1780 = vmpackc.low %vm1211, %vm1211
      %vm1781 = vmpackc.low %vm1212, %vm1212
      %vm1782 = vmpackc.low %vm1213, %vm1213
      %vm1783 = vmpackc.low %vm1214, %vm1214
      %vm1784 = vmpackc.low %vm1215, %vm1215
      %vm1785 = vmpackc.low %vm1216, %vm1216
      %vm1786 = vmpackc.low %vm1217, %vm1217
      %vm1787 = vmpackc.low %vm1218, %vm1218
      %vm1788 = vmpackc.low %vm1219, %vm1219
      %vm1789 = vmpackc.low %vm1220, %vm1220
      %vm1790 = vmpackc.low %vm1221, %vm1221
      %vm1791 = vmpackc.low %vm1222, %vm1222
      %vm1792 = vmpackc.low %vm1223, %vm1223
      %vm1793 = vmpackc.low %vm1224, %vm1224
      %vm1794 = vmpackc.low %vm1225, %vm1225
      %vm1795 = vmpackc.low %vm1226, %vm1226
      %vm1796 = vmpackc.low %vm1227, %vm1227
      %vm1797 = vmpackc.low %vm1228, %vm1228
      %vm1798 = vmpackc.low %vm1229, %vm1229
      %v1799 = vsel %vm1767, 65537, 0
      %v1800 = vsel %vm1768, 65537, 0
      %v1801 = vsel %vm1769, 65537, 0
      %v1802 = vsel %vm1770, 65537, 0
      %v1803 = vsel %vm1771, 65537, 0
      %v1804 = vsel %vm1772, 65537, 0
      %v1805 = vsel %vm1773, 65537, 0
      %v1806 = vsel %vm1774, 65537, 0
      %v1807 = vsel %vm1775, 65537, 0
      %v1808 = vsel %vm1776, 65537, 0
      %v1809 = vsel %vm1777, 65537, 0
      %v1810 = vsel %vm1778, 65537, 0
      %v1811 = vsel %vm1779, 65537, 0
      %v1812 = vsel %vm1780, 65537, 0
      %v1813 = vsel %vm1781, 65537, 0
      %v1814 = vsel %vm1782, 65537, 0
      %v1815 = vsel %vm1783, 65537, 0
      %v1816 = vsel %vm1784, 65537, 0
      %v1817 = vsel %vm1785, 65537, 0
      %v1818 = vsel %vm1786, 65537, 0
      %v1819 = vsel %vm1787, 65537, 0
      %v1820 = vsel %vm1788, 65537, 0
      %v1821 = vsel %vm1789, 65537, 0
      %v1822 = vsel %vm1790, 65537, 0
      %v1823 = vsel %vm1791, 65537, 0
      %v1824 = vsel %vm1792, 65537, 0
      %v1825 = vsel %vm1793, 65537, 0
      %v1826 = vsel %vm1794, 65537, 0
      %v1827 = vsel %vm1795, 65537, 0
      %v1828 = vsel %vm1796, 65537, 0
      %v1829 = vsel %vm1797, 65537, 0
      %v1830 = vsel %vm1798, 65537, 0
      %v1831 = vunpack.c.l.b16 %v1799
      %v1832 = vunpack.c.l.b16 %v1800
      %v1833 = vunpack.c.l.b16 %v1801
      %v1834 = vunpack.c.l.b16 %v1802
      %v1835 = vunpack.c.l.b16 %v1803
      %v1836 = vunpack.c.l.b16 %v1804
      %v1837 = vunpack.c.l.b16 %v1805
      %v1838 = vunpack.c.l.b16 %v1806
      %v1839 = vunpack.c.l.b16 %v1807
      %v1840 = vunpack.c.l.b16 %v1808
      %v1841 = vunpack.c.l.b16 %v1809
      %v1842 = vunpack.c.l.b16 %v1810
      %v1843 = vunpack.c.l.b16 %v1811
      %v1844 = vunpack.c.l.b16 %v1812
      %v1845 = vunpack.c.l.b16 %v1813
      %v1846 = vunpack.c.l.b16 %v1814
      %v1847 = vunpack.c.l.b16 %v1815
      %v1848 = vunpack.c.l.b16 %v1816
      %v1849 = vunpack.c.l.b16 %v1817
      %v1850 = vunpack.c.l.b16 %v1818
      %v1851 = vunpack.c.l.b16 %v1819
      %v1852 = vunpack.c.l.b16 %v1820
      %v1853 = vunpack.c.l.b16 %v1821
      %v1854 = vunpack.c.l.b16 %v1822
      %v1855 = vunpack.c.l.b16 %v1823
      %v1856 = vunpack.c.l.b16 %v1824
      %v1857 = vunpack.c.l.b16 %v1825
      %v1858 = vunpack.c.l.b16 %v1826
      %v1859 = vunpack.c.l.b16 %v1827
      %v1860 = vunpack.c.l.b16 %v1828
      %v1861 = vunpack.c.l.b16 %v1829
      %v1862 = vunpack.c.l.b16 %v1830
      %v1863 = vpack.c.b16 %v1832, %v1831
      %v1864 = vpack.c.b16 %v1834, %v1833
      %v1865 = vpack.c.b16 %v1836, %v1835
      %v1866 = vpack.c.b16 %v1838, %v1837
      %v1867 = vpack.c.b16 %v1840, %v1839
      %v1868 = vpack.c.b16 %v1842, %v1841
      %v1869 = vpack.c.b16 %v1844, %v1843
      %v1870 = vpack.c.b16 %v1846, %v1845
      %v1871 = vpack.c.b16 %v1848, %v1847
      %v1872 = vpack.c.b16 %v1850, %v1849
      %v1873 = vpack.c.b16 %v1852, %v1851
      %v1874 = vpack.c.b16 %v1854, %v1853
      %v1875 = vpack.c.b16 %v1856, %v1855
      %v1876 = vpack.c.b16 %v1858, %v1857
      %v1877 = vpack.c.b16 %v1860, %v1859
      %v1878 = vpack.c.b16 %v1862, %v1861
      %v1880 = vshrl.u32 %v1863, 16
      %v1882 = vrot.slane %v1880, 7
      %v1883 = vshll.u32 %v1863, 16
      %v1885 = vor.u32 %v1882, %v1883
      %v1887 = vshrl.u32 %v1864, 16
      %v1889 = vrot.slane %v1887, 7
      %v1890 = vshll.u32 %v1864, 16
      %v1892 = vor.u32 %v1889, %v1890
      %v1893 = vsel %vm1553, %v1882, %v1892
      %v1895 = vshrl.u32 %v1865, 16
      %v1897 = vrot.slane %v1895, 7
      %v1898 = vshll.u32 %v1865, 16
      %v1900 = vor.u32 %v1897, %v1898
      %v1901 = vsel %vm1553, %v1889, %v1900
      %v1903 = vshrl.u32 %v1866, 16
      %v1905 = vrot.slane %v1903, 7
      %v1906 = vshll.u32 %v1866, 16
      %v1908 = vor.u32 %v1905, %v1906
      %v1909 = vsel %vm1553, %v1897, %v1908
      %v1911 = vshrl.u32 %v1867, 16
      %v1913 = vrot.slane %v1911, 7
      %v1914 = vshll.u32 %v1867, 16
      %v1916 = vor.u32 %v1913, %v1914
      %v1917 = vsel %vm1553, %v1905, %v1916
      %v1919 = vshrl.u32 %v1868, 16
      %v1921 = vrot.slane %v1919, 7
      %v1922 = vshll.u32 %v1868, 16
      %v1924 = vor.u32 %v1921, %v1922
      %v1925 = vsel %vm1553, %v1913, %v1924
      %v1927 = vshrl.u32 %v1869, 16
      %v1929 = vrot.slane %v1927, 7
      %v1930 = vshll.u32 %v1869, 16
      %v1932 = vor.u32 %v1929, %v1930
      %v1933 = vsel %vm1553, %v1921, %v1932
      %v1935 = vshrl.u32 %v1870, 16
      %v1937 = vrot.slane %v1935, 7
      %v1938 = vshll.u32 %v1870, 16
      %v1940 = vor.u32 %v1937, %v1938
      %v1941 = vsel %vm1553, %v1929, %v1940
      %v1943 = vshrl.u32 %v1871, 16
      %v1945 = vrot.slane %v1943, 7
      %v1946 = vshll.u32 %v1871, 16
      %v1948 = vor.u32 %v1945, %v1946
      %v1949 = vsel %vm1553, %v1937, %v1948
      %v1951 = vshrl.u32 %v1872, 16
      %v1953 = vrot.slane %v1951, 7
      %v1954 = vshll.u32 %v1872, 16
      %v1956 = vor.u32 %v1953, %v1954
      %v1957 = vsel %vm1553, %v1945, %v1956
      %v1959 = vshrl.u32 %v1873, 16
      %v1961 = vrot.slane %v1959, 7
      %v1962 = vshll.u32 %v1873, 16
      %v1964 = vor.u32 %v1961, %v1962
      %v1965 = vsel %vm1553, %v1953, %v1964
      %v1967 = vshrl.u32 %v1874, 16
      %v1969 = vrot.slane %v1967, 7
      %v1970 = vshll.u32 %v1874, 16
      %v1972 = vor.u32 %v1969, %v1970
      %v1973 = vsel %vm1553, %v1961, %v1972
      %v1975 = vshrl.u32 %v1875, 16
      %v1977 = vrot.slane %v1975, 7
      %v1978 = vshll.u32 %v1875, 16
      %v1980 = vor.u32 %v1977, %v1978
      %v1981 = vsel %vm1553, %v1969, %v1980
      %v1983 = vshrl.u32 %v1876, 16
      %v1985 = vrot.slane %v1983, 7
      %v1986 = vshll.u32 %v1876, 16
      %v1988 = vor.u32 %v1985, %v1986
      %v1989 = vsel %vm1553, %v1977, %v1988
      %v1991 = vshrl.u32 %v1877, 16
      %v1993 = vrot.slane %v1991, 7
      %v1994 = vshll.u32 %v1877, 16
      %v1996 = vor.u32 %v1993, %v1994
      %v1997 = vsel %vm1553, %v1985, %v1996
      %v1999 = vshrl.u32 %v1878, 16
      %v2001 = vrot.slane %v1999, 7
      %v2002 = vshll.u32 %v1878, 16
      %v2004 = vor.u32 %v2001, %v2002
      %v2005 = vsel %vm1553, %v1993, %v2004
      %vm2006 = vcmp.ne.s16.totalorder %v1885, 0
      %vm2007 = vcmp.ne.s16.totalorder %v1893, 0
      %vm2008 = vcmp.ne.s16.totalorder %v1901, 0
      %vm2009 = vcmp.ne.s16.totalorder %v1909, 0
      %vm2010 = vcmp.ne.s16.totalorder %v1917, 0
      %vm2011 = vcmp.ne.s16.totalorder %v1925, 0
      %vm2012 = vcmp.ne.s16.totalorder %v1933, 0
      %vm2013 = vcmp.ne.s16.totalorder %v1941, 0
      %vm2014 = vcmp.ne.s16.totalorder %v1949, 0
      %vm2015 = vcmp.ne.s16.totalorder %v1957, 0
      %vm2016 = vcmp.ne.s16.totalorder %v1965, 0
      %vm2017 = vcmp.ne.s16.totalorder %v1973, 0
      %vm2018 = vcmp.ne.s16.totalorder %v1981, 0
      %vm2019 = vcmp.ne.s16.totalorder %v1989, 0
      %vm2020 = vcmp.ne.s16.totalorder %v1997, 0
      %vm2021 = vcmp.ne.s16.totalorder %v2005, 0
      %vm2022 = vcmp.ne.s16.totalorder %v2001, 0
      %v2023 = vsel %vm2006, %v1750, 0
      %v2024 = vsel %vm2007, %v1751, 0
      %v2025 = vsel %vm2008, %v1752, 0
      %v2026 = vsel %vm2009, %v1753, 0
      %v2027 = vsel %vm2010, %v1754, 0
      %v2028 = vsel %vm2011, %v1755, 0
      %v2029 = vsel %vm2012, %v1756, 0
      %v2030 = vsel %vm2013, %v1757, 0
      %v2031 = vsel %vm2014, %v1758, 0
      %v2032 = vsel %vm2015, %v1759, 0
      %v2033 = vsel %vm2016, %v1760, 0
      %v2034 = vsel %vm2017, %v1761, 0
      %v2035 = vsel %vm2018, %v1762, 0
      %v2036 = vsel %vm2019, %v1763, 0
      %v2037 = vsel %vm2020, %v1764, 0
      %v2038 = vsel %vm2021, %v1765, 0
      %v2039 = vsel %vm2022, %v1766, 0
      %v2041 = vshrl.u32 %v2023, 16
      %v2043 = vshll.u32 %v2023, 16
      %v2045 = vrot.slane %v2043, 1
      %v2046 = vor.u32 %v2041, %v2045
      %v2048 = vshll.u32 %v2024, 16
      %v2050 = vrot.slane %v2048, 1
      %v2051 = vsel %vm1391, %v2046, %v2050
      %v2052 = vshrl.u32 %v2024, 16
      %v2054 = vor.u32 %v2052, %v2050
      %v2056 = vshll.u32 %v2025, 16
      %v2058 = vrot.slane %v2056, 1
      %v2059 = vsel %vm1391, %v2054, %v2058
      %v2060 = vshrl.u32 %v2025, 16
      %v2062 = vor.u32 %v2060, %v2058
      %v2064 = vshll.u32 %v2026, 16
      %v2066 = vrot.slane %v2064, 1
      %v2067 = vsel %vm1391, %v2062, %v2066
      %v2068 = vshrl.u32 %v2026, 16
      %v2070 = vor.u32 %v2068, %v2066
      %v2072 = vshll.u32 %v2027, 16
      %v2074 = vrot.slane %v2072, 1
      %v2075 = vsel %vm1391, %v2070, %v2074
      %v2076 = vshrl.u32 %v2027, 16
      %v2078 = vor.u32 %v2076, %v2074
      %v2080 = vshll.u32 %v2028, 16
      %v2082 = vrot.slane %v2080, 1
      %v2083 = vsel %vm1391, %v2078, %v2082
      %v2084 = vshrl.u32 %v2028, 16
      %v2086 = vor.u32 %v2084, %v2082
      %v2088 = vshll.u32 %v2029, 16
      %v2090 = vrot.slane %v2088, 1
      %v2091 = vsel %vm1391, %v2086, %v2090
      %v2092 = vshrl.u32 %v2029, 16
      %v2094 = vor.u32 %v2092, %v2090
      %v2096 = vshll.u32 %v2030, 16
      %v2098 = vrot.slane %v2096, 1
      %v2099 = vsel %vm1391, %v2094, %v2098
      %v2100 = vshrl.u32 %v2030, 16
      %v2102 = vor.u32 %v2100, %v2098
      %v2104 = vshll.u32 %v2031, 16
      %v2106 = vrot.slane %v2104, 1
      %v2107 = vsel %vm1391, %v2102, %v2106
      %v2108 = vshrl.u32 %v2031, 16
      %v2110 = vor.u32 %v2108, %v2106
      %v2112 = vshll.u32 %v2032, 16
      %v2114 = vrot.slane %v2112, 1
      %v2115 = vsel %vm1391, %v2110, %v2114
      %v2116 = vshrl.u32 %v2032, 16
      %v2118 = vor.u32 %v2116, %v2114
      %v2120 = vshll.u32 %v2033, 16
      %v2122 = vrot.slane %v2120, 1
      %v2123 = vsel %vm1391, %v2118, %v2122
      %v2124 = vshrl.u32 %v2033, 16
      %v2126 = vor.u32 %v2124, %v2122
      %v2128 = vshll.u32 %v2034, 16
      %v2130 = vrot.slane %v2128, 1
      %v2131 = vsel %vm1391, %v2126, %v2130
      %v2132 = vshrl.u32 %v2034, 16
      %v2134 = vor.u32 %v2132, %v2130
      %v2136 = vshll.u32 %v2035, 16
      %v2138 = vrot.slane %v2136, 1
      %v2139 = vsel %vm1391, %v2134, %v2138
      %v2140 = vshrl.u32 %v2035, 16
      %v2142 = vor.u32 %v2140, %v2138
      %v2144 = vshll.u32 %v2036, 16
      %v2146 = vrot.slane %v2144, 1
      %v2147 = vsel %vm1391, %v2142, %v2146
      %v2148 = vshrl.u32 %v2036, 16
      %v2150 = vor.u32 %v2148, %v2146
      %v2152 = vshll.u32 %v2037, 16
      %v2154 = vrot.slane %v2152, 1
      %v2155 = vsel %vm1391, %v2150, %v2154
      %v2156 = vshrl.u32 %v2037, 16
      %v2158 = vor.u32 %v2156, %v2154
      %v2160 = vshll.u32 %v2038, 16
      %v2162 = vrot.slane %v2160, 1
      %v2163 = vsel %vm1391, %v2158, %v2162
      %v2164 = vshrl.u32 %v2038, 16
      %v2166 = vor.u32 %v2164, %v2162
      %v2168 = vshll.u32 %v2039, 16
      %v2170 = vrot.slane %v2168, 1
      %v2171 = vsel %vm1391, %v2166, %v2170
      %2188 = vst [vmem:[#allocation3 + $0x10] sm:$0xff] %v2051
      %2189 = vst [vmem:[#allocation3 + $0x58] sm:$0xff] %v2059
      %2190 = vst [vmem:[#allocation3 + $0xa0] sm:$0xff] %v2067
      %2191 = vst [vmem:[#allocation3 + $0xe8] sm:$0xff] %v2075
      %2192 = vst [vmem:[#allocation3 + $0x130] sm:$0xff] %v2083
      %2193 = vst [vmem:[#allocation3 + $0x178] sm:$0xff] %v2091
      %2194 = vst [vmem:[#allocation3 + $0x1c0] sm:$0xff] %v2099
      %2195 = vst [vmem:[#allocation3 + $0x208] sm:$0xff] %v2107
      %2196 = vst [vmem:[#allocation3 + $0x250] sm:$0xff] %v2115
      %2197 = vst [vmem:[#allocation3 + $0x298] sm:$0xff] %v2123
      %2198 = vst [vmem:[#allocation3 + $0x2e0] sm:$0xff] %v2131
      %2199 = vst [vmem:[#allocation3 + $0x328] sm:$0xff] %v2139
      %2200 = vst [vmem:[#allocation3 + $0x370] sm:$0xff] %v2147
      %2201 = vst [vmem:[#allocation3 + $0x3b8] sm:$0xff] %v2155
      %2202 = vst [vmem:[#allocation3 + $0x400] sm:$0xff] %v2163
      %2203 = vst [vmem:[#allocation3 + $0x448] sm:$0xff] %v2171
      %v2204 = vld [vmem:[#allocation2 + $0x8] sm:$0x80]
      %v2205 = vld [vmem:[#allocation2 + $0x10] sm:$0xff]
      %v2206 = vld [vmem:[#allocation2 + $0x18] sm:$0xff]
      %v2207 = vld [vmem:[#allocation2 + $0x20] sm:$0xff]
      %v2208 = vld [vmem:[#allocation2 + $0x28] sm:$0xff]
      %v2209 = vld [vmem:[#allocation2 + $0x30] sm:$0xff]
      %v2210 = vld [vmem:[#allocation2 + $0x38] sm:$0xff]
      %v2211 = vld [vmem:[#allocation2 + $0x40] sm:$0xff]
      %v2212 = vld [vmem:[#allocation2 + $0x48] sm:$0xff]
      %v2213 = vld [vmem:[#allocation2 + $0x50] sm:$0xff]
      %v2214 = vld [vmem:[#allocation2 + $0x58] sm:$0xff]
      %v2215 = vld [vmem:[#allocation2 + $0x60] sm:$0xff]
      %v2216 = vld [vmem:[#allocation2 + $0x68] sm:$0xff]
      %v2217 = vld [vmem:[#allocation2 + $0x70] sm:$0xff]
      %v2218 = vld [vmem:[#allocation2 + $0x78] sm:$0xff]
      %v2219 = vld [vmem:[#allocation2 + $0x80] sm:$0xff]
      %v2220 = vld [vmem:[#allocation2 + $0x88] sm:$0xff]
      %v2221 = vsel %vm1519, %v2204, 0
      %v2222 = vsel %vm1520, %v2205, 0
      %v2223 = vsel %vm1521, %v2206, 0
      %v2224 = vsel %vm1522, %v2207, 0
      %v2225 = vsel %vm1523, %v2208, 0
      %v2226 = vsel %vm1524, %v2209, 0
      %v2227 = vsel %vm1525, %v2210, 0
      %v2228 = vsel %vm1526, %v2211, 0
      %v2229 = vsel %vm1527, %v2212, 0
      %v2230 = vsel %vm1528, %v2213, 0
      %v2231 = vsel %vm1529, %v2214, 0
      %v2232 = vsel %vm1530, %v2215, 0
      %v2233 = vsel %vm1531, %v2216, 0
      %v2234 = vsel %vm1532, %v2217, 0
      %v2235 = vsel %vm1533, %v2218, 0
      %v2236 = vsel %vm1534, %v2219, 0
      %v2237 = vsel %vm1535, %v2220, 0
      %v2239 = vshrl.u32 %v2221, 16
      %v2241 = vrot.slane %v2239, 7
      %v2243 = vshrl.u32 %v2222, 16
      %v2245 = vrot.slane %v2243, 7
      %v2246 = vshll.u32 %v2222, 16
      %v2248 = vor.u32 %v2245, %v2246
      %v2249 = vsel %vm1553, %v2241, %v2248
      %v2251 = vshrl.u32 %v2223, 16
      %v2253 = vrot.slane %v2251, 7
      %v2254 = vshll.u32 %v2223, 16
      %v2256 = vor.u32 %v2253, %v2254
      %v2257 = vsel %vm1553, %v2245, %v2256
      %v2259 = vshrl.u32 %v2224, 16
      %v2261 = vrot.slane %v2259, 7
      %v2262 = vshll.u32 %v2224, 16
      %v2264 = vor.u32 %v2261, %v2262
      %v2265 = vsel %vm1553, %v2253, %v2264
      %v2267 = vshrl.u32 %v2225, 16
      %v2269 = vrot.slane %v2267, 7
      %v2270 = vshll.u32 %v2225, 16
      %v2272 = vor.u32 %v2269, %v2270
      %v2273 = vsel %vm1553, %v2261, %v2272
      %v2275 = vshrl.u32 %v2226, 16
      %v2277 = vrot.slane %v2275, 7
      %v2278 = vshll.u32 %v2226, 16
      %v2280 = vor.u32 %v2277, %v2278
      %v2281 = vsel %vm1553, %v2269, %v2280
      %v2283 = vshrl.u32 %v2227, 16
      %v2285 = vrot.slane %v2283, 7
      %v2286 = vshll.u32 %v2227, 16
      %v2288 = vor.u32 %v2285, %v2286
      %v2289 = vsel %vm1553, %v2277, %v2288
      %v2291 = vshrl.u32 %v2228, 16
      %v2293 = vrot.slane %v2291, 7
      %v2294 = vshll.u32 %v2228, 16
      %v2296 = vor.u32 %v2293, %v2294
      %v2297 = vsel %vm1553, %v2285, %v2296
      %v2299 = vshrl.u32 %v2229, 16
      %v2301 = vrot.slane %v2299, 7
      %v2302 = vshll.u32 %v2229, 16
      %v2304 = vor.u32 %v2301, %v2302
      %v2305 = vsel %vm1553, %v2293, %v2304
      %v2307 = vshrl.u32 %v2230, 16
      %v2309 = vrot.slane %v2307, 7
      %v2310 = vshll.u32 %v2230, 16
      %v2312 = vor.u32 %v2309, %v2310
      %v2313 = vsel %vm1553, %v2301, %v2312
      %v2315 = vshrl.u32 %v2231, 16
      %v2317 = vrot.slane %v2315, 7
      %v2318 = vshll.u32 %v2231, 16
      %v2320 = vor.u32 %v2317, %v2318
      %v2321 = vsel %vm1553, %v2309, %v2320
      %v2323 = vshrl.u32 %v2232, 16
      %v2325 = vrot.slane %v2323, 7
      %v2326 = vshll.u32 %v2232, 16
      %v2328 = vor.u32 %v2325, %v2326
      %v2329 = vsel %vm1553, %v2317, %v2328
      %v2331 = vshrl.u32 %v2233, 16
      %v2333 = vrot.slane %v2331, 7
      %v2334 = vshll.u32 %v2233, 16
      %v2336 = vor.u32 %v2333, %v2334
      %v2337 = vsel %vm1553, %v2325, %v2336
      %v2339 = vshrl.u32 %v2234, 16
      %v2341 = vrot.slane %v2339, 7
      %v2342 = vshll.u32 %v2234, 16
      %v2344 = vor.u32 %v2341, %v2342
      %v2345 = vsel %vm1553, %v2333, %v2344
      %v2347 = vshrl.u32 %v2235, 16
      %v2349 = vrot.slane %v2347, 7
      %v2350 = vshll.u32 %v2235, 16
      %v2352 = vor.u32 %v2349, %v2350
      %v2353 = vsel %vm1553, %v2341, %v2352
      %v2355 = vshrl.u32 %v2236, 16
      %v2357 = vrot.slane %v2355, 7
      %v2358 = vshll.u32 %v2236, 16
      %v2360 = vor.u32 %v2357, %v2358
      %v2361 = vsel %vm1553, %v2349, %v2360
      %v2363 = vshrl.u32 %v2237, 16
      %v2365 = vrot.slane %v2363, 7
      %v2366 = vshll.u32 %v2237, 16
      %v2368 = vor.u32 %v2365, %v2366
      %v2369 = vsel %vm1553, %v2357, %v2368
      %2386 = vst [vmem:[#allocation3 + $0x18] sm:$0xff] %v2249
      %2387 = vst [vmem:[#allocation3 + $0x60] sm:$0xff] %v2257
      %2388 = vst [vmem:[#allocation3 + $0xa8] sm:$0xff] %v2265
      %2389 = vst [vmem:[#allocation3 + $0xf0] sm:$0xff] %v2273
      %2390 = vst [vmem:[#allocation3 + $0x138] sm:$0xff] %v2281
      %2391 = vst [vmem:[#allocation3 + $0x180] sm:$0xff] %v2289
      %2392 = vst [vmem:[#allocation3 + $0x1c8] sm:$0xff] %v2297
      %2393 = vst [vmem:[#allocation3 + $0x210] sm:$0xff] %v2305
      %2394 = vst [vmem:[#allocation3 + $0x258] sm:$0xff] %v2313
      %2395 = vst [vmem:[#allocation3 + $0x2a0] sm:$0xff] %v2321
      %2396 = vst [vmem:[#allocation3 + $0x2e8] sm:$0xff] %v2329
      %2397 = vst [vmem:[#allocation3 + $0x330] sm:$0xff] %v2337
      %2398 = vst [vmem:[#allocation3 + $0x378] sm:$0xff] %v2345
      %2399 = vst [vmem:[#allocation3 + $0x3c0] sm:$0xff] %v2353
      %2400 = vst [vmem:[#allocation3 + $0x408] sm:$0xff] %v2361
      %2401 = vst [vmem:[#allocation3 + $0x450] sm:$0xff] %v2369
      %v2402 = vld [vmem:[#allocation2 + $0x10] sm:$0xff]
      %v2403 = vld [vmem:[#allocation2 + $0x18] sm:$0xff]
      %v2404 = vld [vmem:[#allocation2 + $0x20] sm:$0xff]
      %v2405 = vld [vmem:[#allocation2 + $0x28] sm:$0xff]
      %v2406 = vld [vmem:[#allocation2 + $0x30] sm:$0xff]
      %v2407 = vld [vmem:[#allocation2 + $0x38] sm:$0xff]
      %v2408 = vld [vmem:[#allocation2 + $0x40] sm:$0xff]
      %v2409 = vld [vmem:[#allocation2 + $0x48] sm:$0xff]
      %v2410 = vld [vmem:[#allocation2 + $0x50] sm:$0xff]
      %v2411 = vld [vmem:[#allocation2 + $0x58] sm:$0xff]
      %v2412 = vld [vmem:[#allocation2 + $0x60] sm:$0xff]
      %v2413 = vld [vmem:[#allocation2 + $0x68] sm:$0xff]
      %v2414 = vld [vmem:[#allocation2 + $0x70] sm:$0xff]
      %v2415 = vld [vmem:[#allocation2 + $0x78] sm:$0xff]
      %v2416 = vld [vmem:[#allocation2 + $0x80] sm:$0xff]
      %v2417 = vld [vmem:[#allocation2 + $0x88] sm:$0xff]
      %2418 = vst [vmem:[#allocation3 + $0x20] sm:$0xff] %v2402
      %2419 = vst [vmem:[#allocation3 + $0x68] sm:$0xff] %v2403
      %2420 = vst [vmem:[#allocation3 + $0xb0] sm:$0xff] %v2404
      %2421 = vst [vmem:[#allocation3 + $0xf8] sm:$0xff] %v2405
      %2422 = vst [vmem:[#allocation3 + $0x140] sm:$0xff] %v2406
      %2423 = vst [vmem:[#allocation3 + $0x188] sm:$0xff] %v2407
      %2424 = vst [vmem:[#allocation3 + $0x1d0] sm:$0xff] %v2408
      %2425 = vst [vmem:[#allocation3 + $0x218] sm:$0xff] %v2409
      %2426 = vst [vmem:[#allocation3 + $0x260] sm:$0xff] %v2410
      %2427 = vst [vmem:[#allocation3 + $0x2a8] sm:$0xff] %v2411
      %2428 = vst [vmem:[#allocation3 + $0x2f0] sm:$0xff] %v2412
      %2429 = vst [vmem:[#allocation3 + $0x338] sm:$0xff] %v2413
      %2430 = vst [vmem:[#allocation3 + $0x380] sm:$0xff] %v2414
      %2431 = vst [vmem:[#allocation3 + $0x3c8] sm:$0xff] %v2415
      %2432 = vst [vmem:[#allocation3 + $0x410] sm:$0xff] %v2416
      %2433 = vst [vmem:[#allocation3 + $0x458] sm:$0xff] %v2417
      %v2434 = vld [vmem:[#allocation2 + $0x10] sm:$0xff]
      %v2435 = vld [vmem:[#allocation2 + $0x18] sm:$0xff]
      %v2436 = vld [vmem:[#allocation2 + $0x20] sm:$0xff]
      %v2437 = vld [vmem:[#allocation2 + $0x28] sm:$0xff]
      %v2438 = vld [vmem:[#allocation2 + $0x30] sm:$0xff]
      %v2439 = vld [vmem:[#allocation2 + $0x38] sm:$0xff]
      %v2440 = vld [vmem:[#allocation2 + $0x40] sm:$0xff]
      %v2441 = vld [vmem:[#allocation2 + $0x48] sm:$0xff]
      %v2442 = vld [vmem:[#allocation2 + $0x50] sm:$0xff]
      %v2443 = vld [vmem:[#allocation2 + $0x58] sm:$0xff]
      %v2444 = vld [vmem:[#allocation2 + $0x60] sm:$0xff]
      %v2445 = vld [vmem:[#allocation2 + $0x68] sm:$0xff]
      %v2446 = vld [vmem:[#allocation2 + $0x70] sm:$0xff]
      %v2447 = vld [vmem:[#allocation2 + $0x78] sm:$0xff]
      %v2448 = vld [vmem:[#allocation2 + $0x80] sm:$0xff]
      %v2449 = vld [vmem:[#allocation2 + $0x88] sm:$0xff]
      %v2450 = vld [vmem:[#allocation2 + $0x90] sm:$0x1]
      %v2451 = vsel %vm2006, %v2434, 0
      %v2452 = vsel %vm2007, %v2435, 0
      %v2453 = vsel %vm2008, %v2436, 0
      %v2454 = vsel %vm2009, %v2437, 0
      %v2455 = vsel %vm2010, %v2438, 0
      %v2456 = vsel %vm2011, %v2439, 0
      %v2457 = vsel %vm2012, %v2440, 0
      %v2458 = vsel %vm2013, %v2441, 0
      %v2459 = vsel %vm2014, %v2442, 0
      %v2460 = vsel %vm2015, %v2443, 0
      %v2461 = vsel %vm2016, %v2444, 0
      %v2462 = vsel %vm2017, %v2445, 0
      %v2463 = vsel %vm2018, %v2446, 0
      %v2464 = vsel %vm2019, %v2447, 0
      %v2465 = vsel %vm2020, %v2448, 0
      %v2466 = vsel %vm2021, %v2449, 0
      %v2467 = vsel %vm2022, %v2450, 0
      %v2469 = vshrl.u32 %v2451, 16
      %v2471 = vshll.u32 %v2451, 16
      %v2473 = vrot.slane %v2471, 1
      %v2474 = vor.u32 %v2469, %v2473
      %v2476 = vshll.u32 %v2452, 16
      %v2478 = vrot.slane %v2476, 1
      %v2479 = vsel %vm1391, %v2474, %v2478
      %v2480 = vshrl.u32 %v2452, 16
      %v2482 = vor.u32 %v2480, %v2478
      %v2484 = vshll.u32 %v2453, 16
      %v2486 = vrot.slane %v2484, 1
      %v2487 = vsel %vm1391, %v2482, %v2486
      %v2488 = vshrl.u32 %v2453, 16
      %v2490 = vor.u32 %v2488, %v2486
      %v2492 = vshll.u32 %v2454, 16
      %v2494 = vrot.slane %v2492, 1
      %v2495 = vsel %vm1391, %v2490, %v2494
      %v2496 = vshrl.u32 %v2454, 16
      %v2498 = vor.u32 %v2496, %v2494
      %v2500 = vshll.u32 %v2455, 16
      %v2502 = vrot.slane %v2500, 1
      %v2503 = vsel %vm1391, %v2498, %v2502
      %v2504 = vshrl.u32 %v2455, 16
      %v2506 = vor.u32 %v2504, %v2502
      %v2508 = vshll.u32 %v2456, 16
      %v2510 = vrot.slane %v2508, 1
      %v2511 = vsel %vm1391, %v2506, %v2510
      %v2512 = vshrl.u32 %v2456, 16
      %v2514 = vor.u32 %v2512, %v2510
      %v2516 = vshll.u32 %v2457, 16
      %v2518 = vrot.slane %v2516, 1
      %v2519 = vsel %vm1391, %v2514, %v2518
      %v2520 = vshrl.u32 %v2457, 16
      %v2522 = vor.u32 %v2520, %v2518
      %v2524 = vshll.u32 %v2458, 16
      %v2526 = vrot.slane %v2524, 1
      %v2527 = vsel %vm1391, %v2522, %v2526
      %v2528 = vshrl.u32 %v2458, 16
      %v2530 = vor.u32 %v2528, %v2526
      %v2532 = vshll.u32 %v2459, 16
      %v2534 = vrot.slane %v2532, 1
      %v2535 = vsel %vm1391, %v2530, %v2534
      %v2536 = vshrl.u32 %v2459, 16
      %v2538 = vor.u32 %v2536, %v2534
      %v2540 = vshll.u32 %v2460, 16
      %v2542 = vrot.slane %v2540, 1
      %v2543 = vsel %vm1391, %v2538, %v2542
      %v2544 = vshrl.u32 %v2460, 16
      %v2546 = vor.u32 %v2544, %v2542
      %v2548 = vshll.u32 %v2461, 16
      %v2550 = vrot.slane %v2548, 1
      %v2551 = vsel %vm1391, %v2546, %v2550
      %v2552 = vshrl.u32 %v2461, 16
      %v2554 = vor.u32 %v2552, %v2550
      %v2556 = vshll.u32 %v2462, 16
      %v2558 = vrot.slane %v2556, 1
      %v2559 = vsel %vm1391, %v2554, %v2558
      %v2560 = vshrl.u32 %v2462, 16
      %v2562 = vor.u32 %v2560, %v2558
      %v2564 = vshll.u32 %v2463, 16
      %v2566 = vrot.slane %v2564, 1
      %v2567 = vsel %vm1391, %v2562, %v2566
      %v2568 = vshrl.u32 %v2463, 16
      %v2570 = vor.u32 %v2568, %v2566
      %v2572 = vshll.u32 %v2464, 16
      %v2574 = vrot.slane %v2572, 1
      %v2575 = vsel %vm1391, %v2570, %v2574
      %v2576 = vshrl.u32 %v2464, 16
      %v2578 = vor.u32 %v2576, %v2574
      %v2580 = vshll.u32 %v2465, 16
      %v2582 = vrot.slane %v2580, 1
      %v2583 = vsel %vm1391, %v2578, %v2582
      %v2584 = vshrl.u32 %v2465, 16
      %v2586 = vor.u32 %v2584, %v2582
      %v2588 = vshll.u32 %v2466, 16
      %v2590 = vrot.slane %v2588, 1
      %v2591 = vsel %vm1391, %v2586, %v2590
      %v2592 = vshrl.u32 %v2466, 16
      %v2594 = vor.u32 %v2592, %v2590
      %v2596 = vshll.u32 %v2467, 16
      %v2598 = vrot.slane %v2596, 1
      %v2599 = vsel %vm1391, %v2594, %v2598
      %2616 = vst [vmem:[#allocation3 + $0x28] sm:$0xff] %v2479
      %2617 = vst [vmem:[#allocation3 + $0x70] sm:$0xff] %v2487
      %2618 = vst [vmem:[#allocation3 + $0xb8] sm:$0xff] %v2495
      %2619 = vst [vmem:[#allocation3 + $0x100] sm:$0xff] %v2503
      %2620 = vst [vmem:[#allocation3 + $0x148] sm:$0xff] %v2511
      %2621 = vst [vmem:[#allocation3 + $0x190] sm:$0xff] %v2519
      %2622 = vst [vmem:[#allocation3 + $0x1d8] sm:$0xff] %v2527
      %2623 = vst [vmem:[#allocation3 + $0x220] sm:$0xff] %v2535
      %2624 = vst [vmem:[#allocation3 + $0x268] sm:$0xff] %v2543
      %2625 = vst [vmem:[#allocation3 + $0x2b0] sm:$0xff] %v2551
      %2626 = vst [vmem:[#allocation3 + $0x2f8] sm:$0xff] %v2559
      %2627 = vst [vmem:[#allocation3 + $0x340] sm:$0xff] %v2567
      %2628 = vst [vmem:[#allocation3 + $0x388] sm:$0xff] %v2575
      %2629 = vst [vmem:[#allocation3 + $0x3d0] sm:$0xff] %v2583
      %2630 = vst [vmem:[#allocation3 + $0x418] sm:$0xff] %v2591
      %2631 = vst [vmem:[#allocation3 + $0x460] sm:$0xff] %v2599
      %v2632 = vld [vmem:[#allocation2 + $0x10] sm:$0x80]
      %v2633 = vld [vmem:[#allocation2 + $0x18] sm:$0xff]
      %v2634 = vld [vmem:[#allocation2 + $0x20] sm:$0xff]
      %v2635 = vld [vmem:[#allocation2 + $0x28] sm:$0xff]
      %v2636 = vld [vmem:[#allocation2 + $0x30] sm:$0xff]
      %v2637 = vld [vmem:[#allocation2 + $0x38] sm:$0xff]
      %v2638 = vld [vmem:[#allocation2 + $0x40] sm:$0xff]
      %v2639 = vld [vmem:[#allocation2 + $0x48] sm:$0xff]
      %v2640 = vld [vmem:[#allocation2 + $0x50] sm:$0xff]
      %v2641 = vld [vmem:[#allocation2 + $0x58] sm:$0xff]
      %v2642 = vld [vmem:[#allocation2 + $0x60] sm:$0xff]
      %v2643 = vld [vmem:[#allocation2 + $0x68] sm:$0xff]
      %v2644 = vld [vmem:[#allocation2 + $0x70] sm:$0xff]
      %v2645 = vld [vmem:[#allocation2 + $0x78] sm:$0xff]
      %v2646 = vld [vmem:[#allocation2 + $0x80] sm:$0xff]
      %v2647 = vld [vmem:[#allocation2 + $0x88] sm:$0xff]
      %v2648 = vld [vmem:[#allocation2 + $0x90] sm:$0xff]
      %v2649 = vsel %vm1519, %v2632, 0
      %v2650 = vsel %vm1520, %v2633, 0
      %v2651 = vsel %vm1521, %v2634, 0
      %v2652 = vsel %vm1522, %v2635, 0
      %v2653 = vsel %vm1523, %v2636, 0
      %v2654 = vsel %vm1524, %v2637, 0
      %v2655 = vsel %vm1525, %v2638, 0
      %v2656 = vsel %vm1526, %v2639, 0
      %v2657 = vsel %vm1527, %v2640, 0
      %v2658 = vsel %vm1528, %v2641, 0
      %v2659 = vsel %vm1529, %v2642, 0
      %v2660 = vsel %vm1530, %v2643, 0
      %v2661 = vsel %vm1531, %v2644, 0
      %v2662 = vsel %vm1532, %v2645, 0
      %v2663 = vsel %vm1533, %v2646, 0
      %v2664 = vsel %vm1534, %v2647, 0
      %v2665 = vsel %vm1535, %v2648, 0
      %v2667 = vshrl.u32 %v2649, 16
      %v2669 = vrot.slane %v2667, 7
      %v2671 = vshrl.u32 %v2650, 16
      %v2673 = vrot.slane %v2671, 7
      %v2674 = vshll.u32 %v2650, 16
      %v2676 = vor.u32 %v2673, %v2674
      %v2677 = vsel %vm1553, %v2669, %v2676
      %v2679 = vshrl.u32 %v2651, 16
      %v2681 = vrot.slane %v2679, 7
      %v2682 = vshll.u32 %v2651, 16
      %v2684 = vor.u32 %v2681, %v2682
      %v2685 = vsel %vm1553, %v2673, %v2684
      %v2687 = vshrl.u32 %v2652, 16
      %v2689 = vrot.slane %v2687, 7
      %v2690 = vshll.u32 %v2652, 16
      %v2692 = vor.u32 %v2689, %v2690
      %v2693 = vsel %vm1553, %v2681, %v2692
      %v2695 = vshrl.u32 %v2653, 16
      %v2697 = vrot.slane %v2695, 7
      %v2698 = vshll.u32 %v2653, 16
      %v2700 = vor.u32 %v2697, %v2698
      %v2701 = vsel %vm1553, %v2689, %v2700
      %v2703 = vshrl.u32 %v2654, 16
      %v2705 = vrot.slane %v2703, 7
      %v2706 = vshll.u32 %v2654, 16
      %v2708 = vor.u32 %v2705, %v2706
      %v2709 = vsel %vm1553, %v2697, %v2708
      %v2711 = vshrl.u32 %v2655, 16
      %v2713 = vrot.slane %v2711, 7
      %v2714 = vshll.u32 %v2655, 16
      %v2716 = vor.u32 %v2713, %v2714
      %v2717 = vsel %vm1553, %v2705, %v2716
      %v2719 = vshrl.u32 %v2656, 16
      %v2721 = vrot.slane %v2719, 7
      %v2722 = vshll.u32 %v2656, 16
      %v2724 = vor.u32 %v2721, %v2722
      %v2725 = vsel %vm1553, %v2713, %v2724
      %v2727 = vshrl.u32 %v2657, 16
      %v2729 = vrot.slane %v2727, 7
      %v2730 = vshll.u32 %v2657, 16
      %v2732 = vor.u32 %v2729, %v2730
      %v2733 = vsel %vm1553, %v2721, %v2732
      %v2735 = vshrl.u32 %v2658, 16
      %v2737 = vrot.slane %v2735, 7
      %v2738 = vshll.u32 %v2658, 16
      %v2740 = vor.u32 %v2737, %v2738
      %v2741 = vsel %vm1553, %v2729, %v2740
      %v2743 = vshrl.u32 %v2659, 16
      %v2745 = vrot.slane %v2743, 7
      %v2746 = vshll.u32 %v2659, 16
      %v2748 = vor.u32 %v2745, %v2746
      %v2749 = vsel %vm1553, %v2737, %v2748
      %v2751 = vshrl.u32 %v2660, 16
      %v2753 = vrot.slane %v2751, 7
      %v2754 = vshll.u32 %v2660, 16
      %v2756 = vor.u32 %v2753, %v2754
      %v2757 = vsel %vm1553, %v2745, %v2756
      %v2759 = vshrl.u32 %v2661, 16
      %v2761 = vrot.slane %v2759, 7
      %v2762 = vshll.u32 %v2661, 16
      %v2764 = vor.u32 %v2761, %v2762
      %v2765 = vsel %vm1553, %v2753, %v2764
      %v2767 = vshrl.u32 %v2662, 16
      %v2769 = vrot.slane %v2767, 7
      %v2770 = vshll.u32 %v2662, 16
      %v2772 = vor.u32 %v2769, %v2770
      %v2773 = vsel %vm1553, %v2761, %v2772
      %v2775 = vshrl.u32 %v2663, 16
      %v2777 = vrot.slane %v2775, 7
      %v2778 = vshll.u32 %v2663, 16
      %v2780 = vor.u32 %v2777, %v2778
      %v2781 = vsel %vm1553, %v2769, %v2780
      %v2783 = vshrl.u32 %v2664, 16
      %v2785 = vrot.slane %v2783, 7
      %v2786 = vshll.u32 %v2664, 16
      %v2788 = vor.u32 %v2785, %v2786
      %v2789 = vsel %vm1553, %v2777, %v2788
      %v2791 = vshrl.u32 %v2665, 16
      %v2793 = vrot.slane %v2791, 7
      %v2794 = vshll.u32 %v2665, 16
      %v2796 = vor.u32 %v2793, %v2794
      %v2797 = vsel %vm1553, %v2785, %v2796
      %2814 = vst [vmem:[#allocation3 + $0x30] sm:$0xff] %v2677
      %2815 = vst [vmem:[#allocation3 + $0x78] sm:$0xff] %v2685
      %2816 = vst [vmem:[#allocation3 + $0xc0] sm:$0xff] %v2693
      %2817 = vst [vmem:[#allocation3 + $0x108] sm:$0xff] %v2701
      %2818 = vst [vmem:[#allocation3 + $0x150] sm:$0xff] %v2709
      %2819 = vst [vmem:[#allocation3 + $0x198] sm:$0xff] %v2717
      %2820 = vst [vmem:[#allocation3 + $0x1e0] sm:$0xff] %v2725
      %2821 = vst [vmem:[#allocation3 + $0x228] sm:$0xff] %v2733
      %2822 = vst [vmem:[#allocation3 + $0x270] sm:$0xff] %v2741
      %2823 = vst [vmem:[#allocation3 + $0x2b8] sm:$0xff] %v2749
      %2824 = vst [vmem:[#allocation3 + $0x300] sm:$0xff] %v2757
      %2825 = vst [vmem:[#allocation3 + $0x348] sm:$0xff] %v2765
      %2826 = vst [vmem:[#allocation3 + $0x390] sm:$0xff] %v2773
      %2827 = vst [vmem:[#allocation3 + $0x3d8] sm:$0xff] %v2781
      %2828 = vst [vmem:[#allocation3 + $0x420] sm:$0xff] %v2789
      %2829 = vst [vmem:[#allocation3 + $0x468] sm:$0xff] %v2797
      %v2830 = vld [vmem:[#allocation2 + $0x18] sm:$0xff]
      %v2831 = vld [vmem:[#allocation2 + $0x20] sm:$0xff]
      %v2832 = vld [vmem:[#allocation2 + $0x28] sm:$0xff]
      %v2833 = vld [vmem:[#allocation2 + $0x30] sm:$0xff]
      %v2834 = vld [vmem:[#allocation2 + $0x38] sm:$0xff]
      %v2835 = vld [vmem:[#allocation2 + $0x40] sm:$0xff]
      %v2836 = vld [vmem:[#allocation2 + $0x48] sm:$0xff]
      %v2837 = vld [vmem:[#allocation2 + $0x50] sm:$0xff]
      %v2838 = vld [vmem:[#allocation2 + $0x58] sm:$0xff]
      %v2839 = vld [vmem:[#allocation2 + $0x60] sm:$0xff]
      %v2840 = vld [vmem:[#allocation2 + $0x68] sm:$0xff]
      %v2841 = vld [vmem:[#allocation2 + $0x70] sm:$0xff]
      %v2842 = vld [vmem:[#allocation2 + $0x78] sm:$0xff]
      %v2843 = vld [vmem:[#allocation2 + $0x80] sm:$0xff]
      %v2844 = vld [vmem:[#allocation2 + $0x88] sm:$0xff]
      %v2845 = vld [vmem:[#allocation2 + $0x90] sm:$0xff]
      %2846 = vst [vmem:[#allocation3 + $0x38] sm:$0xff] %v2830
      %2847 = vst [vmem:[#allocation3 + $0x80] sm:$0xff] %v2831
      %2848 = vst [vmem:[#allocation3 + $0xc8] sm:$0xff] %v2832
      %2849 = vst [vmem:[#allocation3 + $0x110] sm:$0xff] %v2833
      %2850 = vst [vmem:[#allocation3 + $0x158] sm:$0xff] %v2834
      %2851 = vst [vmem:[#allocation3 + $0x1a0] sm:$0xff] %v2835
      %2852 = vst [vmem:[#allocation3 + $0x1e8] sm:$0xff] %v2836
      %2853 = vst [vmem:[#allocation3 + $0x230] sm:$0xff] %v2837
      %2854 = vst [vmem:[#allocation3 + $0x278] sm:$0xff] %v2838
      %2855 = vst [vmem:[#allocation3 + $0x2c0] sm:$0xff] %v2839
      %2856 = vst [vmem:[#allocation3 + $0x308] sm:$0xff] %v2840
      %2857 = vst [vmem:[#allocation3 + $0x350] sm:$0xff] %v2841
      %2858 = vst [vmem:[#allocation3 + $0x398] sm:$0xff] %v2842
      %2859 = vst [vmem:[#allocation3 + $0x3e0] sm:$0xff] %v2843
      %2860 = vst [vmem:[#allocation3 + $0x428] sm:$0xff] %v2844
      %2861 = vst [vmem:[#allocation3 + $0x470] sm:$0xff] %v2845
      %v2862 = vld [vmem:[#allocation2 + $0x18] sm:$0xff]
      %v2863 = vld [vmem:[#allocation2 + $0x20] sm:$0xff]
      %v2864 = vld [vmem:[#allocation2 + $0x28] sm:$0xff]
      %v2865 = vld [vmem:[#allocation2 + $0x30] sm:$0xff]
      %v2866 = vld [vmem:[#allocation2 + $0x38] sm:$0xff]
      %v2867 = vld [vmem:[#allocation2 + $0x40] sm:$0xff]
      %v2868 = vld [vmem:[#allocation2 + $0x48] sm:$0xff]
      %v2869 = vld [vmem:[#allocation2 + $0x50] sm:$0xff]
      %v2870 = vld [vmem:[#allocation2 + $0x58] sm:$0xff]
      %v2871 = vld [vmem:[#allocation2 + $0x60] sm:$0xff]
      %v2872 = vld [vmem:[#allocation2 + $0x68] sm:$0xff]
      %v2873 = vld [vmem:[#allocation2 + $0x70] sm:$0xff]
      %v2874 = vld [vmem:[#allocation2 + $0x78] sm:$0xff]
      %v2875 = vld [vmem:[#allocation2 + $0x80] sm:$0xff]
      %v2876 = vld [vmem:[#allocation2 + $0x88] sm:$0xff]
      %v2877 = vld [vmem:[#allocation2 + $0x90] sm:$0xff]
      %v2878 = vld [vmem:[#allocation2 + $0x98] sm:$0x1]
      %v2879 = vsel %vm2006, %v2862, 0
      %v2880 = vsel %vm2007, %v2863, 0
      %v2881 = vsel %vm2008, %v2864, 0
      %v2882 = vsel %vm2009, %v2865, 0
      %v2883 = vsel %vm2010, %v2866, 0
      %v2884 = vsel %vm2011, %v2867, 0
      %v2885 = vsel %vm2012, %v2868, 0
      %v2886 = vsel %vm2013, %v2869, 0
      %v2887 = vsel %vm2014, %v2870, 0
      %v2888 = vsel %vm2015, %v2871, 0
      %v2889 = vsel %vm2016, %v2872, 0
      %v2890 = vsel %vm2017, %v2873, 0
      %v2891 = vsel %vm2018, %v2874, 0
      %v2892 = vsel %vm2019, %v2875, 0
      %v2893 = vsel %vm2020, %v2876, 0
      %v2894 = vsel %vm2021, %v2877, 0
      %v2895 = vsel %vm2022, %v2878, 0
      %v2897 = vshrl.u32 %v2879, 16
      %v2899 = vshll.u32 %v2879, 16
      %v2901 = vrot.slane %v2899, 1
      %v2902 = vor.u32 %v2897, %v2901
      %v2904 = vshll.u32 %v2880, 16
      %v2906 = vrot.slane %v2904, 1
      %v2907 = vsel %vm1391, %v2902, %v2906
      %v2908 = vshrl.u32 %v2880, 16
      %v2910 = vor.u32 %v2908, %v2906
      %v2912 = vshll.u32 %v2881, 16
      %v2914 = vrot.slane %v2912, 1
      %v2915 = vsel %vm1391, %v2910, %v2914
      %v2916 = vshrl.u32 %v2881, 16
      %v2918 = vor.u32 %v2916, %v2914
      %v2920 = vshll.u32 %v2882, 16
      %v2922 = vrot.slane %v2920, 1
      %v2923 = vsel %vm1391, %v2918, %v2922
      %v2924 = vshrl.u32 %v2882, 16
      %v2926 = vor.u32 %v2924, %v2922
      %v2928 = vshll.u32 %v2883, 16
      %v2930 = vrot.slane %v2928, 1
      %v2931 = vsel %vm1391, %v2926, %v2930
      %v2932 = vshrl.u32 %v2883, 16
      %v2934 = vor.u32 %v2932, %v2930
      %v2936 = vshll.u32 %v2884, 16
      %v2938 = vrot.slane %v2936, 1
      %v2939 = vsel %vm1391, %v2934, %v2938
      %v2940 = vshrl.u32 %v2884, 16
      %v2942 = vor.u32 %v2940, %v2938
      %v2944 = vshll.u32 %v2885, 16
      %v2946 = vrot.slane %v2944, 1
      %v2947 = vsel %vm1391, %v2942, %v2946
      %v2948 = vshrl.u32 %v2885, 16
      %v2950 = vor.u32 %v2948, %v2946
      %v2952 = vshll.u32 %v2886, 16
      %v2954 = vrot.slane %v2952, 1
      %v2955 = vsel %vm1391, %v2950, %v2954
      %v2956 = vshrl.u32 %v2886, 16
      %v2958 = vor.u32 %v2956, %v2954
      %v2960 = vshll.u32 %v2887, 16
      %v2962 = vrot.slane %v2960, 1
      %v2963 = vsel %vm1391, %v2958, %v2962
      %v2964 = vshrl.u32 %v2887, 16
      %v2966 = vor.u32 %v2964, %v2962
      %v2968 = vshll.u32 %v2888, 16
      %v2970 = vrot.slane %v2968, 1
      %v2971 = vsel %vm1391, %v2966, %v2970
      %v2972 = vshrl.u32 %v2888, 16
      %v2974 = vor.u32 %v2972, %v2970
      %v2976 = vshll.u32 %v2889, 16
      %v2978 = vrot.slane %v2976, 1
      %v2979 = vsel %vm1391, %v2974, %v2978
      %v2980 = vshrl.u32 %v2889, 16
      %v2982 = vor.u32 %v2980, %v2978
      %v2984 = vshll.u32 %v2890, 16
      %v2986 = vrot.slane %v2984, 1
      %v2987 = vsel %vm1391, %v2982, %v2986
      %v2988 = vshrl.u32 %v2890, 16
      %v2990 = vor.u32 %v2988, %v2986
      %v2992 = vshll.u32 %v2891, 16
      %v2994 = vrot.slane %v2992, 1
      %v2995 = vsel %vm1391, %v2990, %v2994
      %v2996 = vshrl.u32 %v2891, 16
      %v2998 = vor.u32 %v2996, %v2994
      %v3000 = vshll.u32 %v2892, 16
      %v3002 = vrot.slane %v3000, 1
      %v3003 = vsel %vm1391, %v2998, %v3002
      %v3004 = vshrl.u32 %v2892, 16
      %v3006 = vor.u32 %v3004, %v3002
      %v3008 = vshll.u32 %v2893, 16
      %v3010 = vrot.slane %v3008, 1
      %v3011 = vsel %vm1391, %v3006, %v3010
      %v3012 = vshrl.u32 %v2893, 16
      %v3014 = vor.u32 %v3012, %v3010
      %v3016 = vshll.u32 %v2894, 16
      %v3018 = vrot.slane %v3016, 1
      %v3019 = vsel %vm1391, %v3014, %v3018
      %v3020 = vshrl.u32 %v2894, 16
      %v3022 = vor.u32 %v3020, %v3018
      %v3024 = vshll.u32 %v2895, 16
      %v3026 = vrot.slane %v3024, 1
      %v3027 = vsel %vm1391, %v3022, %v3026
      %3044 = vst [vmem:[#allocation3 + $0x40] sm:$0xff] %v2907
      %3045 = vst [vmem:[#allocation3 + $0x88] sm:$0xff] %v2915
      %3046 = vst [vmem:[#allocation3 + $0xd0] sm:$0xff] %v2923
      %3047 = vst [vmem:[#allocation3 + $0x118] sm:$0xff] %v2931
      %3048 = vst [vmem:[#allocation3 + $0x160] sm:$0xff] %v2939
      %3049 = vst [vmem:[#allocation3 + $0x1a8] sm:$0xff] %v2947
      %3050 = vst [vmem:[#allocation3 + $0x1f0] sm:$0xff] %v2955
      %3051 = vst [vmem:[#allocation3 + $0x238] sm:$0xff] %v2963
      %3052 = vst [vmem:[#allocation3 + $0x280] sm:$0xff] %v2971
      %3053 = vst [vmem:[#allocation3 + $0x2c8] sm:$0xff] %v2979
      %3054 = vst [vmem:[#allocation3 + $0x310] sm:$0xff] %v2987
      %3055 = vst [vmem:[#allocation3 + $0x358] sm:$0xff] %v2995
      %3056 = vst [vmem:[#allocation3 + $0x3a0] sm:$0xff] %v3003
      %3057 = vst [vmem:[#allocation3 + $0x3e8] sm:$0xff] %v3011
      %3058 = vst [vmem:[#allocation3 + $0x430] sm:$0xff] %v3019
      %3059 = vst [vmem:[#allocation3 + $0x478] sm:$0xff] %v3027
      %v3060 = vld [vmem:[#allocation3] sm:$0xff]
      %v3061 = vld [vmem:[#allocation3 + $0x8] sm:$0xff]
      %v3062 = vld [vmem:[#allocation3 + $0x10] sm:$0xff]
      %v3063 = vld [vmem:[#allocation3 + $0x18] sm:$0xff]
      %v3064 = vld [vmem:[#allocation3 + $0x20] sm:$0xff]
      %v3065 = vld [vmem:[#allocation3 + $0x28] sm:$0xff]
      %v3066 = vld [vmem:[#allocation3 + $0x30] sm:$0xff]
      %v3067 = vld [vmem:[#allocation3 + $0x38] sm:$0xff]
      %v3068 = vld [vmem:[#allocation3 + $0x40] sm:$0xff]
      %v3069 = vld [vmem:[#allocation3 + $0x48] sm:$0xff]
      %v3070 = vld [vmem:[#allocation3 + $0x50] sm:$0xff]
      %v3071 = vld [vmem:[#allocation3 + $0x58] sm:$0xff]
      %v3072 = vld [vmem:[#allocation3 + $0x60] sm:$0xff]
      %v3073 = vld [vmem:[#allocation3 + $0x68] sm:$0xff]
      %v3074 = vld [vmem:[#allocation3 + $0x70] sm:$0xff]
      %v3075 = vld [vmem:[#allocation3 + $0x78] sm:$0xff]
      %v3076 = vld [vmem:[#allocation3 + $0x80] sm:$0xff]
      %v3077 = vld [vmem:[#allocation3 + $0x88] sm:$0xff]
      %v3078 = vld [vmem:[#allocation3 + $0x90] sm:$0xff]
      %v3079 = vld [vmem:[#allocation3 + $0x98] sm:$0xff]
      %v3080 = vld [vmem:[#allocation3 + $0xa0] sm:$0xff]
      %v3081 = vld [vmem:[#allocation3 + $0xa8] sm:$0xff]
      %v3082 = vld [vmem:[#allocation3 + $0xb0] sm:$0xff]
      %v3083 = vld [vmem:[#allocation3 + $0xb8] sm:$0xff]
      %v3084 = vld [vmem:[#allocation3 + $0xc0] sm:$0xff]
      %v3085 = vld [vmem:[#allocation3 + $0xc8] sm:$0xff]
      %v3086 = vld [vmem:[#allocation3 + $0xd0] sm:$0xff]
      %v3087 = vld [vmem:[#allocation3 + $0xd8] sm:$0xff]
      %v3088 = vld [vmem:[#allocation3 + $0xe0] sm:$0xff]
      %v3089 = vld [vmem:[#allocation3 + $0xe8] sm:$0xff]
      %v3090 = vld [vmem:[#allocation3 + $0xf0] sm:$0xff]
      %v3091 = vld [vmem:[#allocation3 + $0xf8] sm:$0xff]
      %v3092 = vld [vmem:[#allocation3 + $0x100] sm:$0xff]
      %v3093 = vld [vmem:[#allocation3 + $0x108] sm:$0xff]
      %v3094 = vld [vmem:[#allocation3 + $0x110] sm:$0xff]
      %v3095 = vld [vmem:[#allocation3 + $0x118] sm:$0xff]
      %v3096 = vld [vmem:[#allocation3 + $0x120] sm:$0xff]
      %v3097 = vld [vmem:[#allocation3 + $0x128] sm:$0xff]
      %v3098 = vld [vmem:[#allocation3 + $0x130] sm:$0xff]
      %v3099 = vld [vmem:[#allocation3 + $0x138] sm:$0xff]
      %v3100 = vld [vmem:[#allocation3 + $0x140] sm:$0xff]
      %v3101 = vld [vmem:[#allocation3 + $0x148] sm:$0xff]
      %v3102 = vld [vmem:[#allocation3 + $0x150] sm:$0xff]
      %v3103 = vld [vmem:[#allocation3 + $0x158] sm:$0xff]
      %v3104 = vld [vmem:[#allocation3 + $0x160] sm:$0xff]
      %v3105 = vld [vmem:[#allocation3 + $0x168] sm:$0xff]
      %v3106 = vld [vmem:[#allocation3 + $0x170] sm:$0xff]
      %v3107 = vld [vmem:[#allocation3 + $0x178] sm:$0xff]
      %v3108 = vld [vmem:[#allocation3 + $0x180] sm:$0xff]
      %v3109 = vld [vmem:[#allocation3 + $0x188] sm:$0xff]
      %v3110 = vld [vmem:[#allocation3 + $0x190] sm:$0xff]
      %v3111 = vld [vmem:[#allocation3 + $0x198] sm:$0xff]
      %v3112 = vld [vmem:[#allocation3 + $0x1a0] sm:$0xff]
      %v3113 = vld [vmem:[#allocation3 + $0x1a8] sm:$0xff]
      %v3114 = vld [vmem:[#allocation3 + $0x1b0] sm:$0xff]
      %v3115 = vld [vmem:[#allocation3 + $0x1b8] sm:$0xff]
      %v3116 = vld [vmem:[#allocation3 + $0x1c0] sm:$0xff]
      %v3117 = vld [vmem:[#allocation3 + $0x1c8] sm:$0xff]
      %v3118 = vld [vmem:[#allocation3 + $0x1d0] sm:$0xff]
      %v3119 = vld [vmem:[#allocation3 + $0x1d8] sm:$0xff]
      %v3120 = vld [vmem:[#allocation3 + $0x1e0] sm:$0xff]
      %v3121 = vld [vmem:[#allocation3 + $0x1e8] sm:$0xff]
      %v3122 = vld [vmem:[#allocation3 + $0x1f0] sm:$0xff]
      %v3123 = vld [vmem:[#allocation3 + $0x1f8] sm:$0xff]
      %v3124 = vld [vmem:[#allocation3 + $0x200] sm:$0xff]
      %v3125 = vld [vmem:[#allocation3 + $0x208] sm:$0xff]
      %v3126 = vld [vmem:[#allocation3 + $0x210] sm:$0xff]
      %v3127 = vld [vmem:[#allocation3 + $0x218] sm:$0xff]
      %v3128 = vld [vmem:[#allocation3 + $0x220] sm:$0xff]
      %v3129 = vld [vmem:[#allocation3 + $0x228] sm:$0xff]
      %v3130 = vld [vmem:[#allocation3 + $0x230] sm:$0xff]
      %v3131 = vld [vmem:[#allocation3 + $0x238] sm:$0xff]
      %v3132 = vld [vmem:[#allocation3 + $0x240] sm:$0xff]
      %v3133 = vld [vmem:[#allocation3 + $0x248] sm:$0xff]
      %v3134 = vld [vmem:[#allocation3 + $0x250] sm:$0xff]
      %v3135 = vld [vmem:[#allocation3 + $0x258] sm:$0xff]
      %v3136 = vld [vmem:[#allocation3 + $0x260] sm:$0xff]
      %v3137 = vld [vmem:[#allocation3 + $0x268] sm:$0xff]
      %v3138 = vld [vmem:[#allocation3 + $0x270] sm:$0xff]
      %v3139 = vld [vmem:[#allocation3 + $0x278] sm:$0xff]
      %v3140 = vld [vmem:[#allocation3 + $0x280] sm:$0xff]
      %v3141 = vld [vmem:[#allocation3 + $0x288] sm:$0xff]
      %v3142 = vld [vmem:[#allocation3 + $0x290] sm:$0xff]
      %v3143 = vld [vmem:[#allocation3 + $0x298] sm:$0xff]
      %v3144 = vld [vmem:[#allocation3 + $0x2a0] sm:$0xff]
      %v3145 = vld [vmem:[#allocation3 + $0x2a8] sm:$0xff]
      %v3146 = vld [vmem:[#allocation3 + $0x2b0] sm:$0xff]
      %v3147 = vld [vmem:[#allocation3 + $0x2b8] sm:$0xff]
      %v3148 = vld [vmem:[#allocation3 + $0x2c0] sm:$0xff]
      %v3149 = vld [vmem:[#allocation3 + $0x2c8] sm:$0xff]
      %v3150 = vld [vmem:[#allocation3 + $0x2d0] sm:$0xff]
      %v3151 = vld [vmem:[#allocation3 + $0x2d8] sm:$0xff]
      %v3152 = vld [vmem:[#allocation3 + $0x2e0] sm:$0xff]
      %v3153 = vld [vmem:[#allocation3 + $0x2e8] sm:$0xff]
      %v3154 = vld [vmem:[#allocation3 + $0x2f0] sm:$0xff]
      %v3155 = vld [vmem:[#allocation3 + $0x2f8] sm:$0xff]
      %v3156 = vld [vmem:[#allocation3 + $0x300] sm:$0xff]
      %v3157 = vld [vmem:[#allocation3 + $0x308] sm:$0xff]
      %v3158 = vld [vmem:[#allocation3 + $0x310] sm:$0xff]
      %v3159 = vld [vmem:[#allocation3 + $0x318] sm:$0xff]
      %v3160 = vld [vmem:[#allocation3 + $0x320] sm:$0xff]
      %v3161 = vld [vmem:[#allocation3 + $0x328] sm:$0xff]
      %v3162 = vld [vmem:[#allocation3 + $0x330] sm:$0xff]
      %v3163 = vld [vmem:[#allocation3 + $0x338] sm:$0xff]
      %v3164 = vld [vmem:[#allocation3 + $0x340] sm:$0xff]
      %v3165 = vld [vmem:[#allocation3 + $0x348] sm:$0xff]
      %v3166 = vld [vmem:[#allocation3 + $0x350] sm:$0xff]
      %v3167 = vld [vmem:[#allocation3 + $0x358] sm:$0xff]
      %v3168 = vld [vmem:[#allocation3 + $0x360] sm:$0xff]
      %v3169 = vld [vmem:[#allocation3 + $0x368] sm:$0xff]
      %v3170 = vld [vmem:[#allocation3 + $0x370] sm:$0xff]
      %v3171 = vld [vmem:[#allocation3 + $0x378] sm:$0xff]
      %v3172 = vld [vmem:[#allocation3 + $0x380] sm:$0xff]
      %v3173 = vld [vmem:[#allocation3 + $0x388] sm:$0xff]
      %v3174 = vld [vmem:[#allocation3 + $0x390] sm:$0xff]
      %v3175 = vld [vmem:[#allocation3 + $0x398] sm:$0xff]
      %v3176 = vld [vmem:[#allocation3 + $0x3a0] sm:$0xff]
      %v3177 = vld [vmem:[#allocation3 + $0x3a8] sm:$0xff]
      %v3178 = vld [vmem:[#allocation3 + $0x3b0] sm:$0xff]
      %v3179 = vld [vmem:[#allocation3 + $0x3b8] sm:$0xff]
      %v3180 = vld [vmem:[#allocation3 + $0x3c0] sm:$0xff]
      %v3181 = vld [vmem:[#allocation3 + $0x3c8] sm:$0xff]
      %v3182 = vld [vmem:[#allocation3 + $0x3d0] sm:$0xff]
      %v3183 = vld [vmem:[#allocation3 + $0x3d8] sm:$0xff]
      %v3184 = vld [vmem:[#allocation3 + $0x3e0] sm:$0xff]
      %v3185 = vld [vmem:[#allocation3 + $0x3e8] sm:$0xff]
      %v3186 = vld [vmem:[#allocation3 + $0x3f0] sm:$0xff]
      %v3187 = vld [vmem:[#allocation3 + $0x3f8] sm:$0xff]
      %v3188 = vld [vmem:[#allocation3 + $0x400] sm:$0xff]
      %v3189 = vld [vmem:[#allocation3 + $0x408] sm:$0xff]
      %v3190 = vld [vmem:[#allocation3 + $0x410] sm:$0xff]
      %v3191 = vld [vmem:[#allocation3 + $0x418] sm:$0xff]
      %v3192 = vld [vmem:[#allocation3 + $0x420] sm:$0xff]
      %v3193 = vld [vmem:[#allocation3 + $0x428] sm:$0xff]
      %v3194 = vld [vmem:[#allocation3 + $0x430] sm:$0xff]
      %v3195 = vld [vmem:[#allocation3 + $0x438] sm:$0xff]
      %v3196 = vld [vmem:[#allocation3 + $0x440] sm:$0xff]
      %v3197 = vld [vmem:[#allocation3 + $0x448] sm:$0xff]
      %v3198 = vld [vmem:[#allocation3 + $0x450] sm:$0xff]
      %v3199 = vld [vmem:[#allocation3 + $0x458] sm:$0xff]
      %v3200 = vld [vmem:[#allocation3 + $0x460] sm:$0xff]
      %v3201 = vld [vmem:[#allocation3 + $0x468] sm:$0xff]
      %v3202 = vld [vmem:[#allocation3 + $0x470] sm:$0xff]
      %v3203 = vld [vmem:[#allocation3 + $0x478] sm:$0xff]
      %v3204 = vld [vmem:[%s4] sm:$0xf]
      %v3205 = vld [vmem:[%s4 + $0x4] sm:$0xf]
      %v3206 = vld [vmem:[%s4 + $0x8] sm:$0xf]
      %v3207 = vld [vmem:[%s4 + $0xc] sm:$0xf]
      %v3208 = vld [vmem:[%s4 + $0x10] sm:$0xf]
      %v3209 = vld [vmem:[%s4 + $0x14] sm:$0xf]
      %v3210 = vld [vmem:[%s4 + $0x18] sm:$0xf]
      %v3211 = vld [vmem:[%s4 + $0x1c] sm:$0xf]
      %v3212 = vld [vmem:[%s4 + $0x20] sm:$0xf]
      %v3213 = vld [vmem:[%s4 + $0x24] sm:$0xf]
      %v3214 = vld [vmem:[%s4 + $0x28] sm:$0xf]
      %v3215 = vld [vmem:[%s4 + $0x2c] sm:$0xf]
      %v3216 = vld [vmem:[%s4 + $0x30] sm:$0xf]
      %v3217 = vld [vmem:[%s4 + $0x34] sm:$0xf]
      %v3218 = vld [vmem:[%s4 + $0x38] sm:$0xf]
      %v3219 = vld [vmem:[%s4 + $0x3c] sm:$0xf]
      %v3220 = vld [vmem:[%s4 + $0x40] sm:$0xf]
      %v3221 = vld [vmem:[%s4 + $0x44] sm:$0xf]
      %v3222 = vld [vmem:[%s4 + $0x48] sm:$0xf]
      %v3223 = vld [vmem:[%s4 + $0x4c] sm:$0xf]
      %v3224 = vld [vmem:[%s4 + $0x50] sm:$0xf]
      %v3225 = vld [vmem:[%s4 + $0x54] sm:$0xf]
      %v3226 = vld [vmem:[%s4 + $0x58] sm:$0xf]
      %v3227 = vld [vmem:[%s4 + $0x5c] sm:$0xf]
      %v3228 = vld [vmem:[%s4 + $0x60] sm:$0xf]
      %v3229 = vld [vmem:[%s4 + $0x64] sm:$0xf]
      %v3230 = vld [vmem:[%s4 + $0x68] sm:$0xf]
      %v3231 = vld [vmem:[%s4 + $0x6c] sm:$0xf]
      %v3232 = vld [vmem:[%s4 + $0x70] sm:$0xf]
      %v3233 = vld [vmem:[%s4 + $0x74] sm:$0xf]
      %v3234 = vld [vmem:[%s4 + $0x78] sm:$0xf]
      %v3235 = vld [vmem:[%s4 + $0x7c] sm:$0xf]
      %v3236 = vld [vmem:[%s4 + $0x80] sm:$0xf]
      %v3237 = vld [vmem:[%s4 + $0x84] sm:$0xf]
      %v3238 = vld [vmem:[%s4 + $0x88] sm:$0xf]
      %v3239 = vld [vmem:[%s4 + $0x8c] sm:$0xf]
      %v3240 = vld [vmem:[%s4 + $0x90] sm:$0xf]
      %v3241 = vld [vmem:[%s4 + $0x94] sm:$0xf]
      %v3242 = vld [vmem:[%s4 + $0x98] sm:$0xf]
      %v3243 = vld [vmem:[%s4 + $0x9c] sm:$0xf]
      %v3244 = vld [vmem:[%s4 + $0xa0] sm:$0xf]
      %v3245 = vld [vmem:[%s4 + $0xa4] sm:$0xf]
      %v3246 = vld [vmem:[%s4 + $0xa8] sm:$0xf]
      %v3247 = vld [vmem:[%s4 + $0xac] sm:$0xf]
      %v3248 = vld [vmem:[%s4 + $0xb0] sm:$0xf]
      %v3249 = vld [vmem:[%s4 + $0xb4] sm:$0xf]
      %v3250 = vld [vmem:[%s4 + $0xb8] sm:$0xf]
      %v3251 = vld [vmem:[%s4 + $0xbc] sm:$0xf]
      %v3252 = vld [vmem:[%s4 + $0xc0] sm:$0xf]
      %v3253 = vld [vmem:[%s4 + $0xc4] sm:$0xf]
      %v3254 = vld [vmem:[%s4 + $0xc8] sm:$0xf]
      %v3255 = vld [vmem:[%s4 + $0xcc] sm:$0xf]
      %v3256 = vld [vmem:[%s4 + $0xd0] sm:$0xf]
      %v3257 = vld [vmem:[%s4 + $0xd4] sm:$0xf]
      %v3258 = vld [vmem:[%s4 + $0xd8] sm:$0xf]
      %v3259 = vld [vmem:[%s4 + $0xdc] sm:$0xf]
      %v3260 = vld [vmem:[%s4 + $0xe0] sm:$0xf]
      %v3261 = vld [vmem:[%s4 + $0xe4] sm:$0xf]
      %v3262 = vld [vmem:[%s4 + $0xe8] sm:$0xf]
      %v3263 = vld [vmem:[%s4 + $0xec] sm:$0xf]
      %v3264 = vld [vmem:[%s4 + $0xf0] sm:$0xf]
      %v3265 = vld [vmem:[%s4 + $0xf4] sm:$0xf]
      %v3266 = vld [vmem:[%s4 + $0xf8] sm:$0xf]
      %v3267 = vld [vmem:[%s4 + $0xfc] sm:$0xf]
      %v3268 = vld [vmem:[%s4 + $0x100] sm:$0xf]
      %v3269 = vld [vmem:[%s4 + $0x104] sm:$0xf]
      %v3270 = vld [vmem:[%s4 + $0x108] sm:$0xf]
      %v3271 = vld [vmem:[%s4 + $0x10c] sm:$0xf]
      %v3272 = vld [vmem:[%s4 + $0x110] sm:$0xf]
      %v3273 = vld [vmem:[%s4 + $0x114] sm:$0xf]
      %v3274 = vld [vmem:[%s4 + $0x118] sm:$0xf]
      %v3275 = vld [vmem:[%s4 + $0x11c] sm:$0xf]
      %v3276 = vld [vmem:[%s4 + $0x120] sm:$0xf]
      %v3277 = vld [vmem:[%s4 + $0x124] sm:$0xf]
      %v3278 = vld [vmem:[%s4 + $0x128] sm:$0xf]
      %v3279 = vld [vmem:[%s4 + $0x12c] sm:$0xf]
      %v3280 = vld [vmem:[%s4 + $0x130] sm:$0xf]
      %v3281 = vld [vmem:[%s4 + $0x134] sm:$0xf]
      %v3282 = vld [vmem:[%s4 + $0x138] sm:$0xf]
      %v3283 = vld [vmem:[%s4 + $0x13c] sm:$0xf]
      %v3284 = vld [vmem:[%s4 + $0x140] sm:$0xf]
      %v3285 = vld [vmem:[%s4 + $0x144] sm:$0xf]
      %v3286 = vld [vmem:[%s4 + $0x148] sm:$0xf]
      %v3287 = vld [vmem:[%s4 + $0x14c] sm:$0xf]
      %v3288 = vld [vmem:[%s4 + $0x150] sm:$0xf]
      %v3289 = vld [vmem:[%s4 + $0x154] sm:$0xf]
      %v3290 = vld [vmem:[%s4 + $0x158] sm:$0xf]
      %v3291 = vld [vmem:[%s4 + $0x15c] sm:$0xf]
      %v3292 = vld [vmem:[%s4 + $0x160] sm:$0xf]
      %v3293 = vld [vmem:[%s4 + $0x164] sm:$0xf]
      %v3294 = vld [vmem:[%s4 + $0x168] sm:$0xf]
      %v3295 = vld [vmem:[%s4 + $0x16c] sm:$0xf]
      %v3296 = vld [vmem:[%s4 + $0x170] sm:$0xf]
      %v3297 = vld [vmem:[%s4 + $0x174] sm:$0xf]
      %v3298 = vld [vmem:[%s4 + $0x178] sm:$0xf]
      %v3299 = vld [vmem:[%s4 + $0x17c] sm:$0xf]
      %v3300 = vld [vmem:[%s4 + $0x180] sm:$0xf]
      %v3301 = vld [vmem:[%s4 + $0x184] sm:$0xf]
      %v3302 = vld [vmem:[%s4 + $0x188] sm:$0xf]
      %v3303 = vld [vmem:[%s4 + $0x18c] sm:$0xf]
      %v3304 = vld [vmem:[%s4 + $0x190] sm:$0xf]
      %v3305 = vld [vmem:[%s4 + $0x194] sm:$0xf]
      %v3306 = vld [vmem:[%s4 + $0x198] sm:$0xf]
      %v3307 = vld [vmem:[%s4 + $0x19c] sm:$0xf]
      %v3308 = vld [vmem:[%s4 + $0x1a0] sm:$0xf]
      %v3309 = vld [vmem:[%s4 + $0x1a4] sm:$0xf]
      %v3310 = vld [vmem:[%s4 + $0x1a8] sm:$0xf]
      %v3311 = vld [vmem:[%s4 + $0x1ac] sm:$0xf]
      %v3312 = vld [vmem:[%s4 + $0x1b0] sm:$0xf]
      %v3313 = vld [vmem:[%s4 + $0x1b4] sm:$0xf]
      %v3314 = vld [vmem:[%s4 + $0x1b8] sm:$0xf]
      %v3315 = vld [vmem:[%s4 + $0x1bc] sm:$0xf]
      %v3316 = vld [vmem:[%s4 + $0x1c0] sm:$0xf]
      %v3317 = vld [vmem:[%s4 + $0x1c4] sm:$0xf]
      %v3318 = vld [vmem:[%s4 + $0x1c8] sm:$0xf]
      %v3319 = vld [vmem:[%s4 + $0x1cc] sm:$0xf]
      %v3320 = vld [vmem:[%s4 + $0x1d0] sm:$0xf]
      %v3321 = vld [vmem:[%s4 + $0x1d4] sm:$0xf]
      %v3322 = vld [vmem:[%s4 + $0x1d8] sm:$0xf]
      %v3323 = vld [vmem:[%s4 + $0x1dc] sm:$0xf]
      %v3324 = vld [vmem:[%s4 + $0x1e0] sm:$0xf]
      %v3325 = vld [vmem:[%s4 + $0x1e4] sm:$0xf]
      %v3326 = vld [vmem:[%s4 + $0x1e8] sm:$0xf]
      %v3327 = vld [vmem:[%s4 + $0x1ec] sm:$0xf]
      %v3328 = vld [vmem:[%s4 + $0x1f0] sm:$0xf]
      %v3329 = vld [vmem:[%s4 + $0x1f4] sm:$0xf]
      %v3330 = vld [vmem:[%s4 + $0x1f8] sm:$0xf]
      %v3331 = vld [vmem:[%s4 + $0x1fc] sm:$0xf]
      %v3332 = vld [vmem:[%s4 + $0x200] sm:$0xf]
      %v3333 = vld [vmem:[%s4 + $0x204] sm:$0xf]
      %v3334 = vld [vmem:[%s4 + $0x208] sm:$0xf]
      %v3335 = vld [vmem:[%s4 + $0x20c] sm:$0xf]
      %v3336 = vld [vmem:[%s4 + $0x210] sm:$0xf]
      %v3337 = vld [vmem:[%s4 + $0x214] sm:$0xf]
      %v3338 = vld [vmem:[%s4 + $0x218] sm:$0xf]
      %v3339 = vld [vmem:[%s4 + $0x21c] sm:$0xf]
      %v3340 = vld [vmem:[%s4 + $0x220] sm:$0xf]
      %v3341 = vld [vmem:[%s4 + $0x224] sm:$0xf]
      %v3342 = vld [vmem:[%s4 + $0x228] sm:$0xf]
      %v3343 = vld [vmem:[%s4 + $0x22c] sm:$0xf]
      %v3344 = vld [vmem:[%s4 + $0x230] sm:$0xf]
      %v3345 = vld [vmem:[%s4 + $0x234] sm:$0xf]
      %v3346 = vld [vmem:[%s4 + $0x238] sm:$0xf]
      %v3347 = vld [vmem:[%s4 + $0x23c] sm:$0xf]
      %v3492 = vunpack.c.l.b16 %v3204
      %v3493 = vunpack.c.l.b16 %v3205
      %v3494 = vunpack.c.l.b16 %v3206
      %v3495 = vunpack.c.l.b16 %v3207
      %v3496 = vunpack.c.l.b16 %v3208
      %v3497 = vunpack.c.l.b16 %v3209
      %v3498 = vunpack.c.l.b16 %v3210
      %v3499 = vunpack.c.l.b16 %v3211
      %v3500 = vunpack.c.l.b16 %v3212
      %v3501 = vunpack.c.l.b16 %v3213
      %v3502 = vunpack.c.l.b16 %v3214
      %v3503 = vunpack.c.l.b16 %v3215
      %v3504 = vunpack.c.l.b16 %v3216
      %v3505 = vunpack.c.l.b16 %v3217
      %v3506 = vunpack.c.l.b16 %v3218
      %v3507 = vunpack.c.l.b16 %v3219
      %v3508 = vunpack.c.l.b16 %v3220
      %v3509 = vunpack.c.l.b16 %v3221
      %v3510 = vunpack.c.l.b16 %v3222
      %v3511 = vunpack.c.l.b16 %v3223
      %v3512 = vunpack.c.l.b16 %v3224
      %v3513 = vunpack.c.l.b16 %v3225
      %v3514 = vunpack.c.l.b16 %v3226
      %v3515 = vunpack.c.l.b16 %v3227
      %v3516 = vunpack.c.l.b16 %v3228
      %v3517 = vunpack.c.l.b16 %v3229
      %v3518 = vunpack.c.l.b16 %v3230
      %v3519 = vunpack.c.l.b16 %v3231
      %v3520 = vunpack.c.l.b16 %v3232
      %v3521 = vunpack.c.l.b16 %v3233
      %v3522 = vunpack.c.l.b16 %v3234
      %v3523 = vunpack.c.l.b16 %v3235
      %v3524 = vunpack.c.l.b16 %v3236
      %v3525 = vunpack.c.l.b16 %v3237
      %v3526 = vunpack.c.l.b16 %v3238
      %v3527 = vunpack.c.l.b16 %v3239
      %v3528 = vunpack.c.l.b16 %v3240
      %v3529 = vunpack.c.l.b16 %v3241
      %v3530 = vunpack.c.l.b16 %v3242
      %v3531 = vunpack.c.l.b16 %v3243
      %v3532 = vunpack.c.l.b16 %v3244
      %v3533 = vunpack.c.l.b16 %v3245
      %v3534 = vunpack.c.l.b16 %v3246
      %v3535 = vunpack.c.l.b16 %v3247
      %v3536 = vunpack.c.l.b16 %v3248
      %v3537 = vunpack.c.l.b16 %v3249
      %v3538 = vunpack.c.l.b16 %v3250
      %v3539 = vunpack.c.l.b16 %v3251
      %v3540 = vunpack.c.l.b16 %v3252
      %v3541 = vunpack.c.l.b16 %v3253
      %v3542 = vunpack.c.l.b16 %v3254
      %v3543 = vunpack.c.l.b16 %v3255
      %v3544 = vunpack.c.l.b16 %v3256
      %v3545 = vunpack.c.l.b16 %v3257
      %v3546 = vunpack.c.l.b16 %v3258
      %v3547 = vunpack.c.l.b16 %v3259
      %v3548 = vunpack.c.l.b16 %v3260
      %v3549 = vunpack.c.l.b16 %v3261
      %v3550 = vunpack.c.l.b16 %v3262
      %v3551 = vunpack.c.l.b16 %v3263
      %v3552 = vunpack.c.l.b16 %v3264
      %v3553 = vunpack.c.l.b16 %v3265
      %v3554 = vunpack.c.l.b16 %v3266
      %v3555 = vunpack.c.l.b16 %v3267
      %v3556 = vunpack.c.l.b16 %v3268
      %v3557 = vunpack.c.l.b16 %v3269
      %v3558 = vunpack.c.l.b16 %v3270
      %v3559 = vunpack.c.l.b16 %v3271
      %v3560 = vunpack.c.l.b16 %v3272
      %v3561 = vunpack.c.l.b16 %v3273
      %v3562 = vunpack.c.l.b16 %v3274
      %v3563 = vunpack.c.l.b16 %v3275
      %v3564 = vunpack.c.l.b16 %v3276
      %v3565 = vunpack.c.l.b16 %v3277
      %v3566 = vunpack.c.l.b16 %v3278
      %v3567 = vunpack.c.l.b16 %v3279
      %v3568 = vunpack.c.l.b16 %v3280
      %v3569 = vunpack.c.l.b16 %v3281
      %v3570 = vunpack.c.l.b16 %v3282
      %v3571 = vunpack.c.l.b16 %v3283
      %v3572 = vunpack.c.l.b16 %v3284
      %v3573 = vunpack.c.l.b16 %v3285
      %v3574 = vunpack.c.l.b16 %v3286
      %v3575 = vunpack.c.l.b16 %v3287
      %v3576 = vunpack.c.l.b16 %v3288
      %v3577 = vunpack.c.l.b16 %v3289
      %v3578 = vunpack.c.l.b16 %v3290
      %v3579 = vunpack.c.l.b16 %v3291
      %v3580 = vunpack.c.l.b16 %v3292
      %v3581 = vunpack.c.l.b16 %v3293
      %v3582 = vunpack.c.l.b16 %v3294
      %v3583 = vunpack.c.l.b16 %v3295
      %v3584 = vunpack.c.l.b16 %v3296
      %v3585 = vunpack.c.l.b16 %v3297
      %v3586 = vunpack.c.l.b16 %v3298
      %v3587 = vunpack.c.l.b16 %v3299
      %v3588 = vunpack.c.l.b16 %v3300
      %v3589 = vunpack.c.l.b16 %v3301
      %v3590 = vunpack.c.l.b16 %v3302
      %v3591 = vunpack.c.l.b16 %v3303
      %v3592 = vunpack.c.l.b16 %v3304
      %v3593 = vunpack.c.l.b16 %v3305
      %v3594 = vunpack.c.l.b16 %v3306
      %v3595 = vunpack.c.l.b16 %v3307
      %v3596 = vunpack.c.l.b16 %v3308
      %v3597 = vunpack.c.l.b16 %v3309
      %v3598 = vunpack.c.l.b16 %v3310
      %v3599 = vunpack.c.l.b16 %v3311
      %v3600 = vunpack.c.l.b16 %v3312
      %v3601 = vunpack.c.l.b16 %v3313
      %v3602 = vunpack.c.l.b16 %v3314
      %v3603 = vunpack.c.l.b16 %v3315
      %v3604 = vunpack.c.l.b16 %v3316
      %v3605 = vunpack.c.l.b16 %v3317
      %v3606 = vunpack.c.l.b16 %v3318
      %v3607 = vunpack.c.l.b16 %v3319
      %v3608 = vunpack.c.l.b16 %v3320
      %v3609 = vunpack.c.l.b16 %v3321
      %v3610 = vunpack.c.l.b16 %v3322
      %v3611 = vunpack.c.l.b16 %v3323
      %v3612 = vunpack.c.l.b16 %v3324
      %v3613 = vunpack.c.l.b16 %v3325
      %v3614 = vunpack.c.l.b16 %v3326
      %v3615 = vunpack.c.l.b16 %v3327
      %v3616 = vunpack.c.l.b16 %v3328
      %v3617 = vunpack.c.l.b16 %v3329
      %v3618 = vunpack.c.l.b16 %v3330
      %v3619 = vunpack.c.l.b16 %v3331
      %v3620 = vunpack.c.l.b16 %v3332
      %v3621 = vunpack.c.l.b16 %v3333
      %v3622 = vunpack.c.l.b16 %v3334
      %v3623 = vunpack.c.l.b16 %v3335
      %v3624 = vunpack.c.l.b16 %v3336
      %v3625 = vunpack.c.l.b16 %v3337
      %v3626 = vunpack.c.l.b16 %v3338
      %v3627 = vunpack.c.l.b16 %v3339
      %v3628 = vunpack.c.l.b16 %v3340
      %v3629 = vunpack.c.l.b16 %v3341
      %v3630 = vunpack.c.l.b16 %v3342
      %v3631 = vunpack.c.l.b16 %v3343
      %v3632 = vunpack.c.l.b16 %v3344
      %v3633 = vunpack.c.l.b16 %v3345
      %v3634 = vunpack.c.l.b16 %v3346
      %v3635 = vunpack.c.l.b16 %v3347
      %v3636 = vpack.c.b16 %v3493, %v3492
      %v3637 = vpack.c.b16 %v3495, %v3494
      %v3638 = vpack.c.b16 %v3497, %v3496
      %v3639 = vpack.c.b16 %v3499, %v3498
      %v3640 = vpack.c.b16 %v3501, %v3500
      %v3641 = vpack.c.b16 %v3503, %v3502
      %v3642 = vpack.c.b16 %v3505, %v3504
      %v3643 = vpack.c.b16 %v3507, %v3506
      %v3644 = vpack.c.b16 %v3509, %v3508
      %v3645 = vpack.c.b16 %v3511, %v3510
      %v3646 = vpack.c.b16 %v3513, %v3512
      %v3647 = vpack.c.b16 %v3515, %v3514
      %v3648 = vpack.c.b16 %v3517, %v3516
      %v3649 = vpack.c.b16 %v3519, %v3518
      %v3650 = vpack.c.b16 %v3521, %v3520
      %v3651 = vpack.c.b16 %v3523, %v3522
      %v3652 = vpack.c.b16 %v3525, %v3524
      %v3653 = vpack.c.b16 %v3527, %v3526
      %v3654 = vpack.c.b16 %v3529, %v3528
      %v3655 = vpack.c.b16 %v3531, %v3530
      %v3656 = vpack.c.b16 %v3533, %v3532
      %v3657 = vpack.c.b16 %v3535, %v3534
      %v3658 = vpack.c.b16 %v3537, %v3536
      %v3659 = vpack.c.b16 %v3539, %v3538
      %v3660 = vpack.c.b16 %v3541, %v3540
      %v3661 = vpack.c.b16 %v3543, %v3542
      %v3662 = vpack.c.b16 %v3545, %v3544
      %v3663 = vpack.c.b16 %v3547, %v3546
      %v3664 = vpack.c.b16 %v3549, %v3548
      %v3665 = vpack.c.b16 %v3551, %v3550
      %v3666 = vpack.c.b16 %v3553, %v3552
      %v3667 = vpack.c.b16 %v3555, %v3554
      %v3668 = vpack.c.b16 %v3557, %v3556
      %v3669 = vpack.c.b16 %v3559, %v3558
      %v3670 = vpack.c.b16 %v3561, %v3560
      %v3671 = vpack.c.b16 %v3563, %v3562
      %v3672 = vpack.c.b16 %v3565, %v3564
      %v3673 = vpack.c.b16 %v3567, %v3566
      %v3674 = vpack.c.b16 %v3569, %v3568
      %v3675 = vpack.c.b16 %v3571, %v3570
      %v3676 = vpack.c.b16 %v3573, %v3572
      %v3677 = vpack.c.b16 %v3575, %v3574
      %v3678 = vpack.c.b16 %v3577, %v3576
      %v3679 = vpack.c.b16 %v3579, %v3578
      %v3680 = vpack.c.b16 %v3581, %v3580
      %v3681 = vpack.c.b16 %v3583, %v3582
      %v3682 = vpack.c.b16 %v3585, %v3584
      %v3683 = vpack.c.b16 %v3587, %v3586
      %v3684 = vpack.c.b16 %v3589, %v3588
      %v3685 = vpack.c.b16 %v3591, %v3590
      %v3686 = vpack.c.b16 %v3593, %v3592
      %v3687 = vpack.c.b16 %v3595, %v3594
      %v3688 = vpack.c.b16 %v3597, %v3596
      %v3689 = vpack.c.b16 %v3599, %v3598
      %v3690 = vpack.c.b16 %v3601, %v3600
      %v3691 = vpack.c.b16 %v3603, %v3602
      %v3692 = vpack.c.b16 %v3605, %v3604
      %v3693 = vpack.c.b16 %v3607, %v3606
      %v3694 = vpack.c.b16 %v3609, %v3608
      %v3695 = vpack.c.b16 %v3611, %v3610
      %v3696 = vpack.c.b16 %v3613, %v3612
      %v3697 = vpack.c.b16 %v3615, %v3614
      %v3698 = vpack.c.b16 %v3617, %v3616
      %v3699 = vpack.c.b16 %v3619, %v3618
      %v3700 = vpack.c.b16 %v3621, %v3620
      %v3701 = vpack.c.b16 %v3623, %v3622
      %v3702 = vpack.c.b16 %v3625, %v3624
      %v3703 = vpack.c.b16 %v3627, %v3626
      %v3704 = vpack.c.b16 %v3629, %v3628
      %v3705 = vpack.c.b16 %v3631, %v3630
      %v3706 = vpack.c.b16 %v3633, %v3632
      %v3707 = vpack.c.b16 %v3635, %v3634
      %3780 = vmatprep.subr.bf16.mxu0 0
      %3781 = vmatpush1.bf16.msra.mxu0 %v3636
      %3782 = vmatprep.subr.bf16.mxu0 0
      %3783 = vmatpush1.bf16.msra.mxu0 %v3637
      %3784 = vmatprep.subr.bf16.mxu0 0
      %3785 = vmatpush1.bf16.msra.mxu0 %v3638
      %3786 = vmatprep.subr.bf16.mxu0 0
      %3787 = vmatpush1.bf16.msra.mxu0 %v3639
      %3788 = vmatprep.subr.bf16.mxu0 0
      %3789 = vmatpush1.bf16.msra.mxu0 %v3640
      %3790 = vmatprep.subr.bf16.mxu0 0
      %3791 = vmatpush1.bf16.msra.mxu0 %v3641
      %3792 = vmatprep.subr.bf16.mxu0 0
      %3793 = vmatpush1.bf16.msra.mxu0 %v3642
      %3794 = vmatprep.subr.bf16.mxu0 0
      %3795 = vmatpush1.bf16.msra.mxu0 %v3643
      %3796 = vmatprep.subr.bf16.mxu0 0
      %3797 = vmatpush1.bf16.msra.mxu0 %v3644
      %3798 = vmatprep.subr.bf16.mxu0 0
      %3799 = vmatpush1.bf16.msra.mxu0 %v3645
      %3800 = vmatprep.subr.bf16.mxu0 0
      %3801 = vmatpush1.bf16.msra.mxu0 %v3646
      %3802 = vmatprep.subr.bf16.mxu0 0
      %3803 = vmatpush1.bf16.msra.mxu0 %v3647
      %3804 = vmatprep.subr.bf16.mxu0 0
      %3805 = vmatpush1.bf16.msra.mxu0 %v3648
      %3806 = vmatprep.subr.bf16.mxu0 0
      %3807 = vmatpush1.bf16.msra.mxu0 %v3649
      %3808 = vmatprep.subr.bf16.mxu0 0
      %3809 = vmatpush1.bf16.msra.mxu0 %v3650
      %3810 = vmatprep.subr.bf16.mxu0 0
      %3811 = vmatpush1.bf16.msra.mxu0 %v3651
      %3812 = vmatprep.mubr.bf16.mxu0 %v3061
      %3813 = vmatmul.mubr.bf16.gmra.mrb[0].mxu0 %v3060
      %v3814 = vpop.f32.mrb[0].mxu0
      %v3815 = vadd.f32 0.0, %v3814
      %v3816 = vpop.f32.mrb[0].mxu0
      %v3817 = vpop.f32.mrb[0].mxu0
      %v3818 = vadd.f32 0.0, %v3817
      %v3819 = vpop.f32.mrb[0].mxu0
      %3820 = vmatprep.mubr.bf16.mxu0 %v3070
      %3821 = vmatmul.mubr.bf16.gmra.mrb[0].mxu0 %v3069
      %v3822 = vpop.f32.mrb[0].mxu0
      %v3823 = vadd.f32 0.0, %v3822
      %v3824 = vpop.f32.mrb[0].mxu0
      %v3825 = vpop.f32.mrb[0].mxu0
      %v3826 = vadd.f32 0.0, %v3825
      %v3827 = vpop.f32.mrb[0].mxu0
      %3828 = vmatprep.mubr.bf16.mxu0 %v3079
      %3829 = vmatmul.mubr.bf16.gmra.mrb[0].mxu0 %v3078
      %v3830 = vpop.f32.mrb[0].mxu0
      %v3831 = vadd.f32 0.0, %v3830
      %v3832 = vpop.f32.mrb[0].mxu0
      %v3833 = vpop.f32.mrb[0].mxu0
      %v3834 = vadd.f32 0.0, %v3833
      %v3835 = vpop.f32.mrb[0].mxu0
      %3836 = vmatprep.mubr.bf16.mxu0 %v3088
      %3837 = vmatmul.mubr.bf16.gmra.mrb[0].mxu0 %v3087
      %v3838 = vpop.f32.mrb[0].mxu0
      %v3839 = vadd.f32 0.0, %v3838
      %v3840 = vpop.f32.mrb[0].mxu0
      %v3841 = vpop.f32.mrb[0].mxu0
      %v3842 = vadd.f32 0.0, %v3841
      %v3843 = vpop.f32.mrb[0].mxu0
      %3844 = vmatprep.mubr.bf16.mxu0 %v3097
      %3845 = vmatmul.mubr.bf16.gmra.mrb[0].mxu0 %v3096
      %v3846 = vpop.f32.mrb[0].mxu0
      %v3847 = vadd.f32 0.0, %v3846
      %v3848 = vpop.f32.mrb[0].mxu0
      %v3849 = vpop.f32.mrb[0].mxu0
      %v3850 = vadd.f32 0.0, %v3849
      %v3851 = vpop.f32.mrb[0].mxu0
      %3852 = vmatprep.mubr.bf16.mxu0 %v3106
      %3853 = vmatmul.mubr.bf16.gmra.mrb[0].mxu0 %v3105
      %v3854 = vpop.f32.mrb[0].mxu0
      %v3855 = vadd.f32 0.0, %v3854
      %v3856 = vpop.f32.mrb[0].mxu0
      %v3857 = vpop.f32.mrb[0].mxu0
      %v3858 = vadd.f32 0.0, %v3857
      %v3859 = vpop.f32.mrb[0].mxu0
      %3860 = vmatprep.mubr.bf16.mxu0 %v3115
      %3861 = vmatmul.mubr.bf16.gmra.mrb[0].mxu0 %v3114
      %v3862 = vpop.f32.mrb[0].mxu0
      %v3863 = vadd.f32 0.0, %v3862
      %v3864 = vpop.f32.mrb[0].mxu0
      %v3865 = vpop.f32.mrb[0].mxu0
      %v3866 = vadd.f32 0.0, %v3865
      %v3867 = vpop.f32.mrb[0].mxu0
      %3868 = vmatprep.mubr.bf16.mxu0 %v3124
      %3869 = vmatmul.mubr.bf16.gmra.mrb[0].mxu0 %v3123
      %v3870 = vpop.f32.mrb[0].mxu0
      %v3871 = vadd.f32 0.0, %v3870
      %v3872 = vpop.f32.mrb[0].mxu0
      %v3873 = vpop.f32.mrb[0].mxu0
      %v3874 = vadd.f32 0.0, %v3873
      %v3875 = vpop.f32.mrb[0].mxu0
      %3876 = vmatprep.mubr.bf16.mxu0 %v3133
      %3877 = vmatmul.mubr.bf16.gmra.mrb[0].mxu0 %v3132
      %v3878 = vpop.f32.mrb[0].mxu0
      %v3879 = vadd.f32 0.0, %v3878
      %v3880 = vpop.f32.mrb[0].mxu0
      %v3881 = vpop.f32.mrb[0].mxu0
      %v3882 = vadd.f32 0.0, %v3881
      %v3883 = vpop.f32.mrb[0].mxu0
      %3884 = vmatprep.mubr.bf16.mxu0 %v3142
      %3885 = vmatmul.mubr.bf16.gmra.mrb[0].mxu0 %v3141
      %v3886 = vpop.f32.mrb[0].mxu0
      %v3887 = vadd.f32 0.0, %v3886
      %v3888 = vpop.f32.mrb[0].mxu0
      %v3889 = vpop.f32.mrb[0].mxu0
      %v3890 = vadd.f32 0.0, %v3889
      %v3891 = vpop.f32.mrb[0].mxu0
      %3892 = vmatprep.mubr.bf16.mxu0 %v3151
      %3893 = vmatmul.mubr.bf16.gmra.mrb[0].mxu0 %v3150
      %v3894 = vpop.f32.mrb[0].mxu0
      %v3895 = vadd.f32 0.0, %v3894
      %v3896 = vpop.f32.mrb[0].mxu0
      %v3897 = vpop.f32.mrb[0].mxu0
      %v3898 = vadd.f32 0.0, %v3897
      %v3899 = vpop.f32.mrb[0].mxu0
      %3900 = vmatprep.mubr.bf16.mxu0 %v3160
      %3901 = vmatmul.mubr.bf16.gmra.mrb[0].mxu0 %v3159
      %v3902 = vpop.f32.mrb[0].mxu0
      %v3903 = vadd.f32 0.0, %v3902
      %v3904 = vpop.f32.mrb[0].mxu0
      %v3905 = vpop.f32.mrb[0].mxu0
      %v3906 = vadd.f32 0.0, %v3905
      %v3907 = vpop.f32.mrb[0].mxu0
      %3908 = vmatprep.mubr.bf16.mxu0 %v3169
      %3909 = vmatmul.mubr.bf16.gmra.mrb[0].mxu0 %v3168
      %v3910 = vpop.f32.mrb[0].mxu0
      %v3911 = vadd.f32 0.0, %v3910
      %v3912 = vpop.f32.mrb[0].mxu0
      %v3913 = vpop.f32.mrb[0].mxu0
      %v3914 = vadd.f32 0.0, %v3913
      %v3915 = vpop.f32.mrb[0].mxu0
      %3916 = vmatprep.mubr.bf16.mxu0 %v3178
      %3917 = vmatmul.mubr.bf16.gmra.mrb[0].mxu0 %v3177
      %v3918 = vpop.f32.mrb[0].mxu0
      %v3919 = vadd.f32 0.0, %v3918
      %v3920 = vpop.f32.mrb[0].mxu0
      %v3921 = vpop.f32.mrb[0].mxu0
      %v3922 = vadd.f32 0.0, %v3921
      %v3923 = vpop.f32.mrb[0].mxu0
      %3924 = vmatprep.mubr.bf16.mxu0 %v3187
      %3925 = vmatmul.mubr.bf16.gmra.mrb[0].mxu0 %v3186
      %v3926 = vpop.f32.mrb[0].mxu0
      %v3927 = vadd.f32 0.0, %v3926
      %v3928 = vpop.f32.mrb[0].mxu0
      %v3929 = vpop.f32.mrb[0].mxu0
      %v3930 = vadd.f32 0.0, %v3929
      %v3931 = vpop.f32.mrb[0].mxu0
      %3932 = vmatprep.mubr.bf16.mxu0 %v3196
      %3933 = vmatmul.mubr.bf16.gmra.mrb[0].mxu0 %v3195
      %v3934 = vpop.f32.mrb[0].mxu0
      %v3935 = vadd.f32 0.0, %v3934
      %v3936 = vpop.f32.mrb[0].mxu0
      %v3937 = vpop.f32.mrb[0].mxu0
      %v3938 = vadd.f32 0.0, %v3937
      %v3939 = vpop.f32.mrb[0].mxu0
      %3940 = vdwg.mxu0
      %3941 = vmatprep.subr.bf16.mxu0 0
      %3942 = vmatpush1.bf16.msra.mxu0 %v3652
      %3943 = vmatprep.subr.bf16.mxu0 0
      %3944 = vmatpush1.bf16.msra.mxu0 %v3653
      %3945 = vmatprep.subr.bf16.mxu0 0
      %3946 = vmatpush1.bf16.msra.mxu0 %v3654
      %3947 = vmatprep.subr.bf16.mxu0 0
      %3948 = vmatpush1.bf16.msra.mxu0 %v3655
      %3949 = vmatprep.subr.bf16.mxu0 0
      %3950 = vmatpush1.bf16.msra.mxu0 %v3656
      %3951 = vmatprep.subr.bf16.mxu0 0
      %3952 = vmatpush1.bf16.msra.mxu0 %v3657
      %3953 = vmatprep.subr.bf16.mxu0 0
      %3954 = vmatpush1.bf16.msra.mxu0 %v3658
      %3955 = vmatprep.subr.bf16.mxu0 0
      %3956 = vmatpush1.bf16.msra.mxu0 %v3659
      %3957 = vmatprep.subr.bf16.mxu0 0
      %3958 = vmatpush1.bf16.msra.mxu0 %v3660
      %3959 = vmatprep.subr.bf16.mxu0 0
      %3960 = vmatpush1.bf16.msra.mxu0 %v3661
      %3961 = vmatprep.subr.bf16.mxu0 0
      %3962 = vmatpush1.bf16.msra.mxu0 %v3662
      %3963 = vmatprep.subr.bf16.mxu0 0
      %3964 = vmatpush1.bf16.msra.mxu0 %v3663
      %3965 = vmatprep.subr.bf16.mxu0 0
      %3966 = vmatpush1.bf16.msra.mxu0 %v3664
      %3967 = vmatprep.subr.bf16.mxu0 0
      %3968 = vmatpush1.bf16.msra.mxu0 %v3665
      %3969 = vmatprep.subr.bf16.mxu0 0
      %3970 = vmatpush1.bf16.msra.mxu0 %v3666
      %3971 = vmatprep.subr.bf16.mxu0 0
      %3972 = vmatpush1.bf16.msra.mxu0 %v3667
      %3973 = vmatprep.mubr.bf16.mxu0 %v3063
      %3974 = vmatmul.mubr.bf16.gmra.mrb[0].mxu0 %v3062
      %v3975 = vpop.f32.mrb[0].mxu0
      %v3976 = vadd.f32 %v3815, %v3975
      %v3977 = vpop.f32.mrb[0].mxu0
      %v3978 = vpop.f32.mrb[0].mxu0
      %v3979 = vadd.f32 %v3818, %v3978
      %v3980 = vpop.f32.mrb[0].mxu0
      %3981 = vmatprep.mubr.bf16.mxu0 %v3072
      %3982 = vmatmul.mubr.bf16.gmra.mrb[0].mxu0 %v3071
      %v3983 = vpop.f32.mrb[0].mxu0
      %v3984 = vadd.f32 %v3823, %v3983
      %v3985 = vpop.f32.mrb[0].mxu0
      %v3986 = vpop.f32.mrb[0].mxu0
      %v3987 = vadd.f32 %v3826, %v3986
      %v3988 = vpop.f32.mrb[0].mxu0
      %3989 = vmatprep.mubr.bf16.mxu0 %v3081
      %3990 = vmatmul.mubr.bf16.gmra.mrb[0].mxu0 %v3080
      %v3991 = vpop.f32.mrb[0].mxu0
      %v3992 = vadd.f32 %v3831, %v3991
      %v3993 = vpop.f32.mrb[0].mxu0
      %v3994 = vpop.f32.mrb[0].mxu0
      %v3995 = vadd.f32 %v3834, %v3994
      %v3996 = vpop.f32.mrb[0].mxu0
      %3997 = vmatprep.mubr.bf16.mxu0 %v3090
      %3998 = vmatmul.mubr.bf16.gmra.mrb[0].mxu0 %v3089
      %v3999 = vpop.f32.mrb[0].mxu0
      %v4000 = vadd.f32 %v3839, %v3999
      %v4001 = vpop.f32.mrb[0].mxu0
      %v4002 = vpop.f32.mrb[0].mxu0
      %v4003 = vadd.f32 %v3842, %v4002
      %v4004 = vpop.f32.mrb[0].mxu0
      %4005 = vmatprep.mubr.bf16.mxu0 %v3099
      %4006 = vmatmul.mubr.bf16.gmra.mrb[0].mxu0 %v3098
      %v4007 = vpop.f32.mrb[0].mxu0
      %v4008 = vadd.f32 %v3847, %v4007
      %v4009 = vpop.f32.mrb[0].mxu0
      %v4010 = vpop.f32.mrb[0].mxu0
      %v4011 = vadd.f32 %v3850, %v4010
      %v4012 = vpop.f32.mrb[0].mxu0
      %4013 = vmatprep.mubr.bf16.mxu0 %v3108
      %4014 = vmatmul.mubr.bf16.gmra.mrb[0].mxu0 %v3107
      %v4015 = vpop.f32.mrb[0].mxu0
      %v4016 = vadd.f32 %v3855, %v4015
      %v4017 = vpop.f32.mrb[0].mxu0
      %v4018 = vpop.f32.mrb[0].mxu0
      %v4019 = vadd.f32 %v3858, %v4018
      %v4020 = vpop.f32.mrb[0].mxu0
      %4021 = vmatprep.mubr.bf16.mxu0 %v3117
      %4022 = vmatmul.mubr.bf16.gmra.mrb[0].mxu0 %v3116
      %v4023 = vpop.f32.mrb[0].mxu0
      %v4024 = vadd.f32 %v3863, %v4023
      %v4025 = vpop.f32.mrb[0].mxu0
      %v4026 = vpop.f32.mrb[0].mxu0
      %v4027 = vadd.f32 %v3866, %v4026
      %v4028 = vpop.f32.mrb[0].mxu0
      %4029 = vmatprep.mubr.bf16.mxu0 %v3126
      %4030 = vmatmul.mubr.bf16.gmra.mrb[0].mxu0 %v3125
      %v4031 = vpop.f32.mrb[0].mxu0
      %v4032 = vadd.f32 %v3871, %v4031
      %v4033 = vpop.f32.mrb[0].mxu0
      %v4034 = vpop.f32.mrb[0].mxu0
      %v4035 = vadd.f32 %v3874, %v4034
      %v4036 = vpop.f32.mrb[0].mxu0
      %4037 = vmatprep.mubr.bf16.mxu0 %v3135
      %4038 = vmatmul.mubr.bf16.gmra.mrb[0].mxu0 %v3134
      %v4039 = vpop.f32.mrb[0].mxu0
      %v4040 = vadd.f32 %v3879, %v4039
      %v4041 = vpop.f32.mrb[0].mxu0
      %v4042 = vpop.f32.mrb[0].mxu0
      %v4043 = vadd.f32 %v3882, %v4042
      %v4044 = vpop.f32.mrb[0].mxu0
      %4045 = vmatprep.mubr.bf16.mxu0 %v3144
      %4046 = vmatmul.mubr.bf16.gmra.mrb[0].mxu0 %v3143
      %v4047 = vpop.f32.mrb[0].mxu0
      %v4048 = vadd.f32 %v3887, %v4047
      %v4049 = vpop.f32.mrb[0].mxu0
      %v4050 = vpop.f32.mrb[0].mxu0
      %v4051 = vadd.f32 %v3890, %v4050
      %v4052 = vpop.f32.mrb[0].mxu0
      %4053 = vmatprep.mubr.bf16.mxu0 %v3153
      %4054 = vmatmul.mubr.bf16.gmra.mrb[0].mxu0 %v3152
      %v4055 = vpop.f32.mrb[0].mxu0
      %v4056 = vadd.f32 %v3895, %v4055
      %v4057 = vpop.f32.mrb[0].mxu0
      %v4058 = vpop.f32.mrb[0].mxu0
      %v4059 = vadd.f32 %v3898, %v4058
      %v4060 = vpop.f32.mrb[0].mxu0
      %4061 = vmatprep.mubr.bf16.mxu0 %v3162
      %4062 = vmatmul.mubr.bf16.gmra.mrb[0].mxu0 %v3161
      %v4063 = vpop.f32.mrb[0].mxu0
      %v4064 = vadd.f32 %v3903, %v4063
      %v4065 = vpop.f32.mrb[0].mxu0
      %v4066 = vpop.f32.mrb[0].mxu0
      %v4067 = vadd.f32 %v3906, %v4066
      %v4068 = vpop.f32.mrb[0].mxu0
      %4069 = vmatprep.mubr.bf16.mxu0 %v3171
      %4070 = vmatmul.mubr.bf16.gmra.mrb[0].mxu0 %v3170
      %v4071 = vpop.f32.mrb[0].mxu0
      %v4072 = vadd.f32 %v3911, %v4071
      %v4073 = vpop.f32.mrb[0].mxu0
      %v4074 = vpop.f32.mrb[0].mxu0
      %v4075 = vadd.f32 %v3914, %v4074
      %v4076 = vpop.f32.mrb[0].mxu0
      %4077 = vmatprep.mubr.bf16.mxu0 %v3180
      %4078 = vmatmul.mubr.bf16.gmra.mrb[0].mxu0 %v3179
      %v4079 = vpop.f32.mrb[0].mxu0
      %v4080 = vadd.f32 %v3919, %v4079
      %v4081 = vpop.f32.mrb[0].mxu0
      %v4082 = vpop.f32.mrb[0].mxu0
      %v4083 = vadd.f32 %v3922, %v4082
      %v4084 = vpop.f32.mrb[0].mxu0
      %4085 = vmatprep.mubr.bf16.mxu0 %v3189
      %4086 = vmatmul.mubr.bf16.gmra.mrb[0].mxu0 %v3188
      %v4087 = vpop.f32.mrb[0].mxu0
      %v4088 = vadd.f32 %v3927, %v4087
      %v4089 = vpop.f32.mrb[0].mxu0
      %v4090 = vpop.f32.mrb[0].mxu0
      %v4091 = vadd.f32 %v3930, %v4090
      %v4092 = vpop.f32.mrb[0].mxu0
      %4093 = vmatprep.mubr.bf16.mxu0 %v3198
      %4094 = vmatmul.mubr.bf16.gmra.mrb[0].mxu0 %v3197
      %v4095 = vpop.f32.mrb[0].mxu0
      %v4096 = vadd.f32 %v3935, %v4095
      %v4097 = vpop.f32.mrb[0].mxu0
      %v4098 = vpop.f32.mrb[0].mxu0
      %v4099 = vadd.f32 %v3938, %v4098
      %v4100 = vpop.f32.mrb[0].mxu0
      %4101 = vdwg.mxu0
      %4102 = vmatprep.subr.bf16.mxu0 0
      %4103 = vmatpush1.bf16.msra.mxu0 %v3668
      %4104 = vmatprep.subr.bf16.mxu0 0
      %4105 = vmatpush1.bf16.msra.mxu0 %v3669
      %4106 = vmatprep.subr.bf16.mxu0 0
      %4107 = vmatpush1.bf16.msra.mxu0 %v3670
      %4108 = vmatprep.subr.bf16.mxu0 0
      %4109 = vmatpush1.bf16.msra.mxu0 %v3671
      %4110 = vmatprep.subr.bf16.mxu0 0
      %4111 = vmatpush1.bf16.msra.mxu0 %v3672
      %4112 = vmatprep.subr.bf16.mxu0 0
      %4113 = vmatpush1.bf16.msra.mxu0 %v3673
      %4114 = vmatprep.subr.bf16.mxu0 0
      %4115 = vmatpush1.bf16.msra.mxu0 %v3674
      %4116 = vmatprep.subr.bf16.mxu0 0
      %4117 = vmatpush1.bf16.msra.mxu0 %v3675
      %4118 = vmatprep.subr.bf16.mxu0 0
      %4119 = vmatpush1.bf16.msra.mxu0 %v3676
      %4120 = vmatprep.subr.bf16.mxu0 0
      %4121 = vmatpush1.bf16.msra.mxu0 %v3677
      %4122 = vmatprep.subr.bf16.mxu0 0
      %4123 = vmatpush1.bf16.msra.mxu0 %v3678
      %4124 = vmatprep.subr.bf16.mxu0 0
      %4125 = vmatpush1.bf16.msra.mxu0 %v3679
      %4126 = vmatprep.subr.bf16.mxu0 0
      %4127 = vmatpush1.bf16.msra.mxu0 %v3680
      %4128 = vmatprep.subr.bf16.mxu0 0
      %4129 = vmatpush1.bf16.msra.mxu0 %v3681
      %4130 = vmatprep.subr.bf16.mxu0 0
      %4131 = vmatpush1.bf16.msra.mxu0 %v3682
      %4132 = vmatprep.subr.bf16.mxu0 0
      %4133 = vmatpush1.bf16.msra.mxu0 %v3683
      %4134 = vmatprep.mubr.bf16.mxu0 %v3065
      %4135 = vmatmul.mubr.bf16.gmra.mrb[0].mxu0 %v3064
      %v4136 = vpop.f32.mrb[0].mxu0
      %v4137 = vadd.f32 %v3976, %v4136
      %v4138 = vpop.f32.mrb[0].mxu0
      %v4139 = vpop.f32.mrb[0].mxu0
      %v4140 = vadd.f32 %v3979, %v4139
      %v4141 = vpop.f32.mrb[0].mxu0
      %4142 = vmatprep.mubr.bf16.mxu0 %v3074
      %4143 = vmatmul.mubr.bf16.gmra.mrb[0].mxu0 %v3073
      %v4144 = vpop.f32.mrb[0].mxu0
      %v4145 = vadd.f32 %v3984, %v4144
      %v4146 = vpop.f32.mrb[0].mxu0
      %v4147 = vpop.f32.mrb[0].mxu0
      %v4148 = vadd.f32 %v3987, %v4147
      %v4149 = vpop.f32.mrb[0].mxu0
      %4150 = vmatprep.mubr.bf16.mxu0 %v3083
      %4151 = vmatmul.mubr.bf16.gmra.mrb[0].mxu0 %v3082
      %v4152 = vpop.f32.mrb[0].mxu0
      %v4153 = vadd.f32 %v3992, %v4152
      %v4154 = vpop.f32.mrb[0].mxu0
      %v4155 = vpop.f32.mrb[0].mxu0
      %v4156 = vadd.f32 %v3995, %v4155
      %v4157 = vpop.f32.mrb[0].mxu0
      %4158 = vmatprep.mubr.bf16.mxu0 %v3092
      %4159 = vmatmul.mubr.bf16.gmra.mrb[0].mxu0 %v3091
      %v4160 = vpop.f32.mrb[0].mxu0
      %v4161 = vadd.f32 %v4000, %v4160
      %v4162 = vpop.f32.mrb[0].mxu0
      %v4163 = vpop.f32.mrb[0].mxu0
      %v4164 = vadd.f32 %v4003, %v4163
      %v4165 = vpop.f32.mrb[0].mxu0
      %4166 = vmatprep.mubr.bf16.mxu0 %v3101
      %4167 = vmatmul.mubr.bf16.gmra.mrb[0].mxu0 %v3100
      %v4168 = vpop.f32.mrb[0].mxu0
      %v4169 = vadd.f32 %v4008, %v4168
      %v4170 = vpop.f32.mrb[0].mxu0
      %v4171 = vpop.f32.mrb[0].mxu0
      %v4172 = vadd.f32 %v4011, %v4171
      %v4173 = vpop.f32.mrb[0].mxu0
      %4174 = vmatprep.mubr.bf16.mxu0 %v3110
      %4175 = vmatmul.mubr.bf16.gmra.mrb[0].mxu0 %v3109
      %v4176 = vpop.f32.mrb[0].mxu0
      %v4177 = vadd.f32 %v4016, %v4176
      %v4178 = vpop.f32.mrb[0].mxu0
      %v4179 = vpop.f32.mrb[0].mxu0
      %v4180 = vadd.f32 %v4019, %v4179
      %v4181 = vpop.f32.mrb[0].mxu0
      %4182 = vmatprep.mubr.bf16.mxu0 %v3119
      %4183 = vmatmul.mubr.bf16.gmra.mrb[0].mxu0 %v3118
      %v4184 = vpop.f32.mrb[0].mxu0
      %v4185 = vadd.f32 %v4024, %v4184
      %v4186 = vpop.f32.mrb[0].mxu0
      %v4187 = vpop.f32.mrb[0].mxu0
      %v4188 = vadd.f32 %v4027, %v4187
      %v4189 = vpop.f32.mrb[0].mxu0
      %4190 = vmatprep.mubr.bf16.mxu0 %v3128
      %4191 = vmatmul.mubr.bf16.gmra.mrb[0].mxu0 %v3127
      %v4192 = vpop.f32.mrb[0].mxu0
      %v4193 = vadd.f32 %v4032, %v4192
      %v4194 = vpop.f32.mrb[0].mxu0
      %v4195 = vpop.f32.mrb[0].mxu0
      %v4196 = vadd.f32 %v4035, %v4195
      %v4197 = vpop.f32.mrb[0].mxu0
      %4198 = vmatprep.mubr.bf16.mxu0 %v3137
      %4199 = vmatmul.mubr.bf16.gmra.mrb[0].mxu0 %v3136
      %v4200 = vpop.f32.mrb[0].mxu0
      %v4201 = vadd.f32 %v4040, %v4200
      %v4202 = vpop.f32.mrb[0].mxu0
      %v4203 = vpop.f32.mrb[0].mxu0
      %v4204 = vadd.f32 %v4043, %v4203
      %v4205 = vpop.f32.mrb[0].mxu0
      %4206 = vmatprep.mubr.bf16.mxu0 %v3146
      %4207 = vmatmul.mubr.bf16.gmra.mrb[0].mxu0 %v3145
      %v4208 = vpop.f32.mrb[0].mxu0
      %v4209 = vadd.f32 %v4048, %v4208
      %v4210 = vpop.f32.mrb[0].mxu0
      %v4211 = vpop.f32.mrb[0].mxu0
      %v4212 = vadd.f32 %v4051, %v4211
      %v4213 = vpop.f32.mrb[0].mxu0
      %4214 = vmatprep.mubr.bf16.mxu0 %v3155
      %4215 = vmatmul.mubr.bf16.gmra.mrb[0].mxu0 %v3154
      %v4216 = vpop.f32.mrb[0].mxu0
      %v4217 = vadd.f32 %v4056, %v4216
      %v4218 = vpop.f32.mrb[0].mxu0
      %v4219 = vpop.f32.mrb[0].mxu0
      %v4220 = vadd.f32 %v4059, %v4219
      %v4221 = vpop.f32.mrb[0].mxu0
      %4222 = vmatprep.mubr.bf16.mxu0 %v3164
      %4223 = vmatmul.mubr.bf16.gmra.mrb[0].mxu0 %v3163
      %v4224 = vpop.f32.mrb[0].mxu0
      %v4225 = vadd.f32 %v4064, %v4224
      %v4226 = vpop.f32.mrb[0].mxu0
      %v4227 = vpop.f32.mrb[0].mxu0
      %v4228 = vadd.f32 %v4067, %v4227
      %v4229 = vpop.f32.mrb[0].mxu0
      %4230 = vmatprep.mubr.bf16.mxu0 %v3173
      %4231 = vmatmul.mubr.bf16.gmra.mrb[0].mxu0 %v3172
      %v4232 = vpop.f32.mrb[0].mxu0
      %v4233 = vadd.f32 %v4072, %v4232
      %v4234 = vpop.f32.mrb[0].mxu0
      %v4235 = vpop.f32.mrb[0].mxu0
      %v4236 = vadd.f32 %v4075, %v4235
      %v4237 = vpop.f32.mrb[0].mxu0
      %4238 = vmatprep.mubr.bf16.mxu0 %v3182
      %4239 = vmatmul.mubr.bf16.gmra.mrb[0].mxu0 %v3181
      %v4240 = vpop.f32.mrb[0].mxu0
      %v4241 = vadd.f32 %v4080, %v4240
      %v4242 = vpop.f32.mrb[0].mxu0
      %v4243 = vpop.f32.mrb[0].mxu0
      %v4244 = vadd.f32 %v4083, %v4243
      %v4245 = vpop.f32.mrb[0].mxu0
      %4246 = vmatprep.mubr.bf16.mxu0 %v3191
      %4247 = vmatmul.mubr.bf16.gmra.mrb[0].mxu0 %v3190
      %v4248 = vpop.f32.mrb[0].mxu0
      %v4249 = vadd.f32 %v4088, %v4248
      %v4250 = vpop.f32.mrb[0].mxu0
      %v4251 = vpop.f32.mrb[0].mxu0
      %v4252 = vadd.f32 %v4091, %v4251
      %v4253 = vpop.f32.mrb[0].mxu0
      %4254 = vmatprep.mubr.bf16.mxu0 %v3200
      %4255 = vmatmul.mubr.bf16.gmra.mrb[0].mxu0 %v3199
      %v4256 = vpop.f32.mrb[0].mxu0
      %v4257 = vadd.f32 %v4096, %v4256
      %v4258 = vpop.f32.mrb[0].mxu0
      %v4259 = vpop.f32.mrb[0].mxu0
      %v4260 = vadd.f32 %v4099, %v4259
      %v4261 = vpop.f32.mrb[0].mxu0
      %4262 = vdwg.mxu0
      %4263 = vmatprep.subr.bf16.mxu0 0
      %4264 = vmatpush1.bf16.msra.mxu0 %v3684
      %4265 = vmatprep.subr.bf16.mxu0 0
      %4266 = vmatpush1.bf16.msra.mxu0 %v3685
      %4267 = vmatprep.subr.bf16.mxu0 0
      %4268 = vmatpush1.bf16.msra.mxu0 %v3686
      %4269 = vmatprep.subr.bf16.mxu0 0
      %4270 = vmatpush1.bf16.msra.mxu0 %v3687
      %4271 = vmatprep.subr.bf16.mxu0 0
      %4272 = vmatpush1.bf16.msra.mxu0 %v3688
      %4273 = vmatprep.subr.bf16.mxu0 0
      %4274 = vmatpush1.bf16.msra.mxu0 %v3689
      %4275 = vmatprep.subr.bf16.mxu0 0
      %4276 = vmatpush1.bf16.msra.mxu0 %v3690
      %4277 = vmatprep.subr.bf16.mxu0 0
      %4278 = vmatpush1.bf16.msra.mxu0 %v3691
      %4279 = vmatprep.subr.bf16.mxu0 0
      %4280 = vmatpush1.bf16.msra.mxu0 %v3692
      %4281 = vmatprep.subr.bf16.mxu0 0
      %4282 = vmatpush1.bf16.msra.mxu0 %v3693
      %4283 = vmatprep.subr.bf16.mxu0 0
      %4284 = vmatpush1.bf16.msra.mxu0 %v3694
      %4285 = vmatprep.subr.bf16.mxu0 0
      %4286 = vmatpush1.bf16.msra.mxu0 %v3695
      %4287 = vmatprep.subr.bf16.mxu0 0
      %4288 = vmatpush1.bf16.msra.mxu0 %v3696
      %4289 = vmatprep.subr.bf16.mxu0 0
      %4290 = vmatpush1.bf16.msra.mxu0 %v3697
      %4291 = vmatprep.subr.bf16.mxu0 0
      %4292 = vmatpush1.bf16.msra.mxu0 %v3698
      %4293 = vmatprep.subr.bf16.mxu0 0
      %4294 = vmatpush1.bf16.msra.mxu0 %v3699
      %4295 = vmatprep.mubr.bf16.mxu0 %v3067
      %4296 = vmatmul.mubr.bf16.gmra.mrb[0].mxu0 %v3066
      %v4297 = vpop.f32.mrb[0].mxu0
      %v4298 = vadd.f32 %v4137, %v4297
      %v4299 = vpop.f32.mrb[0].mxu0
      %v4300 = vpop.f32.mrb[0].mxu0
      %v4301 = vadd.f32 %v4140, %v4300
      %v4302 = vpop.f32.mrb[0].mxu0
      %4303 = vmatprep.mubr.bf16.mxu0 %v3076
      %4304 = vmatmul.mubr.bf16.gmra.mrb[0].mxu0 %v3075
      %v4305 = vpop.f32.mrb[0].mxu0
      %v4306 = vadd.f32 %v4145, %v4305
      %v4307 = vpop.f32.mrb[0].mxu0
      %v4308 = vpop.f32.mrb[0].mxu0
      %v4309 = vadd.f32 %v4148, %v4308
      %v4310 = vpop.f32.mrb[0].mxu0
      %4311 = vmatprep.mubr.bf16.mxu0 %v3085
      %4312 = vmatmul.mubr.bf16.gmra.mrb[0].mxu0 %v3084
      %v4313 = vpop.f32.mrb[0].mxu0
      %v4314 = vadd.f32 %v4153, %v4313
      %v4315 = vpop.f32.mrb[0].mxu0
      %v4316 = vpop.f32.mrb[0].mxu0
      %v4317 = vadd.f32 %v4156, %v4316
      %v4318 = vpop.f32.mrb[0].mxu0
      %4319 = vmatprep.mubr.bf16.mxu0 %v3094
      %4320 = vmatmul.mubr.bf16.gmra.mrb[0].mxu0 %v3093
      %v4321 = vpop.f32.mrb[0].mxu0
      %v4322 = vadd.f32 %v4161, %v4321
      %v4323 = vpop.f32.mrb[0].mxu0
      %v4324 = vpop.f32.mrb[0].mxu0
      %v4325 = vadd.f32 %v4164, %v4324
      %v4326 = vpop.f32.mrb[0].mxu0
      %4327 = vmatprep.mubr.bf16.mxu0 %v3103
      %4328 = vmatmul.mubr.bf16.gmra.mrb[0].mxu0 %v3102
      %v4329 = vpop.f32.mrb[0].mxu0
      %v4330 = vadd.f32 %v4169, %v4329
      %v4331 = vpop.f32.mrb[0].mxu0
      %v4332 = vpop.f32.mrb[0].mxu0
      %v4333 = vadd.f32 %v4172, %v4332
      %v4334 = vpop.f32.mrb[0].mxu0
      %4335 = vmatprep.mubr.bf16.mxu0 %v3112
      %4336 = vmatmul.mubr.bf16.gmra.mrb[0].mxu0 %v3111
      %v4337 = vpop.f32.mrb[0].mxu0
      %v4338 = vadd.f32 %v4177, %v4337
      %v4339 = vpop.f32.mrb[0].mxu0
      %v4340 = vpop.f32.mrb[0].mxu0
      %v4341 = vadd.f32 %v4180, %v4340
      %v4342 = vpop.f32.mrb[0].mxu0
      %4343 = vmatprep.mubr.bf16.mxu0 %v3121
      %4344 = vmatmul.mubr.bf16.gmra.mrb[0].mxu0 %v3120
      %v4345 = vpop.f32.mrb[0].mxu0
      %v4346 = vadd.f32 %v4185, %v4345
      %v4347 = vpop.f32.mrb[0].mxu0
      %v4348 = vpop.f32.mrb[0].mxu0
      %v4349 = vadd.f32 %v4188, %v4348
      %v4350 = vpop.f32.mrb[0].mxu0
      %4351 = vmatprep.mubr.bf16.mxu0 %v3130
      %4352 = vmatmul.mubr.bf16.gmra.mrb[0].mxu0 %v3129
      %v4353 = vpop.f32.mrb[0].mxu0
      %v4354 = vadd.f32 %v4193, %v4353
      %v4355 = vpop.f32.mrb[0].mxu0
      %v4356 = vpop.f32.mrb[0].mxu0
      %v4357 = vadd.f32 %v4196, %v4356
      %v4358 = vpop.f32.mrb[0].mxu0
      %4359 = vmatprep.mubr.bf16.mxu0 %v3139
      %4360 = vmatmul.mubr.bf16.gmra.mrb[0].mxu0 %v3138
      %v4361 = vpop.f32.mrb[0].mxu0
      %v4362 = vadd.f32 %v4201, %v4361
      %v4363 = vpop.f32.mrb[0].mxu0
      %v4364 = vpop.f32.mrb[0].mxu0
      %v4365 = vadd.f32 %v4204, %v4364
      %v4366 = vpop.f32.mrb[0].mxu0
      %4367 = vmatprep.mubr.bf16.mxu0 %v3148
      %4368 = vmatmul.mubr.bf16.gmra.mrb[0].mxu0 %v3147
      %v4369 = vpop.f32.mrb[0].mxu0
      %v4370 = vadd.f32 %v4209, %v4369
      %v4371 = vpop.f32.mrb[0].mxu0
      %v4372 = vpop.f32.mrb[0].mxu0
      %v4373 = vadd.f32 %v4212, %v4372
      %v4374 = vpop.f32.mrb[0].mxu0
      %4375 = vmatprep.mubr.bf16.mxu0 %v3157
      %4376 = vmatmul.mubr.bf16.gmra.mrb[0].mxu0 %v3156
      %v4377 = vpop.f32.mrb[0].mxu0
      %v4378 = vadd.f32 %v4217, %v4377
      %v4379 = vpop.f32.mrb[0].mxu0
      %v4380 = vpop.f32.mrb[0].mxu0
      %v4381 = vadd.f32 %v4220, %v4380
      %v4382 = vpop.f32.mrb[0].mxu0
      %4383 = vmatprep.mubr.bf16.mxu0 %v3166
      %4384 = vmatmul.mubr.bf16.gmra.mrb[0].mxu0 %v3165
      %v4385 = vpop.f32.mrb[0].mxu0
      %v4386 = vadd.f32 %v4225, %v4385
      %v4387 = vpop.f32.mrb[0].mxu0
      %v4388 = vpop.f32.mrb[0].mxu0
      %v4389 = vadd.f32 %v4228, %v4388
      %v4390 = vpop.f32.mrb[0].mxu0
      %4391 = vmatprep.mubr.bf16.mxu0 %v3175
      %4392 = vmatmul.mubr.bf16.gmra.mrb[0].mxu0 %v3174
      %v4393 = vpop.f32.mrb[0].mxu0
      %v4394 = vadd.f32 %v4233, %v4393
      %v4395 = vpop.f32.mrb[0].mxu0
      %v4396 = vpop.f32.mrb[0].mxu0
      %v4397 = vadd.f32 %v4236, %v4396
      %v4398 = vpop.f32.mrb[0].mxu0
      %4399 = vmatprep.mubr.bf16.mxu0 %v3184
      %4400 = vmatmul.mubr.bf16.gmra.mrb[0].mxu0 %v3183
      %v4401 = vpop.f32.mrb[0].mxu0
      %v4402 = vadd.f32 %v4241, %v4401
      %v4403 = vpop.f32.mrb[0].mxu0
      %v4404 = vpop.f32.mrb[0].mxu0
      %v4405 = vadd.f32 %v4244, %v4404
      %v4406 = vpop.f32.mrb[0].mxu0
      %4407 = vmatprep.mubr.bf16.mxu0 %v3193
      %4408 = vmatmul.mubr.bf16.gmra.mrb[0].mxu0 %v3192
      %v4409 = vpop.f32.mrb[0].mxu0
      %v4410 = vadd.f32 %v4249, %v4409
      %v4411 = vpop.f32.mrb[0].mxu0
      %v4412 = vpop.f32.mrb[0].mxu0
      %v4413 = vadd.f32 %v4252, %v4412
      %v4414 = vpop.f32.mrb[0].mxu0
      %4415 = vmatprep.mubr.bf16.mxu0 %v3202
      %4416 = vmatmul.mubr.bf16.gmra.mrb[0].mxu0 %v3201
      %v4417 = vpop.f32.mrb[0].mxu0
      %v4418 = vadd.f32 %v4257, %v4417
      %v4419 = vpop.f32.mrb[0].mxu0
      %v4420 = vpop.f32.mrb[0].mxu0
      %v4421 = vadd.f32 %v4260, %v4420
      %v4422 = vpop.f32.mrb[0].mxu0
      %4423 = vdwg.mxu0
      %4424 = vmatprep.subr.bf16.mxu0 0
      %4425 = vmatpush1.bf16.msra.mxu0 %v3700
      %4426 = vmatprep.subr.bf16.mxu0 0
      %4427 = vmatpush1.bf16.msra.mxu0 %v3701
      %4428 = vmatprep.subr.bf16.mxu0 0
      %4429 = vmatpush1.bf16.msra.mxu0 %v3702
      %4430 = vmatprep.subr.bf16.mxu0 0
      %4431 = vmatpush1.bf16.msra.mxu0 %v3703
      %4432 = vmatprep.subr.bf16.mxu0 0
      %4433 = vmatpush1.bf16.msra.mxu0 %v3704
      %4434 = vmatprep.subr.bf16.mxu0 0
      %4435 = vmatpush1.bf16.msra.mxu0 %v3705
      %4436 = vmatprep.subr.bf16.mxu0 0
      %4437 = vmatpush1.bf16.msra.mxu0 %v3706
      %4438 = vmatprep.subr.bf16.mxu0 0
      %4439 = vmatpush1.bf16.msra.mxu0 %v3707
      %4440 = vmatprep.subr.bf16.mxu0 0
      %4441 = vmatpush1.bf16.msra.mxu0 0
      %4442 = vmatprep.subr.bf16.mxu0 0
      %4443 = vmatpush1.bf16.msra.mxu0 0
      %4444 = vmatprep.subr.bf16.mxu0 0
      %4445 = vmatpush1.bf16.msra.mxu0 0
      %4446 = vmatprep.subr.bf16.mxu0 0
      %4447 = vmatpush1.bf16.msra.mxu0 0
      %4448 = vmatprep.subr.bf16.mxu0 0
      %4449 = vmatpush1.bf16.msra.mxu0 0
      %4450 = vmatprep.subr.bf16.mxu0 0
      %4451 = vmatpush1.bf16.msra.mxu0 0
      %4452 = vmatprep.subr.bf16.mxu0 0
      %4453 = vmatpush1.bf16.msra.mxu0 0
      %4454 = vmatprep.subr.bf16.mxu0 0
      %4455 = vmatpush1.bf16.msra.mxu0 0
      %4456 = vmatprep.mubr.bf16.mxu0 0
      %4457 = vmatmul.mubr.bf16.gmra.mrb[0].mxu0 %v3068
      %v4458 = vpop.f32.mrb[0].mxu0
      %v4459 = vadd.f32 %v4298, %v4458
      %v4460 = vpop.f32.mrb[0].mxu0
      %v4461 = vpop.f32.mrb[0].mxu0
      %v4462 = vadd.f32 %v4301, %v4461
      %v4463 = vpop.f32.mrb[0].mxu0
      %4464 = vmatprep.mubr.bf16.mxu0 0
      %4465 = vmatmul.mubr.bf16.gmra.mrb[0].mxu0 %v3077
      %v4466 = vpop.f32.mrb[0].mxu0
      %v4467 = vadd.f32 %v4306, %v4466
      %v4468 = vpop.f32.mrb[0].mxu0
      %v4469 = vpop.f32.mrb[0].mxu0
      %v4470 = vadd.f32 %v4309, %v4469
      %v4471 = vpop.f32.mrb[0].mxu0
      %4472 = vmatprep.mubr.bf16.mxu0 0
      %4473 = vmatmul.mubr.bf16.gmra.mrb[0].mxu0 %v3086
      %v4474 = vpop.f32.mrb[0].mxu0
      %v4475 = vadd.f32 %v4314, %v4474
      %v4476 = vpop.f32.mrb[0].mxu0
      %v4477 = vpop.f32.mrb[0].mxu0
      %v4478 = vadd.f32 %v4317, %v4477
      %v4479 = vpop.f32.mrb[0].mxu0
      %4480 = vmatprep.mubr.bf16.mxu0 0
      %4481 = vmatmul.mubr.bf16.gmra.mrb[0].mxu0 %v3095
      %v4482 = vpop.f32.mrb[0].mxu0
      %v4483 = vadd.f32 %v4322, %v4482
      %v4484 = vpop.f32.mrb[0].mxu0
      %v4485 = vpop.f32.mrb[0].mxu0
      %v4486 = vadd.f32 %v4325, %v4485
      %v4487 = vpop.f32.mrb[0].mxu0
      %4488 = vmatprep.mubr.bf16.mxu0 0
      %4489 = vmatmul.mubr.bf16.gmra.mrb[0].mxu0 %v3104
      %v4490 = vpop.f32.mrb[0].mxu0
      %v4491 = vadd.f32 %v4330, %v4490
      %v4492 = vpop.f32.mrb[0].mxu0
      %v4493 = vpop.f32.mrb[0].mxu0
      %v4494 = vadd.f32 %v4333, %v4493
      %v4495 = vpop.f32.mrb[0].mxu0
      %4496 = vmatprep.mubr.bf16.mxu0 0
      %4497 = vmatmul.mubr.bf16.gmra.mrb[0].mxu0 %v3113
      %v4498 = vpop.f32.mrb[0].mxu0
      %v4499 = vadd.f32 %v4338, %v4498
      %v4500 = vpop.f32.mrb[0].mxu0
      %v4501 = vpop.f32.mrb[0].mxu0
      %v4502 = vadd.f32 %v4341, %v4501
      %v4503 = vpop.f32.mrb[0].mxu0
      %4504 = vmatprep.mubr.bf16.mxu0 0
      %4505 = vmatmul.mubr.bf16.gmra.mrb[0].mxu0 %v3122
      %v4506 = vpop.f32.mrb[0].mxu0
      %v4507 = vadd.f32 %v4346, %v4506
      %v4508 = vpop.f32.mrb[0].mxu0
      %v4509 = vpop.f32.mrb[0].mxu0
      %v4510 = vadd.f32 %v4349, %v4509
      %v4511 = vpop.f32.mrb[0].mxu0
      %4512 = vmatprep.mubr.bf16.mxu0 0
      %4513 = vmatmul.mubr.bf16.gmra.mrb[0].mxu0 %v3131
      %v4514 = vpop.f32.mrb[0].mxu0
      %v4515 = vadd.f32 %v4354, %v4514
      %v4516 = vpop.f32.mrb[0].mxu0
      %v4517 = vpop.f32.mrb[0].mxu0
      %v4518 = vadd.f32 %v4357, %v4517
      %v4519 = vpop.f32.mrb[0].mxu0
      %4520 = vmatprep.mubr.bf16.mxu0 0
      %4521 = vmatmul.mubr.bf16.gmra.mrb[0].mxu0 %v3140
      %v4522 = vpop.f32.mrb[0].mxu0
      %v4523 = vadd.f32 %v4362, %v4522
      %v4524 = vpop.f32.mrb[0].mxu0
      %v4525 = vpop.f32.mrb[0].mxu0
      %v4526 = vadd.f32 %v4365, %v4525
      %v4527 = vpop.f32.mrb[0].mxu0
      %4528 = vmatprep.mubr.bf16.mxu0 0
      %4529 = vmatmul.mubr.bf16.gmra.mrb[0].mxu0 %v3149
      %v4530 = vpop.f32.mrb[0].mxu0
      %v4531 = vadd.f32 %v4370, %v4530
      %v4532 = vpop.f32.mrb[0].mxu0
      %v4533 = vpop.f32.mrb[0].mxu0
      %v4534 = vadd.f32 %v4373, %v4533
      %v4535 = vpop.f32.mrb[0].mxu0
      %4536 = vmatprep.mubr.bf16.mxu0 0
      %4537 = vmatmul.mubr.bf16.gmra.mrb[0].mxu0 %v3158
      %v4538 = vpop.f32.mrb[0].mxu0
      %v4539 = vadd.f32 %v4378, %v4538
      %v4540 = vpop.f32.mrb[0].mxu0
      %v4541 = vpop.f32.mrb[0].mxu0
      %v4542 = vadd.f32 %v4381, %v4541
      %v4543 = vpop.f32.mrb[0].mxu0
      %4544 = vmatprep.mubr.bf16.mxu0 0
      %4545 = vmatmul.mubr.bf16.gmra.mrb[0].mxu0 %v3167
      %v4546 = vpop.f32.mrb[0].mxu0
      %v4547 = vadd.f32 %v4386, %v4546
      %v4548 = vpop.f32.mrb[0].mxu0
      %v4549 = vpop.f32.mrb[0].mxu0
      %v4550 = vadd.f32 %v4389, %v4549
      %v4551 = vpop.f32.mrb[0].mxu0
      %4552 = vmatprep.mubr.bf16.mxu0 0
      %4553 = vmatmul.mubr.bf16.gmra.mrb[0].mxu0 %v3176
      %v4554 = vpop.f32.mrb[0].mxu0
      %v4555 = vadd.f32 %v4394, %v4554
      %v4556 = vpop.f32.mrb[0].mxu0
      %v4557 = vpop.f32.mrb[0].mxu0
      %v4558 = vadd.f32 %v4397, %v4557
      %v4559 = vpop.f32.mrb[0].mxu0
      %4560 = vmatprep.mubr.bf16.mxu0 0
      %4561 = vmatmul.mubr.bf16.gmra.mrb[0].mxu0 %v3185
      %v4562 = vpop.f32.mrb[0].mxu0
      %v4563 = vadd.f32 %v4402, %v4562
      %v4564 = vpop.f32.mrb[0].mxu0
      %v4565 = vpop.f32.mrb[0].mxu0
      %v4566 = vadd.f32 %v4405, %v4565
      %v4567 = vpop.f32.mrb[0].mxu0
      %4568 = vmatprep.mubr.bf16.mxu0 0
      %4569 = vmatmul.mubr.bf16.gmra.mrb[0].mxu0 %v3194
      %v4570 = vpop.f32.mrb[0].mxu0
      %v4571 = vadd.f32 %v4410, %v4570
      %v4572 = vpop.f32.mrb[0].mxu0
      %v4573 = vpop.f32.mrb[0].mxu0
      %v4574 = vadd.f32 %v4413, %v4573
      %v4575 = vpop.f32.mrb[0].mxu0
      %4576 = vmatprep.mubr.bf16.mxu0 0
      %4577 = vmatmul.mubr.bf16.gmra.mrb[0].mxu0 %v3203
      %v4578 = vpop.f32.mrb[0].mxu0
      %v4579 = vadd.f32 %v4418, %v4578
      %v4580 = vpop.f32.mrb[0].mxu0
      %v4581 = vpop.f32.mrb[0].mxu0
      %v4582 = vadd.f32 %v4421, %v4581
      %v4583 = vpop.f32.mrb[0].mxu0
      %4584 = vdwg.mxu0
      %v4585 = vld [vmem:[%s5] sm:$0x1]
      %v4587 = vlaneseq
      %v4588 = vshrl.u32 %v4587, 7
      %v4589 = vsub.s32 0, %v4588
      %v4590 = vrot.slane %v4585, %v4589
      %v4592 = vmul.f32 %v4459, %v4590
      %v4593 = vmul.f32 %v4462, %v4590
      %v4594 = vmul.f32 %v4467, %v4590
      %v4595 = vmul.f32 %v4470, %v4590
      %v4596 = vmul.f32 %v4475, %v4590
      %v4597 = vmul.f32 %v4478, %v4590
      %v4598 = vmul.f32 %v4483, %v4590
      %v4599 = vmul.f32 %v4486, %v4590
      %v4600 = vmul.f32 %v4491, %v4590
      %v4601 = vmul.f32 %v4494, %v4590
      %v4602 = vmul.f32 %v4499, %v4590
      %v4603 = vmul.f32 %v4502, %v4590
      %v4604 = vmul.f32 %v4507, %v4590
      %v4605 = vmul.f32 %v4510, %v4590
      %v4606 = vmul.f32 %v4515, %v4590
      %v4607 = vmul.f32 %v4518, %v4590
      %v4608 = vmul.f32 %v4523, %v4590
      %v4609 = vmul.f32 %v4526, %v4590
      %v4610 = vmul.f32 %v4531, %v4590
      %v4611 = vmul.f32 %v4534, %v4590
      %v4612 = vmul.f32 %v4539, %v4590
      %v4613 = vmul.f32 %v4542, %v4590
      %v4614 = vmul.f32 %v4547, %v4590
      %v4615 = vmul.f32 %v4550, %v4590
      %v4616 = vmul.f32 %v4555, %v4590
      %v4617 = vmul.f32 %v4558, %v4590
      %v4618 = vmul.f32 %v4563, %v4590
      %v4619 = vmul.f32 %v4566, %v4590
      %v4620 = vmul.f32 %v4571, %v4590
      %v4621 = vmul.f32 %v4574, %v4590
      %v4622 = vmul.f32 %v4579, %v4590
      %v4623 = vmul.f32 %v4582, %v4590
      %v4624 = vld [vmem:[%s6] sm:$0x1]
      %v4626 = vlaneseq
      %v4627 = vshrl.u32 %v4626, 7
      %v4628 = vsub.s32 0, %v4627
      %v4629 = vrot.slane %v4624, %v4628
      %v4631 = vadd.f32 %v4592, %v4629
      %v4632 = vadd.f32 %v4593, %v4629
      %v4633 = vadd.f32 %v4594, %v4629
      %v4634 = vadd.f32 %v4595, %v4629
      %v4635 = vadd.f32 %v4596, %v4629
      %v4636 = vadd.f32 %v4597, %v4629
      %v4637 = vadd.f32 %v4598, %v4629
      %v4638 = vadd.f32 %v4599, %v4629
      %v4639 = vadd.f32 %v4600, %v4629
      %v4640 = vadd.f32 %v4601, %v4629
      %v4641 = vadd.f32 %v4602, %v4629
      %v4642 = vadd.f32 %v4603, %v4629
      %v4643 = vadd.f32 %v4604, %v4629
      %v4644 = vadd.f32 %v4605, %v4629
      %v4645 = vadd.f32 %v4606, %v4629
      %v4646 = vadd.f32 %v4607, %v4629
      %v4647 = vadd.f32 %v4608, %v4629
      %v4648 = vadd.f32 %v4609, %v4629
      %v4649 = vadd.f32 %v4610, %v4629
      %v4650 = vadd.f32 %v4611, %v4629
      %v4651 = vadd.f32 %v4612, %v4629
      %v4652 = vadd.f32 %v4613, %v4629
      %v4653 = vadd.f32 %v4614, %v4629
      %v4654 = vadd.f32 %v4615, %v4629
      %v4655 = vadd.f32 %v4616, %v4629
      %v4656 = vadd.f32 %v4617, %v4629
      %v4657 = vadd.f32 %v4618, %v4629
      %v4658 = vadd.f32 %v4619, %v4629
      %v4659 = vadd.f32 %v4620, %v4629
      %v4660 = vadd.f32 %v4621, %v4629
      %v4661 = vadd.f32 %v4622, %v4629
      %v4662 = vadd.f32 %v4623, %v4629
      %v4663 = vmax.f32 %v4631, 0.0
      %v4664 = vmax.f32 %v4632, 0.0
      %v4665 = vmax.f32 %v4633, 0.0
      %v4666 = vmax.f32 %v4634, 0.0
      %v4667 = vmax.f32 %v4635, 0.0
      %v4668 = vmax.f32 %v4636, 0.0
      %v4669 = vmax.f32 %v4637, 0.0
      %v4670 = vmax.f32 %v4638, 0.0
      %v4671 = vmax.f32 %v4639, 0.0
      %v4672 = vmax.f32 %v4640, 0.0
      %v4673 = vmax.f32 %v4641, 0.0
      %v4674 = vmax.f32 %v4642, 0.0
      %v4675 = vmax.f32 %v4643, 0.0
      %v4676 = vmax.f32 %v4644, 0.0
      %v4677 = vmax.f32 %v4645, 0.0
      %v4678 = vmax.f32 %v4646, 0.0
      %v4679 = vmax.f32 %v4647, 0.0
      %v4680 = vmax.f32 %v4648, 0.0
      %v4681 = vmax.f32 %v4649, 0.0
      %v4682 = vmax.f32 %v4650, 0.0
      %v4683 = vmax.f32 %v4651, 0.0
      %v4684 = vmax.f32 %v4652, 0.0
      %v4685 = vmax.f32 %v4653, 0.0
      %v4686 = vmax.f32 %v4654, 0.0
      %v4687 = vmax.f32 %v4655, 0.0
      %v4688 = vmax.f32 %v4656, 0.0
      %v4689 = vmax.f32 %v4657, 0.0
      %v4690 = vmax.f32 %v4658, 0.0
      %v4691 = vmax.f32 %v4659, 0.0
      %v4692 = vmax.f32 %v4660, 0.0
      %v4693 = vmax.f32 %v4661, 0.0
      %v4694 = vmax.f32 %v4662, 0.0
      %4695 = vxpose.xlu0.b32.start [1/16] %v4663, 128
      %4696 = vxpose.xlu0.b32.cont [2/16] %v4664, 128
      %4697 = vxpose.xlu0.b32.cont [3/16] %v4665, 128
      %4698 = vxpose.xlu0.b32.cont [4/16] %v4666, 128
      %4699 = vxpose.xlu0.b32.cont [5/16] %v4667, 128
      %4700 = vxpose.xlu0.b32.cont [6/16] %v4668, 128
      %4701 = vxpose.xlu0.b32.cont [7/16] %v4669, 128
      %4702 = vxpose.xlu0.b32.cont [8/16] %v4670, 128
      %4703 = vxpose.xlu0.b32.cont [9/16] %v4671, 128
      %4704 = vxpose.xlu0.b32.cont [10/16] %v4672, 128
      %4705 = vxpose.xlu0.b32.cont [11/16] %v4673, 128
      %4706 = vxpose.xlu0.b32.cont [12/16] %v4674, 128
      %4707 = vxpose.xlu0.b32.cont [13/16] %v4675, 128
      %4708 = vxpose.xlu0.b32.cont [14/16] %v4676, 128
      %4709 = vxpose.xlu0.b32.cont [15/16] %v4677, 128
      %4710 = vxpose.xlu0.b32.end [16/16] %v4678, 128
      %v4711 = vpop.trf.xlu0
      %v4712 = vpop.trf.xlu0
      %v4713 = vpop.trf.xlu0
      %v4714 = vpop.trf.xlu0
      %v4715 = vpop.trf.xlu0
      %v4716 = vpop.trf.xlu0
      %v4717 = vpop.trf.xlu0
      %v4718 = vpop.trf.xlu0
      %v4719 = vpop.trf.xlu0
      %v4720 = vpop.trf.xlu0
      %v4721 = vpop.trf.xlu0
      %v4722 = vpop.trf.xlu0
      %v4723 = vpop.trf.xlu0
      %v4724 = vpop.trf.xlu0
      %v4725 = vpop.trf.xlu0
      %v4726 = vpop.trf.xlu0
      %4727 = vxpose.xlu0.b32.start [1/16] %v4679, 128
      %4728 = vxpose.xlu0.b32.cont [2/16] %v4680, 128
      %4729 = vxpose.xlu0.b32.cont [3/16] %v4681, 128
      %4730 = vxpose.xlu0.b32.cont [4/16] %v4682, 128
      %4731 = vxpose.xlu0.b32.cont [5/16] %v4683, 128
      %4732 = vxpose.xlu0.b32.cont [6/16] %v4684, 128
      %4733 = vxpose.xlu0.b32.cont [7/16] %v4685, 128
      %4734 = vxpose.xlu0.b32.cont [8/16] %v4686, 128
      %4735 = vxpose.xlu0.b32.cont [9/16] %v4687, 128
      %4736 = vxpose.xlu0.b32.cont [10/16] %v4688, 128
      %4737 = vxpose.xlu0.b32.cont [11/16] %v4689, 128
      %4738 = vxpose.xlu0.b32.cont [12/16] %v4690, 128
      %4739 = vxpose.xlu0.b32.cont [13/16] %v4691, 128
      %4740 = vxpose.xlu0.b32.cont [14/16] %v4692, 128
      %4741 = vxpose.xlu0.b32.cont [15/16] %v4693, 128
      %4742 = vxpose.xlu0.b32.end [16/16] %v4694, 128
      %v4743 = vpop.trf.xlu0
      %v4744 = vpop.trf.xlu0
      %v4745 = vpop.trf.xlu0
      %v4746 = vpop.trf.xlu0
      %v4747 = vpop.trf.xlu0
      %v4748 = vpop.trf.xlu0
      %v4749 = vpop.trf.xlu0
      %v4750 = vpop.trf.xlu0
      %v4751 = vpop.trf.xlu0
      %v4752 = vpop.trf.xlu0
      %v4753 = vpop.trf.xlu0
      %v4754 = vpop.trf.xlu0
      %v4755 = vpop.trf.xlu0
      %v4756 = vpop.trf.xlu0
      %v4757 = vpop.trf.xlu0
      %v4758 = vpop.trf.xlu0
      %4759 = vst [vmem:[%s278] sm:$0xff] %v4711
      %4760 = vst [vmem:[%s278 + $0x8] sm:$0xff] %v4743
      %4761 = vst [vmem:[%s278 + $0x10] sm:$0xff] %v4712
      %4762 = vst [vmem:[%s278 + $0x18] sm:$0xff] %v4744
      %4763 = vst [vmem:[%s278 + $0x20] sm:$0xff] %v4713
      %4764 = vst [vmem:[%s278 + $0x28] sm:$0xff] %v4745
      %4765 = vst [vmem:[%s278 + $0x30] sm:$0xff] %v4714
      %4766 = vst [vmem:[%s278 + $0x38] sm:$0xff] %v4746
      %p4767 = scmp.lt.s32.totalorder %s18, 1
      %s4768 = scalar_select %p4767, %s18, 1
      %s4769 = smul.addr %s4768, 8
      %s4770 = smul.addr %s4769, 8
      %s4771 = scalar_lea.vmem %s7, %s4770
      // Predicated region
      $region49: #{msfr_forward.1} parent=47 // pred_check
        %p4772 = pneg %p188
      $region50: #{msfr_forward.1} parent=47 // pred_check_branch
        %4774 = sbr.rel (%p4772) target = $region52
      $region51: #{msfr_forward.1} parent=47 // pred_region
        _
      $region52: #{msfr_forward.1} parent=47 // pred_fallthru
        _
    $region48: #{msfr_forward.1} parent=5 // pred_fallthru
      _
    %p4775 = scmp.le.s32.totalorder 2, %s13
    // Predicated region
    $region53: #{msfr_forward.1} parent=5 // pred_check
      %p4776 = pneg %p4775
    $region54: #{msfr_forward.1} parent=5 // pred_check_branch
      %4778 = sbr.rel (%p4776) target = $region56
    $region55: #{msfr_forward.1} parent=5 // pred_region
      %s4779 = ssub.s32 %s13, 2
      // Predicated region
      $region57: #{msfr_forward.1} parent=55 // pred_check
        %p4780 = pneg %p194
      $region58: #{msfr_forward.1} parent=55 // pred_check_branch
        %4782 = sbr.rel (%p4780) target = $region60
      $region59: #{msfr_forward.1} parent=55 // pred_region
        %p4783 = scmp.lt.s32.totalorder %s19, 1
        %s4784 = scalar_select %p4783, %s19, 1
        %s4785 = smul.addr %s4784, 8
        %s4786 = smul.addr %s4785, 8
        %s4787 = scalar_lea.vmem %s7, %s4786
      $region60: #{msfr_forward.1} parent=55 // pred_fallthru
        _
    $region56: #{msfr_forward.1} parent=5 // pred_fallthru
      _
  $region6: #{msfr_forward.1} parent=0 // loop_footer
    %s17 = sadd.s32 1, %s13
  $region7: #{msfr_forward.1} parent=0 // loop_footer_branch
    %12 = sbr.rel target = $region3
  $region8: #{msfr_forward.1} parent=0 // loop_exit
    _

</llo_original>
